<compile_context>
chip_gen: v6e
topology: v6e:2x2x1
jax: 0.10.0
libtpu: 0.0.40
codegen_flags: <defaults>
</compile_context>

<pallas_src>
import jax
import jax.numpy as jnp
from jax import lax
from jax.experimental import pallas as pl
from jax.experimental.pallas import tpu as pltpu

# ---- module hyper-parameters (ThirdNet(M=8, p=5, N=4) on a 3x32x32 input) ----
M = 8            # conv output channels
p = 5            # conv kernel size  -> OH = 33 - p = 28
N = 4            # max-pool size     -> PH = 28 / 4 = 7
B = 2            # batch
C_IN = 3
H = W = 32

OH = 33 - p                  # 28 conv output spatial size
PH = OH // N                 # 7  pooled spatial size
RL = PH * PH                 # 49 pooled cells per image (lane dim inside the kernel)
KC = p * p * C_IN            # 75 conv patch length, ordered (c, dy, dx)
NN = N * N                   # 16 positions inside one pool window
F = RL * M                   # 392 fc1 in-features


# ---------------- fused Pallas kernel (single invocation, no grid) ----------------

def fused_kernel(pt_ref, w1t_ref, b1_ref, w2r_ref, b2_ref, o_ref):
    """Fused conv + bias + ReLU + max-pool + FC.

    pt_ref : [NN, B, KC, RL]  im2col patches, pooled cells in the lane dim
    w1t_ref: [M, KC]          conv weight, (c, dy, dx)-flattened
    b1_ref : [M, 1]           conv bias (broadcast along lanes)
    w2r_ref: [M, RL, 10]      fc weight re-laid out to the pooled (m, r) layout
    b2_ref : [1, 10]          fc bias
    o_ref  : [B, 10]          logits — the only tensor written back to HBM
    """
    w1t = w1t_ref[...]                      # [M, KC], hoisted out of all loops
    b1 = b1_ref[...]                        # [M, 1]

    outs = []
    for b in range(B):                      # B = 2, fully unrolled
        # --- conv matmul + bias + ReLU, max-reduced over the NN pool-window positions ---
        pooled = None                       # [M, RL] running max, kept in vregs
        for k in range(NN):                 # NN = 16, fully unrolled (no grid-step overhead)
            conv = jnp.dot(w1t, pt_ref[k, b],
                           preferred_element_type=jnp.float32)      # [M, RL]
            conv = jnp.maximum(conv + b1, 0.0)                       # bias + ReLU
            pooled = conv if pooled is None else jnp.maximum(pooled, conv)

        # --- FC: out[b, j] = sum_{m, r} pooled[m, r] * W2[j, m*RL + r]  (bias added below) ---
        acc = jnp.dot(pooled[0:1, :], w2r_ref[0],
                      preferred_element_type=jnp.float32)            # [1, 10]
        for m in range(1, M):
            acc = acc + jnp.dot(pooled[m:m + 1, :], w2r_ref[m],
                                preferred_element_type=jnp.float32)
        outs.append(acc)

    o_ref[...] = jnp.concatenate(outs, axis=0) + b2_ref[...]         # [B, 10]


# ---------------- wrapper: patch extraction + offline weight re-layouts ----------------

@jax.jit
def third_net_forward(x_nchw, W1, b1, W2, b2):
    """x_nchw: [B, 3, 32, 32] float32.  Returns [B, 10] float32."""
    # im2col in ONE XLA op: pt[b, kc, oy, ox] = x[b, c, oy+dy, ox+dx] with kc = c*p*p + dy*p + dx
    pt = lax.conv_general_dilated_patches(
        x_nchw, filter_shape=(p, p), window_strides=(1, 1), padding="VALID",
        dimension_numbers=("NCHW", "OIHW", "NCHW"))                   # [B, KC, OH, OH]

    # regroup by pool-window position k=(ny,nx); pooled cells r=(ph,pw) go to the lane dim
    patches = (pt.reshape(B, KC, PH, N, PH, N)
                 .transpose(3, 5, 0, 1, 2, 4)                         # [N, N, B, KC, PH, PH]
                 .reshape(NN, B, KC, RL))                             # [NN, B, KC, RL]

    # conv weight [M, C, p, p] -> [M, KC]   (same (c, dy, dx) order as the patches)
    w1t = W1.reshape(M, KC)
    b1_2d = b1.reshape(M, 1)

    # fc weight [10, F], F ordered (m, ph, pw) like PyTorch's flatten -> [M, RL, 10]
    # (one-time 15 KB re-layout; kills the per-forward activation transpose)
    w2r = W2.reshape(10, M, RL).transpose(1, 2, 0)
    b2_2d = b2.reshape(1, 10)

    vmem = pl.BlockSpec(memory_space=pltpu.MemorySpace.VMEM)          # everything VMEM-resident
    return pl.pallas_call(
        fused_kernel,
        out_shape=jax.ShapeDtypeStruct((B, 10), jnp.float32),
        in_specs=[vmem, vmem, vmem, vmem, vmem],
        out_specs=vmem,
    )(patches, w1t, b1_2d, w2r, b2_2d)


def third_net_reference(x_nchw, W1, b1, W2, b2):
    """Pure-JAX reference matching the PyTorch forward."""
    conv = lax.conv_general_dilated(
        x_nchw, W1, window_strides=(1, 1), padding="VALID",
        dimension_numbers=("NCHW", "OIHW", "NCHW"),
    ) + b1[None, :, None, None]
    act = jnp.maximum(conv, 0.0)
    pool = lax.reduce_window(
        act, -jnp.inf, lax.max, (1, 1, N, N), (1, 1, N, N), "VALID"
    )
    feat = pool.reshape(B, F)                                         # PyTorch flatten order
    return feat @ W2.T + b2


if __name__ == "__main__":
    key = jax.random.PRNGKey(0)
    k1, k2, k3, k4, k5 = jax.random.split(key, 5)

    # deterministic synthetic parameters (PyTorch layouts)
    W1 = jax.random.normal(k1, (M, C_IN, p, p), jnp.float32) * 0.1    # conv1.weight
    b1 = jax.random.normal(k2, (M,), jnp.float32) * 0.1               # conv1.bias
    W2 = jax.random.normal(k3, (10, F), jnp.float32) * 0.05           # fc1.weight
    b2 = jax.random.normal(k4, (10,), jnp.float32) * 0.05             # fc1.bias

    x = jax.random.normal(k5, (B, C_IN, H, W), jnp.float32)           # NCHW, like PyTorch

    out = jax.block_until_ready(third_net_forward(x, W1, b1, W2, b2))
    ref = third_net_reference(x, W1, b1, W2, b2)

    assert out.shape == (B, 10)
    assert jnp.allclose(out, ref, rtol=1e-4, atol=1e-4), "mismatch vs reference"

    print("KERNEL_OK")
</pallas_src>

<mosaic_0001>
module attributes {stable_mosaic.version = 11 : i64} {
  func.func @fused_kernel(%arg0: memref<16x2x75x49xf32, #tpu.memory_space<vmem>>, %arg1: memref<8x75xf32, #tpu.memory_space<vmem>>, %arg2: memref<8x1xf32, #tpu.memory_space<vmem>>, %arg3: memref<8x49x10xf32, #tpu.memory_space<vmem>>, %arg4: memref<1x10xf32, #tpu.memory_space<vmem>>, %arg5: memref<2x10xf32, #tpu.memory_space<vmem>>) attributes {dimension_semantics = [], scalar_prefetch = 0 : i64, scratch_operands = 0 : i64, tpu.core_type = #tpu.core_type<tc>} {
    %c0 = arith.constant 0 : index
    %c0_0 = arith.constant 0 : index
    %0 = vector.load %arg1[%c0, %c0_0] : memref<8x75xf32, #tpu.memory_space<vmem>>, vector<8x75xf32>
    %c0_1 = arith.constant 0 : index
    %c0_2 = arith.constant 0 : index
    %1 = vector.load %arg2[%c0_1, %c0_2] : memref<8x1xf32, #tpu.memory_space<vmem>>, vector<8x1xf32>
    %c0_3 = arith.constant 0 : index
    %c0_4 = arith.constant 0 : index
    %c0_5 = arith.constant 0 : index
    %c0_6 = arith.constant 0 : index
    %2 = vector.load %arg0[%c0_3, %c0_4, %c0_5, %c0_6] : memref<16x2x75x49xf32, #tpu.memory_space<vmem>>, vector<1x1x75x49xf32>
    %3 = vector.shape_cast %2 : vector<1x1x75x49xf32> to vector<75x49xf32>
    %cst = arith.constant dense<0.000000e+00> : vector<8x49xf32>
    %4 = tpu.matmul %0, %3, %cst {dimension_numbers = #tpu.dot_dimension_numbers<[1], [0], [0], [1], [0, 0, 1, 1], [], []>} : vector<8x75xf32>, vector<75x49xf32>, vector<8x49xf32> -> vector<8x49xf32>
    %5 = vector.broadcast %1 : vector<8x1xf32> to vector<8x49xf32>
    %6 = arith.addf %4, %5 : vector<8x49xf32>
    %cst_7 = arith.constant 0.000000e+00 : f32
    %7 = vector.broadcast %cst_7 : f32 to vector<8x49xf32>
    %8 = arith.maximumf %6, %7 : vector<8x49xf32>
    %c1 = arith.constant 1 : index
    %c0_8 = arith.constant 0 : index
    %c0_9 = arith.constant 0 : index
    %c0_10 = arith.constant 0 : index
    %9 = vector.load %arg0[%c1, %c0_8, %c0_9, %c0_10] : memref<16x2x75x49xf32, #tpu.memory_space<vmem>>, vector<1x1x75x49xf32>
    %10 = vector.shape_cast %9 : vector<1x1x75x49xf32> to vector<75x49xf32>
    %cst_11 = arith.constant dense<0.000000e+00> : vector<8x49xf32>
    %11 = tpu.matmul %0, %10, %cst_11 {dimension_numbers = #tpu.dot_dimension_numbers<[1], [0], [0], [1], [0, 0, 1, 1], [], []>} : vector<8x75xf32>, vector<75x49xf32>, vector<8x49xf32> -> vector<8x49xf32>
    %12 = vector.broadcast %1 : vector<8x1xf32> to vector<8x49xf32>
    %13 = arith.addf %11, %12 : vector<8x49xf32>
    %cst_12 = arith.constant 0.000000e+00 : f32
    %14 = vector.broadcast %cst_12 : f32 to vector<8x49xf32>
    %15 = arith.maximumf %13, %14 : vector<8x49xf32>
    %16 = arith.maximumf %8, %15 : vector<8x49xf32>
    %c2 = arith.constant 2 : index
    %c0_13 = arith.constant 0 : index
    %c0_14 = arith.constant 0 : index
    %c0_15 = arith.constant 0 : index
    %17 = vector.load %arg0[%c2, %c0_13, %c0_14, %c0_15] : memref<16x2x75x49xf32, #tpu.memory_space<vmem>>, vector<1x1x75x49xf32>
    %18 = vector.shape_cast %17 : vector<1x1x75x49xf32> to vector<75x49xf32>
    %cst_16 = arith.constant dense<0.000000e+00> : vector<8x49xf32>
    %19 = tpu.matmul %0, %18, %cst_16 {dimension_numbers = #tpu.dot_dimension_numbers<[1], [0], [0], [1], [0, 0, 1, 1], [], []>} : vector<8x75xf32>, vector<75x49xf32>, vector<8x49xf32> -> vector<8x49xf32>
    %20 = vector.broadcast %1 : vector<8x1xf32> to vector<8x49xf32>
    %21 = arith.addf %19, %20 : vector<8x49xf32>
    %cst_17 = arith.constant 0.000000e+00 : f32
    %22 = vector.broadcast %cst_17 : f32 to vector<8x49xf32>
    %23 = arith.maximumf %21, %22 : vector<8x49xf32>
    %24 = arith.maximumf %16, %23 : vector<8x49xf32>
    %c3 = arith.constant 3 : index
    %c0_18 = arith.constant 0 : index
    %c0_19 = arith.constant 0 : index
    %c0_20 = arith.constant 0 : index
    %25 = vector.load %arg0[%c3, %c0_18, %c0_19, %c0_20] : memref<16x2x75x49xf32, #tpu.memory_space<vmem>>, vector<1x1x75x49xf32>
    %26 = vector.shape_cast %25 : vector<1x1x75x49xf32> to vector<75x49xf32>
    %cst_21 = arith.constant dense<0.000000e+00> : vector<8x49xf32>
    %27 = tpu.matmul %0, %26, %cst_21 {dimension_numbers = #tpu.dot_dimension_numbers<[1], [0], [0], [1], [0, 0, 1, 1], [], []>} : vector<8x75xf32>, vector<75x49xf32>, vector<8x49xf32> -> vector<8x49xf32>
    %28 = vector.broadcast %1 : vector<8x1xf32> to vector<8x49xf32>
    %29 = arith.addf %27, %28 : vector<8x49xf32>
    %cst_22 = arith.constant 0.000000e+00 : f32
    %30 = vector.broadcast %cst_22 : f32 to vector<8x49xf32>
    %31 = arith.maximumf %29, %30 : vector<8x49xf32>
    %32 = arith.maximumf %24, %31 : vector<8x49xf32>
    %c4 = arith.constant 4 : index
    %c0_23 = arith.constant 0 : index
    %c0_24 = arith.constant 0 : index
    %c0_25 = arith.constant 0 : index
    %33 = vector.load %arg0[%c4, %c0_23, %c0_24, %c0_25] : memref<16x2x75x49xf32, #tpu.memory_space<vmem>>, vector<1x1x75x49xf32>
    %34 = vector.shape_cast %33 : vector<1x1x75x49xf32> to vector<75x49xf32>
    %cst_26 = arith.constant dense<0.000000e+00> : vector<8x49xf32>
    %35 = tpu.matmul %0, %34, %cst_26 {dimension_numbers = #tpu.dot_dimension_numbers<[1], [0], [0], [1], [0, 0, 1, 1], [], []>} : vector<8x75xf32>, vector<75x49xf32>, vector<8x49xf32> -> vector<8x49xf32>
    %36 = vector.broadcast %1 : vector<8x1xf32> to vector<8x49xf32>
    %37 = arith.addf %35, %36 : vector<8x49xf32>
    %cst_27 = arith.constant 0.000000e+00 : f32
    %38 = vector.broadcast %cst_27 : f32 to vector<8x49xf32>
    %39 = arith.maximumf %37, %38 : vector<8x49xf32>
    %40 = arith.maximumf %32, %39 : vector<8x49xf32>
    %c5 = arith.constant 5 : index
    %c0_28 = arith.constant 0 : index
    %c0_29 = arith.constant 0 : index
    %c0_30 = arith.constant 0 : index
    %41 = vector.load %arg0[%c5, %c0_28, %c0_29, %c0_30] : memref<16x2x75x49xf32, #tpu.memory_space<vmem>>, vector<1x1x75x49xf32>
    %42 = vector.shape_cast %41 : vector<1x1x75x49xf32> to vector<75x49xf32>
    %cst_31 = arith.constant dense<0.000000e+00> : vector<8x49xf32>
    %43 = tpu.matmul %0, %42, %cst_31 {dimension_numbers = #tpu.dot_dimension_numbers<[1], [0], [0], [1], [0, 0, 1, 1], [], []>} : vector<8x75xf32>, vector<75x49xf32>, vector<8x49xf32> -> vector<8x49xf32>
    %44 = vector.broadcast %1 : vector<8x1xf32> to vector<8x49xf32>
    %45 = arith.addf %43, %44 : vector<8x49xf32>
    %cst_32 = arith.constant 0.000000e+00 : f32
    %46 = vector.broadcast %cst_32 : f32 to vector<8x49xf32>
    %47 = arith.maximumf %45, %46 : vector<8x49xf32>
    %48 = arith.maximumf %40, %47 : vector<8x49xf32>
    %c6 = arith.constant 6 : index
    %c0_33 = arith.constant 0 : index
    %c0_34 = arith.constant 0 : index
    %c0_35 = arith.constant 0 : index
    %49 = vector.load %arg0[%c6, %c0_33, %c0_34, %c0_35] : memref<16x2x75x49xf32, #tpu.memory_space<vmem>>, vector<1x1x75x49xf32>
    %50 = vector.shape_cast %49 : vector<1x1x75x49xf32> to vector<75x49xf32>
    %cst_36 = arith.constant dense<0.000000e+00> : vector<8x49xf32>
    %51 = tpu.matmul %0, %50, %cst_36 {dimension_numbers = #tpu.dot_dimension_numbers<[1], [0], [0], [1], [0, 0, 1, 1], [], []>} : vector<8x75xf32>, vector<75x49xf32>, vector<8x49xf32> -> vector<8x49xf32>
    %52 = vector.broadcast %1 : vector<8x1xf32> to vector<8x49xf32>
    %53 = arith.addf %51, %52 : vector<8x49xf32>
    %cst_37 = arith.constant 0.000000e+00 : f32
    %54 = vector.broadcast %cst_37 : f32 to vector<8x49xf32>
    %55 = arith.maximumf %53, %54 : vector<8x49xf32>
    %56 = arith.maximumf %48, %55 : vector<8x49xf32>
    %c7 = arith.constant 7 : index
    %c0_38 = arith.constant 0 : index
    %c0_39 = arith.constant 0 : index
    %c0_40 = arith.constant 0 : index
    %57 = vector.load %arg0[%c7, %c0_38, %c0_39, %c0_40] : memref<16x2x75x49xf32, #tpu.memory_space<vmem>>, vector<1x1x75x49xf32>
    %58 = vector.shape_cast %57 : vector<1x1x75x49xf32> to vector<75x49xf32>
    %cst_41 = arith.constant dense<0.000000e+00> : vector<8x49xf32>
    %59 = tpu.matmul %0, %58, %cst_41 {dimension_numbers = #tpu.dot_dimension_numbers<[1], [0], [0], [1], [0, 0, 1, 1], [], []>} : vector<8x75xf32>, vector<75x49xf32>, vector<8x49xf32> -> vector<8x49xf32>
    %60 = vector.broadcast %1 : vector<8x1xf32> to vector<8x49xf32>
    %61 = arith.addf %59, %60 : vector<8x49xf32>
    %cst_42 = arith.constant 0.000000e+00 : f32
    %62 = vector.broadcast %cst_42 : f32 to vector<8x49xf32>
    %63 = arith.maximumf %61, %62 : vector<8x49xf32>
    %64 = arith.maximumf %56, %63 : vector<8x49xf32>
    %c8 = arith.constant 8 : index
    %c0_43 = arith.constant 0 : index
    %c0_44 = arith.constant 0 : index
    %c0_45 = arith.constant 0 : index
    %65 = vector.load %arg0[%c8, %c0_43, %c0_44, %c0_45] : memref<16x2x75x49xf32, #tpu.memory_space<vmem>>, vector<1x1x75x49xf32>
    %66 = vector.shape_cast %65 : vector<1x1x75x49xf32> to vector<75x49xf32>
    %cst_46 = arith.constant dense<0.000000e+00> : vector<8x49xf32>
    %67 = tpu.matmul %0, %66, %cst_46 {dimension_numbers = #tpu.dot_dimension_numbers<[1], [0], [0], [1], [0, 0, 1, 1], [], []>} : vector<8x75xf32>, vector<75x49xf32>, vector<8x49xf32> -> vector<8x49xf32>
    %68 = vector.broadcast %1 : vector<8x1xf32> to vector<8x49xf32>
    %69 = arith.addf %67, %68 : vector<8x49xf32>
    %cst_47 = arith.constant 0.000000e+00 : f32
    %70 = vector.broadcast %cst_47 : f32 to vector<8x49xf32>
    %71 = arith.maximumf %69, %70 : vector<8x49xf32>
    %72 = arith.maximumf %64, %71 : vector<8x49xf32>
    %c9 = arith.constant 9 : index
    %c0_48 = arith.constant 0 : index
    %c0_49 = arith.constant 0 : index
    %c0_50 = arith.constant 0 : index
    %73 = vector.load %arg0[%c9, %c0_48, %c0_49, %c0_50] : memref<16x2x75x49xf32, #tpu.memory_space<vmem>>, vector<1x1x75x49xf32>
    %74 = vector.shape_cast %73 : vector<1x1x75x49xf32> to vector<75x49xf32>
    %cst_51 = arith.constant dense<0.000000e+00> : vector<8x49xf32>
    %75 = tpu.matmul %0, %74, %cst_51 {dimension_numbers = #tpu.dot_dimension_numbers<[1], [0], [0], [1], [0, 0, 1, 1], [], []>} : vector<8x75xf32>, vector<75x49xf32>, vector<8x49xf32> -> vector<8x49xf32>
    %76 = vector.broadcast %1 : vector<8x1xf32> to vector<8x49xf32>
    %77 = arith.addf %75, %76 : vector<8x49xf32>
    %cst_52 = arith.constant 0.000000e+00 : f32
    %78 = vector.broadcast %cst_52 : f32 to vector<8x49xf32>
    %79 = arith.maximumf %77, %78 : vector<8x49xf32>
    %80 = arith.maximumf %72, %79 : vector<8x49xf32>
    %c10 = arith.constant 10 : index
    %c0_53 = arith.constant 0 : index
    %c0_54 = arith.constant 0 : index
    %c0_55 = arith.constant 0 : index
    %81 = vector.load %arg0[%c10, %c0_53, %c0_54, %c0_55] : memref<16x2x75x49xf32, #tpu.memory_space<vmem>>, vector<1x1x75x49xf32>
    %82 = vector.shape_cast %81 : vector<1x1x75x49xf32> to vector<75x49xf32>
    %cst_56 = arith.constant dense<0.000000e+00> : vector<8x49xf32>
    %83 = tpu.matmul %0, %82, %cst_56 {dimension_numbers = #tpu.dot_dimension_numbers<[1], [0], [0], [1], [0, 0, 1, 1], [], []>} : vector<8x75xf32>, vector<75x49xf32>, vector<8x49xf32> -> vector<8x49xf32>
    %84 = vector.broadcast %1 : vector<8x1xf32> to vector<8x49xf32>
    %85 = arith.addf %83, %84 : vector<8x49xf32>
    %cst_57 = arith.constant 0.000000e+00 : f32
    %86 = vector.broadcast %cst_57 : f32 to vector<8x49xf32>
    %87 = arith.maximumf %85, %86 : vector<8x49xf32>
    %88 = arith.maximumf %80, %87 : vector<8x49xf32>
    %c11 = arith.constant 11 : index
    %c0_58 = arith.constant 0 : index
    %c0_59 = arith.constant 0 : index
    %c0_60 = arith.constant 0 : index
    %89 = vector.load %arg0[%c11, %c0_58, %c0_59, %c0_60] : memref<16x2x75x49xf32, #tpu.memory_space<vmem>>, vector<1x1x75x49xf32>
    %90 = vector.shape_cast %89 : vector<1x1x75x49xf32> to vector<75x49xf32>
    %cst_61 = arith.constant dense<0.000000e+00> : vector<8x49xf32>
    %91 = tpu.matmul %0, %90, %cst_61 {dimension_numbers = #tpu.dot_dimension_numbers<[1], [0], [0], [1], [0, 0, 1, 1], [], []>} : vector<8x75xf32>, vector<75x49xf32>, vector<8x49xf32> -> vector<8x49xf32>
    %92 = vector.broadcast %1 : vector<8x1xf32> to vector<8x49xf32>
    %93 = arith.addf %91, %92 : vector<8x49xf32>
    %cst_62 = arith.constant 0.000000e+00 : f32
    %94 = vector.broadcast %cst_62 : f32 to vector<8x49xf32>
    %95 = arith.maximumf %93, %94 : vector<8x49xf32>
    %96 = arith.maximumf %88, %95 : vector<8x49xf32>
    %c12 = arith.constant 12 : index
    %c0_63 = arith.constant 0 : index
    %c0_64 = arith.constant 0 : index
    %c0_65 = arith.constant 0 : index
    %97 = vector.load %arg0[%c12, %c0_63, %c0_64, %c0_65] : memref<16x2x75x49xf32, #tpu.memory_space<vmem>>, vector<1x1x75x49xf32>
    %98 = vector.shape_cast %97 : vector<1x1x75x49xf32> to vector<75x49xf32>
    %cst_66 = arith.constant dense<0.000000e+00> : vector<8x49xf32>
    %99 = tpu.matmul %0, %98, %cst_66 {dimension_numbers = #tpu.dot_dimension_numbers<[1], [0], [0], [1], [0, 0, 1, 1], [], []>} : vector<8x75xf32>, vector<75x49xf32>, vector<8x49xf32> -> vector<8x49xf32>
    %100 = vector.broadcast %1 : vector<8x1xf32> to vector<8x49xf32>
    %101 = arith.addf %99, %100 : vector<8x49xf32>
    %cst_67 = arith.constant 0.000000e+00 : f32
    %102 = vector.broadcast %cst_67 : f32 to vector<8x49xf32>
    %103 = arith.maximumf %101, %102 : vector<8x49xf32>
    %104 = arith.maximumf %96, %103 : vector<8x49xf32>
    %c13 = arith.constant 13 : index
    %c0_68 = arith.constant 0 : index
    %c0_69 = arith.constant 0 : index
    %c0_70 = arith.constant 0 : index
    %105 = vector.load %arg0[%c13, %c0_68, %c0_69, %c0_70] : memref<16x2x75x49xf32, #tpu.memory_space<vmem>>, vector<1x1x75x49xf32>
    %106 = vector.shape_cast %105 : vector<1x1x75x49xf32> to vector<75x49xf32>
    %cst_71 = arith.constant dense<0.000000e+00> : vector<8x49xf32>
    %107 = tpu.matmul %0, %106, %cst_71 {dimension_numbers = #tpu.dot_dimension_numbers<[1], [0], [0], [1], [0, 0, 1, 1], [], []>} : vector<8x75xf32>, vector<75x49xf32>, vector<8x49xf32> -> vector<8x49xf32>
    %108 = vector.broadcast %1 : vector<8x1xf32> to vector<8x49xf32>
    %109 = arith.addf %107, %108 : vector<8x49xf32>
    %cst_72 = arith.constant 0.000000e+00 : f32
    %110 = vector.broadcast %cst_72 : f32 to vector<8x49xf32>
    %111 = arith.maximumf %109, %110 : vector<8x49xf32>
    %112 = arith.maximumf %104, %111 : vector<8x49xf32>
    %c14 = arith.constant 14 : index
    %c0_73 = arith.constant 0 : index
    %c0_74 = arith.constant 0 : index
    %c0_75 = arith.constant 0 : index
    %113 = vector.load %arg0[%c14, %c0_73, %c0_74, %c0_75] : memref<16x2x75x49xf32, #tpu.memory_space<vmem>>, vector<1x1x75x49xf32>
    %114 = vector.shape_cast %113 : vector<1x1x75x49xf32> to vector<75x49xf32>
    %cst_76 = arith.constant dense<0.000000e+00> : vector<8x49xf32>
    %115 = tpu.matmul %0, %114, %cst_76 {dimension_numbers = #tpu.dot_dimension_numbers<[1], [0], [0], [1], [0, 0, 1, 1], [], []>} : vector<8x75xf32>, vector<75x49xf32>, vector<8x49xf32> -> vector<8x49xf32>
    %116 = vector.broadcast %1 : vector<8x1xf32> to vector<8x49xf32>
    %117 = arith.addf %115, %116 : vector<8x49xf32>
    %cst_77 = arith.constant 0.000000e+00 : f32
    %118 = vector.broadcast %cst_77 : f32 to vector<8x49xf32>
    %119 = arith.maximumf %117, %118 : vector<8x49xf32>
    %120 = arith.maximumf %112, %119 : vector<8x49xf32>
    %c15 = arith.constant 15 : index
    %c0_78 = arith.constant 0 : index
    %c0_79 = arith.constant 0 : index
    %c0_80 = arith.constant 0 : index
    %121 = vector.load %arg0[%c15, %c0_78, %c0_79, %c0_80] : memref<16x2x75x49xf32, #tpu.memory_space<vmem>>, vector<1x1x75x49xf32>
    %122 = vector.shape_cast %121 : vector<1x1x75x49xf32> to vector<75x49xf32>
    %cst_81 = arith.constant dense<0.000000e+00> : vector<8x49xf32>
    %123 = tpu.matmul %0, %122, %cst_81 {dimension_numbers = #tpu.dot_dimension_numbers<[1], [0], [0], [1], [0, 0, 1, 1], [], []>} : vector<8x75xf32>, vector<75x49xf32>, vector<8x49xf32> -> vector<8x49xf32>
    %124 = vector.broadcast %1 : vector<8x1xf32> to vector<8x49xf32>
    %125 = arith.addf %123, %124 : vector<8x49xf32>
    %cst_82 = arith.constant 0.000000e+00 : f32
    %126 = vector.broadcast %cst_82 : f32 to vector<8x49xf32>
    %127 = arith.maximumf %125, %126 : vector<8x49xf32>
    %128 = arith.maximumf %120, %127 : vector<8x49xf32>
    %129 = vector.extract_strided_slice %128 {offsets = [0, 0], sizes = [1, 49], strides = [1, 1]} : vector<8x49xf32> to vector<1x49xf32>
    %c0_83 = arith.constant 0 : index
    %c0_84 = arith.constant 0 : index
    %c0_85 = arith.constant 0 : index
    %130 = vector.load %arg3[%c0_83, %c0_84, %c0_85] : memref<8x49x10xf32, #tpu.memory_space<vmem>>, vector<1x49x10xf32>
    %131 = vector.shape_cast %130 : vector<1x49x10xf32> to vector<49x10xf32>
    %cst_86 = arith.constant dense<0.000000e+00> : vector<1x10xf32>
    %132 = tpu.matmul %129, %131, %cst_86 {dimension_numbers = #tpu.dot_dimension_numbers<[1], [0], [0], [1], [0, 0, 1, 1], [], []>} : vector<1x49xf32>, vector<49x10xf32>, vector<1x10xf32> -> vector<1x10xf32>
    %133 = vector.extract_strided_slice %128 {offsets = [1, 0], sizes = [1, 49], strides = [1, 1]} : vector<8x49xf32> to vector<1x49xf32>
    %c1_87 = arith.constant 1 : index
    %c0_88 = arith.constant 0 : index
    %c0_89 = arith.constant 0 : index
    %134 = vector.load %arg3[%c1_87, %c0_88, %c0_89] : memref<8x49x10xf32, #tpu.memory_space<vmem>>, vector<1x49x10xf32>
    %135 = vector.shape_cast %134 : vector<1x49x10xf32> to vector<49x10xf32>
    %cst_90 = arith.constant dense<0.000000e+00> : vector<1x10xf32>
    %136 = tpu.matmul %133, %135, %cst_90 {dimension_numbers = #tpu.dot_dimension_numbers<[1], [0], [0], [1], [0, 0, 1, 1], [], []>} : vector<1x49xf32>, vector<49x10xf32>, vector<1x10xf32> -> vector<1x10xf32>
    %137 = arith.addf %132, %136 : vector<1x10xf32>
    %138 = vector.extract_strided_slice %128 {offsets = [2, 0], sizes = [1, 49], strides = [1, 1]} : vector<8x49xf32> to vector<1x49xf32>
    %c2_91 = arith.constant 2 : index
    %c0_92 = arith.constant 0 : index
    %c0_93 = arith.constant 0 : index
    %139 = vector.load %arg3[%c2_91, %c0_92, %c0_93] : memref<8x49x10xf32, #tpu.memory_space<vmem>>, vector<1x49x10xf32>
    %140 = vector.shape_cast %139 : vector<1x49x10xf32> to vector<49x10xf32>
    %cst_94 = arith.constant dense<0.000000e+00> : vector<1x10xf32>
    %141 = tpu.matmul %138, %140, %cst_94 {dimension_numbers = #tpu.dot_dimension_numbers<[1], [0], [0], [1], [0, 0, 1, 1], [], []>} : vector<1x49xf32>, vector<49x10xf32>, vector<1x10xf32> -> vector<1x10xf32>
    %142 = arith.addf %137, %141 : vector<1x10xf32>
    %143 = vector.extract_strided_slice %128 {offsets = [3, 0], sizes = [1, 49], strides = [1, 1]} : vector<8x49xf32> to vector<1x49xf32>
    %c3_95 = arith.constant 3 : index
    %c0_96 = arith.constant 0 : index
    %c0_97 = arith.constant 0 : index
    %144 = vector.load %arg3[%c3_95, %c0_96, %c0_97] : memref<8x49x10xf32, #tpu.memory_space<vmem>>, vector<1x49x10xf32>
    %145 = vector.shape_cast %144 : vector<1x49x10xf32> to vector<49x10xf32>
    %cst_98 = arith.constant dense<0.000000e+00> : vector<1x10xf32>
    %146 = tpu.matmul %143, %145, %cst_98 {dimension_numbers = #tpu.dot_dimension_numbers<[1], [0], [0], [1], [0, 0, 1, 1], [], []>} : vector<1x49xf32>, vector<49x10xf32>, vector<1x10xf32> -> vector<1x10xf32>
    %147 = arith.addf %142, %146 : vector<1x10xf32>
    %148 = vector.extract_strided_slice %128 {offsets = [4, 0], sizes = [1, 49], strides = [1, 1]} : vector<8x49xf32> to vector<1x49xf32>
    %c4_99 = arith.constant 4 : index
    %c0_100 = arith.constant 0 : index
    %c0_101 = arith.constant 0 : index
    %149 = vector.load %arg3[%c4_99, %c0_100, %c0_101] : memref<8x49x10xf32, #tpu.memory_space<vmem>>, vector<1x49x10xf32>
    %150 = vector.shape_cast %149 : vector<1x49x10xf32> to vector<49x10xf32>
    %cst_102 = arith.constant dense<0.000000e+00> : vector<1x10xf32>
    %151 = tpu.matmul %148, %150, %cst_102 {dimension_numbers = #tpu.dot_dimension_numbers<[1], [0], [0], [1], [0, 0, 1, 1], [], []>} : vector<1x49xf32>, vector<49x10xf32>, vector<1x10xf32> -> vector<1x10xf32>
    %152 = arith.addf %147, %151 : vector<1x10xf32>
    %153 = vector.extract_strided_slice %128 {offsets = [5, 0], sizes = [1, 49], strides = [1, 1]} : vector<8x49xf32> to vector<1x49xf32>
    %c5_103 = arith.constant 5 : index
    %c0_104 = arith.constant 0 : index
    %c0_105 = arith.constant 0 : index
    %154 = vector.load %arg3[%c5_103, %c0_104, %c0_105] : memref<8x49x10xf32, #tpu.memory_space<vmem>>, vector<1x49x10xf32>
    %155 = vector.shape_cast %154 : vector<1x49x10xf32> to vector<49x10xf32>
    %cst_106 = arith.constant dense<0.000000e+00> : vector<1x10xf32>
    %156 = tpu.matmul %153, %155, %cst_106 {dimension_numbers = #tpu.dot_dimension_numbers<[1], [0], [0], [1], [0, 0, 1, 1], [], []>} : vector<1x49xf32>, vector<49x10xf32>, vector<1x10xf32> -> vector<1x10xf32>
    %157 = arith.addf %152, %156 : vector<1x10xf32>
    %158 = vector.extract_strided_slice %128 {offsets = [6, 0], sizes = [1, 49], strides = [1, 1]} : vector<8x49xf32> to vector<1x49xf32>
    %c6_107 = arith.constant 6 : index
    %c0_108 = arith.constant 0 : index
    %c0_109 = arith.constant 0 : index
    %159 = vector.load %arg3[%c6_107, %c0_108, %c0_109] : memref<8x49x10xf32, #tpu.memory_space<vmem>>, vector<1x49x10xf32>
    %160 = vector.shape_cast %159 : vector<1x49x10xf32> to vector<49x10xf32>
    %cst_110 = arith.constant dense<0.000000e+00> : vector<1x10xf32>
    %161 = tpu.matmul %158, %160, %cst_110 {dimension_numbers = #tpu.dot_dimension_numbers<[1], [0], [0], [1], [0, 0, 1, 1], [], []>} : vector<1x49xf32>, vector<49x10xf32>, vector<1x10xf32> -> vector<1x10xf32>
    %162 = arith.addf %157, %161 : vector<1x10xf32>
    %163 = vector.extract_strided_slice %128 {offsets = [7, 0], sizes = [1, 49], strides = [1, 1]} : vector<8x49xf32> to vector<1x49xf32>
    %c7_111 = arith.constant 7 : index
    %c0_112 = arith.constant 0 : index
    %c0_113 = arith.constant 0 : index
    %164 = vector.load %arg3[%c7_111, %c0_112, %c0_113] : memref<8x49x10xf32, #tpu.memory_space<vmem>>, vector<1x49x10xf32>
    %165 = vector.shape_cast %164 : vector<1x49x10xf32> to vector<49x10xf32>
    %cst_114 = arith.constant dense<0.000000e+00> : vector<1x10xf32>
    %166 = tpu.matmul %163, %165, %cst_114 {dimension_numbers = #tpu.dot_dimension_numbers<[1], [0], [0], [1], [0, 0, 1, 1], [], []>} : vector<1x49xf32>, vector<49x10xf32>, vector<1x10xf32> -> vector<1x10xf32>
    %167 = arith.addf %162, %166 : vector<1x10xf32>
    %c0_115 = arith.constant 0 : index
    %c1_116 = arith.constant 1 : index
    %c0_117 = arith.constant 0 : index
    %c0_118 = arith.constant 0 : index
    %168 = vector.load %arg0[%c0_115, %c1_116, %c0_117, %c0_118] : memref<16x2x75x49xf32, #tpu.memory_space<vmem>>, vector<1x1x75x49xf32>
    %169 = vector.shape_cast %168 : vector<1x1x75x49xf32> to vector<75x49xf32>
    %cst_119 = arith.constant dense<0.000000e+00> : vector<8x49xf32>
    %170 = tpu.matmul %0, %169, %cst_119 {dimension_numbers = #tpu.dot_dimension_numbers<[1], [0], [0], [1], [0, 0, 1, 1], [], []>} : vector<8x75xf32>, vector<75x49xf32>, vector<8x49xf32> -> vector<8x49xf32>
    %171 = vector.broadcast %1 : vector<8x1xf32> to vector<8x49xf32>
    %172 = arith.addf %170, %171 : vector<8x49xf32>
    %cst_120 = arith.constant 0.000000e+00 : f32
    %173 = vector.broadcast %cst_120 : f32 to vector<8x49xf32>
    %174 = arith.maximumf %172, %173 : vector<8x49xf32>
    %c1_121 = arith.constant 1 : index
    %c1_122 = arith.constant 1 : index
    %c0_123 = arith.constant 0 : index
    %c0_124 = arith.constant 0 : index
    %175 = vector.load %arg0[%c1_121, %c1_122, %c0_123, %c0_124] : memref<16x2x75x49xf32, #tpu.memory_space<vmem>>, vector<1x1x75x49xf32>
    %176 = vector.shape_cast %175 : vector<1x1x75x49xf32> to vector<75x49xf32>
    %cst_125 = arith.constant dense<0.000000e+00> : vector<8x49xf32>
    %177 = tpu.matmul %0, %176, %cst_125 {dimension_numbers = #tpu.dot_dimension_numbers<[1], [0], [0], [1], [0, 0, 1, 1], [], []>} : vector<8x75xf32>, vector<75x49xf32>, vector<8x49xf32> -> vector<8x49xf32>
    %178 = vector.broadcast %1 : vector<8x1xf32> to vector<8x49xf32>
    %179 = arith.addf %177, %178 : vector<8x49xf32>
    %cst_126 = arith.constant 0.000000e+00 : f32
    %180 = vector.broadcast %cst_126 : f32 to vector<8x49xf32>
    %181 = arith.maximumf %179, %180 : vector<8x49xf32>
    %182 = arith.maximumf %174, %181 : vector<8x49xf32>
    %c2_127 = arith.constant 2 : index
    %c1_128 = arith.constant 1 : index
    %c0_129 = arith.constant 0 : index
    %c0_130 = arith.constant 0 : index
    %183 = vector.load %arg0[%c2_127, %c1_128, %c0_129, %c0_130] : memref<16x2x75x49xf32, #tpu.memory_space<vmem>>, vector<1x1x75x49xf32>
    %184 = vector.shape_cast %183 : vector<1x1x75x49xf32> to vector<75x49xf32>
    %cst_131 = arith.constant dense<0.000000e+00> : vector<8x49xf32>
    %185 = tpu.matmul %0, %184, %cst_131 {dimension_numbers = #tpu.dot_dimension_numbers<[1], [0], [0], [1], [0, 0, 1, 1], [], []>} : vector<8x75xf32>, vector<75x49xf32>, vector<8x49xf32> -> vector<8x49xf32>
    %186 = vector.broadcast %1 : vector<8x1xf32> to vector<8x49xf32>
    %187 = arith.addf %185, %186 : vector<8x49xf32>
    %cst_132 = arith.constant 0.000000e+00 : f32
    %188 = vector.broadcast %cst_132 : f32 to vector<8x49xf32>
    %189 = arith.maximumf %187, %188 : vector<8x49xf32>
    %190 = arith.maximumf %182, %189 : vector<8x49xf32>
    %c3_133 = arith.constant 3 : index
    %c1_134 = arith.constant 1 : index
    %c0_135 = arith.constant 0 : index
    %c0_136 = arith.constant 0 : index
    %191 = vector.load %arg0[%c3_133, %c1_134, %c0_135, %c0_136] : memref<16x2x75x49xf32, #tpu.memory_space<vmem>>, vector<1x1x75x49xf32>
    %192 = vector.shape_cast %191 : vector<1x1x75x49xf32> to vector<75x49xf32>
    %cst_137 = arith.constant dense<0.000000e+00> : vector<8x49xf32>
    %193 = tpu.matmul %0, %192, %cst_137 {dimension_numbers = #tpu.dot_dimension_numbers<[1], [0], [0], [1], [0, 0, 1, 1], [], []>} : vector<8x75xf32>, vector<75x49xf32>, vector<8x49xf32> -> vector<8x49xf32>
    %194 = vector.broadcast %1 : vector<8x1xf32> to vector<8x49xf32>
    %195 = arith.addf %193, %194 : vector<8x49xf32>
    %cst_138 = arith.constant 0.000000e+00 : f32
    %196 = vector.broadcast %cst_138 : f32 to vector<8x49xf32>
    %197 = arith.maximumf %195, %196 : vector<8x49xf32>
    %198 = arith.maximumf %190, %197 : vector<8x49xf32>
    %c4_139 = arith.constant 4 : index
    %c1_140 = arith.constant 1 : index
    %c0_141 = arith.constant 0 : index
    %c0_142 = arith.constant 0 : index
    %199 = vector.load %arg0[%c4_139, %c1_140, %c0_141, %c0_142] : memref<16x2x75x49xf32, #tpu.memory_space<vmem>>, vector<1x1x75x49xf32>
    %200 = vector.shape_cast %199 : vector<1x1x75x49xf32> to vector<75x49xf32>
    %cst_143 = arith.constant dense<0.000000e+00> : vector<8x49xf32>
    %201 = tpu.matmul %0, %200, %cst_143 {dimension_numbers = #tpu.dot_dimension_numbers<[1], [0], [0], [1], [0, 0, 1, 1], [], []>} : vector<8x75xf32>, vector<75x49xf32>, vector<8x49xf32> -> vector<8x49xf32>
    %202 = vector.broadcast %1 : vector<8x1xf32> to vector<8x49xf32>
    %203 = arith.addf %201, %202 : vector<8x49xf32>
    %cst_144 = arith.constant 0.000000e+00 : f32
    %204 = vector.broadcast %cst_144 : f32 to vector<8x49xf32>
    %205 = arith.maximumf %203, %204 : vector<8x49xf32>
    %206 = arith.maximumf %198, %205 : vector<8x49xf32>
    %c5_145 = arith.constant 5 : index
    %c1_146 = arith.constant 1 : index
    %c0_147 = arith.constant 0 : index
    %c0_148 = arith.constant 0 : index
    %207 = vector.load %arg0[%c5_145, %c1_146, %c0_147, %c0_148] : memref<16x2x75x49xf32, #tpu.memory_space<vmem>>, vector<1x1x75x49xf32>
    %208 = vector.shape_cast %207 : vector<1x1x75x49xf32> to vector<75x49xf32>
    %cst_149 = arith.constant dense<0.000000e+00> : vector<8x49xf32>
    %209 = tpu.matmul %0, %208, %cst_149 {dimension_numbers = #tpu.dot_dimension_numbers<[1], [0], [0], [1], [0, 0, 1, 1], [], []>} : vector<8x75xf32>, vector<75x49xf32>, vector<8x49xf32> -> vector<8x49xf32>
    %210 = vector.broadcast %1 : vector<8x1xf32> to vector<8x49xf32>
    %211 = arith.addf %209, %210 : vector<8x49xf32>
    %cst_150 = arith.constant 0.000000e+00 : f32
    %212 = vector.broadcast %cst_150 : f32 to vector<8x49xf32>
    %213 = arith.maximumf %211, %212 : vector<8x49xf32>
    %214 = arith.maximumf %206, %213 : vector<8x49xf32>
    %c6_151 = arith.constant 6 : index
    %c1_152 = arith.constant 1 : index
    %c0_153 = arith.constant 0 : index
    %c0_154 = arith.constant 0 : index
    %215 = vector.load %arg0[%c6_151, %c1_152, %c0_153, %c0_154] : memref<16x2x75x49xf32, #tpu.memory_space<vmem>>, vector<1x1x75x49xf32>
    %216 = vector.shape_cast %215 : vector<1x1x75x49xf32> to vector<75x49xf32>
    %cst_155 = arith.constant dense<0.000000e+00> : vector<8x49xf32>
    %217 = tpu.matmul %0, %216, %cst_155 {dimension_numbers = #tpu.dot_dimension_numbers<[1], [0], [0], [1], [0, 0, 1, 1], [], []>} : vector<8x75xf32>, vector<75x49xf32>, vector<8x49xf32> -> vector<8x49xf32>
    %218 = vector.broadcast %1 : vector<8x1xf32> to vector<8x49xf32>
    %219 = arith.addf %217, %218 : vector<8x49xf32>
    %cst_156 = arith.constant 0.000000e+00 : f32
    %220 = vector.broadcast %cst_156 : f32 to vector<8x49xf32>
    %221 = arith.maximumf %219, %220 : vector<8x49xf32>
    %222 = arith.maximumf %214, %221 : vector<8x49xf32>
    %c7_157 = arith.constant 7 : index
    %c1_158 = arith.constant 1 : index
    %c0_159 = arith.constant 0 : index
    %c0_160 = arith.constant 0 : index
    %223 = vector.load %arg0[%c7_157, %c1_158, %c0_159, %c0_160] : memref<16x2x75x49xf32, #tpu.memory_space<vmem>>, vector<1x1x75x49xf32>
    %224 = vector.shape_cast %223 : vector<1x1x75x49xf32> to vector<75x49xf32>
    %cst_161 = arith.constant dense<0.000000e+00> : vector<8x49xf32>
    %225 = tpu.matmul %0, %224, %cst_161 {dimension_numbers = #tpu.dot_dimension_numbers<[1], [0], [0], [1], [0, 0, 1, 1], [], []>} : vector<8x75xf32>, vector<75x49xf32>, vector<8x49xf32> -> vector<8x49xf32>
    %226 = vector.broadcast %1 : vector<8x1xf32> to vector<8x49xf32>
    %227 = arith.addf %225, %226 : vector<8x49xf32>
    %cst_162 = arith.constant 0.000000e+00 : f32
    %228 = vector.broadcast %cst_162 : f32 to vector<8x49xf32>
    %229 = arith.maximumf %227, %228 : vector<8x49xf32>
    %230 = arith.maximumf %222, %229 : vector<8x49xf32>
    %c8_163 = arith.constant 8 : index
    %c1_164 = arith.constant 1 : index
    %c0_165 = arith.constant 0 : index
    %c0_166 = arith.constant 0 : index
    %231 = vector.load %arg0[%c8_163, %c1_164, %c0_165, %c0_166] : memref<16x2x75x49xf32, #tpu.memory_space<vmem>>, vector<1x1x75x49xf32>
    %232 = vector.shape_cast %231 : vector<1x1x75x49xf32> to vector<75x49xf32>
    %cst_167 = arith.constant dense<0.000000e+00> : vector<8x49xf32>
    %233 = tpu.matmul %0, %232, %cst_167 {dimension_numbers = #tpu.dot_dimension_numbers<[1], [0], [0], [1], [0, 0, 1, 1], [], []>} : vector<8x75xf32>, vector<75x49xf32>, vector<8x49xf32> -> vector<8x49xf32>
    %234 = vector.broadcast %1 : vector<8x1xf32> to vector<8x49xf32>
    %235 = arith.addf %233, %234 : vector<8x49xf32>
    %cst_168 = arith.constant 0.000000e+00 : f32
    %236 = vector.broadcast %cst_168 : f32 to vector<8x49xf32>
    %237 = arith.maximumf %235, %236 : vector<8x49xf32>
    %238 = arith.maximumf %230, %237 : vector<8x49xf32>
    %c9_169 = arith.constant 9 : index
    %c1_170 = arith.constant 1 : index
    %c0_171 = arith.constant 0 : index
    %c0_172 = arith.constant 0 : index
    %239 = vector.load %arg0[%c9_169, %c1_170, %c0_171, %c0_172] : memref<16x2x75x49xf32, #tpu.memory_space<vmem>>, vector<1x1x75x49xf32>
    %240 = vector.shape_cast %239 : vector<1x1x75x49xf32> to vector<75x49xf32>
    %cst_173 = arith.constant dense<0.000000e+00> : vector<8x49xf32>
    %241 = tpu.matmul %0, %240, %cst_173 {dimension_numbers = #tpu.dot_dimension_numbers<[1], [0], [0], [1], [0, 0, 1, 1], [], []>} : vector<8x75xf32>, vector<75x49xf32>, vector<8x49xf32> -> vector<8x49xf32>
    %242 = vector.broadcast %1 : vector<8x1xf32> to vector<8x49xf32>
    %243 = arith.addf %241, %242 : vector<8x49xf32>
    %cst_174 = arith.constant 0.000000e+00 : f32
    %244 = vector.broadcast %cst_174 : f32 to vector<8x49xf32>
    %245 = arith.maximumf %243, %244 : vector<8x49xf32>
    %246 = arith.maximumf %238, %245 : vector<8x49xf32>
    %c10_175 = arith.constant 10 : index
    %c1_176 = arith.constant 1 : index
    %c0_177 = arith.constant 0 : index
    %c0_178 = arith.constant 0 : index
    %247 = vector.load %arg0[%c10_175, %c1_176, %c0_177, %c0_178] : memref<16x2x75x49xf32, #tpu.memory_space<vmem>>, vector<1x1x75x49xf32>
    %248 = vector.shape_cast %247 : vector<1x1x75x49xf32> to vector<75x49xf32>
    %cst_179 = arith.constant dense<0.000000e+00> : vector<8x49xf32>
    %249 = tpu.matmul %0, %248, %cst_179 {dimension_numbers = #tpu.dot_dimension_numbers<[1], [0], [0], [1], [0, 0, 1, 1], [], []>} : vector<8x75xf32>, vector<75x49xf32>, vector<8x49xf32> -> vector<8x49xf32>
    %250 = vector.broadcast %1 : vector<8x1xf32> to vector<8x49xf32>
    %251 = arith.addf %249, %250 : vector<8x49xf32>
    %cst_180 = arith.constant 0.000000e+00 : f32
    %252 = vector.broadcast %cst_180 : f32 to vector<8x49xf32>
    %253 = arith.maximumf %251, %252 : vector<8x49xf32>
    %254 = arith.maximumf %246, %253 : vector<8x49xf32>
    %c11_181 = arith.constant 11 : index
    %c1_182 = arith.constant 1 : index
    %c0_183 = arith.constant 0 : index
    %c0_184 = arith.constant 0 : index
    %255 = vector.load %arg0[%c11_181, %c1_182, %c0_183, %c0_184] : memref<16x2x75x49xf32, #tpu.memory_space<vmem>>, vector<1x1x75x49xf32>
    %256 = vector.shape_cast %255 : vector<1x1x75x49xf32> to vector<75x49xf32>
    %cst_185 = arith.constant dense<0.000000e+00> : vector<8x49xf32>
    %257 = tpu.matmul %0, %256, %cst_185 {dimension_numbers = #tpu.dot_dimension_numbers<[1], [0], [0], [1], [0, 0, 1, 1], [], []>} : vector<8x75xf32>, vector<75x49xf32>, vector<8x49xf32> -> vector<8x49xf32>
    %258 = vector.broadcast %1 : vector<8x1xf32> to vector<8x49xf32>
    %259 = arith.addf %257, %258 : vector<8x49xf32>
    %cst_186 = arith.constant 0.000000e+00 : f32
    %260 = vector.broadcast %cst_186 : f32 to vector<8x49xf32>
    %261 = arith.maximumf %259, %260 : vector<8x49xf32>
    %262 = arith.maximumf %254, %261 : vector<8x49xf32>
    %c12_187 = arith.constant 12 : index
    %c1_188 = arith.constant 1 : index
    %c0_189 = arith.constant 0 : index
    %c0_190 = arith.constant 0 : index
    %263 = vector.load %arg0[%c12_187, %c1_188, %c0_189, %c0_190] : memref<16x2x75x49xf32, #tpu.memory_space<vmem>>, vector<1x1x75x49xf32>
    %264 = vector.shape_cast %263 : vector<1x1x75x49xf32> to vector<75x49xf32>
    %cst_191 = arith.constant dense<0.000000e+00> : vector<8x49xf32>
    %265 = tpu.matmul %0, %264, %cst_191 {dimension_numbers = #tpu.dot_dimension_numbers<[1], [0], [0], [1], [0, 0, 1, 1], [], []>} : vector<8x75xf32>, vector<75x49xf32>, vector<8x49xf32> -> vector<8x49xf32>
    %266 = vector.broadcast %1 : vector<8x1xf32> to vector<8x49xf32>
    %267 = arith.addf %265, %266 : vector<8x49xf32>
    %cst_192 = arith.constant 0.000000e+00 : f32
    %268 = vector.broadcast %cst_192 : f32 to vector<8x49xf32>
    %269 = arith.maximumf %267, %268 : vector<8x49xf32>
    %270 = arith.maximumf %262, %269 : vector<8x49xf32>
    %c13_193 = arith.constant 13 : index
    %c1_194 = arith.constant 1 : index
    %c0_195 = arith.constant 0 : index
    %c0_196 = arith.constant 0 : index
    %271 = vector.load %arg0[%c13_193, %c1_194, %c0_195, %c0_196] : memref<16x2x75x49xf32, #tpu.memory_space<vmem>>, vector<1x1x75x49xf32>
    %272 = vector.shape_cast %271 : vector<1x1x75x49xf32> to vector<75x49xf32>
    %cst_197 = arith.constant dense<0.000000e+00> : vector<8x49xf32>
    %273 = tpu.matmul %0, %272, %cst_197 {dimension_numbers = #tpu.dot_dimension_numbers<[1], [0], [0], [1], [0, 0, 1, 1], [], []>} : vector<8x75xf32>, vector<75x49xf32>, vector<8x49xf32> -> vector<8x49xf32>
    %274 = vector.broadcast %1 : vector<8x1xf32> to vector<8x49xf32>
    %275 = arith.addf %273, %274 : vector<8x49xf32>
    %cst_198 = arith.constant 0.000000e+00 : f32
    %276 = vector.broadcast %cst_198 : f32 to vector<8x49xf32>
    %277 = arith.maximumf %275, %276 : vector<8x49xf32>
    %278 = arith.maximumf %270, %277 : vector<8x49xf32>
    %c14_199 = arith.constant 14 : index
    %c1_200 = arith.constant 1 : index
    %c0_201 = arith.constant 0 : index
    %c0_202 = arith.constant 0 : index
    %279 = vector.load %arg0[%c14_199, %c1_200, %c0_201, %c0_202] : memref<16x2x75x49xf32, #tpu.memory_space<vmem>>, vector<1x1x75x49xf32>
    %280 = vector.shape_cast %279 : vector<1x1x75x49xf32> to vector<75x49xf32>
    %cst_203 = arith.constant dense<0.000000e+00> : vector<8x49xf32>
    %281 = tpu.matmul %0, %280, %cst_203 {dimension_numbers = #tpu.dot_dimension_numbers<[1], [0], [0], [1], [0, 0, 1, 1], [], []>} : vector<8x75xf32>, vector<75x49xf32>, vector<8x49xf32> -> vector<8x49xf32>
    %282 = vector.broadcast %1 : vector<8x1xf32> to vector<8x49xf32>
    %283 = arith.addf %281, %282 : vector<8x49xf32>
    %cst_204 = arith.constant 0.000000e+00 : f32
    %284 = vector.broadcast %cst_204 : f32 to vector<8x49xf32>
    %285 = arith.maximumf %283, %284 : vector<8x49xf32>
    %286 = arith.maximumf %278, %285 : vector<8x49xf32>
    %c15_205 = arith.constant 15 : index
    %c1_206 = arith.constant 1 : index
    %c0_207 = arith.constant 0 : index
    %c0_208 = arith.constant 0 : index
    %287 = vector.load %arg0[%c15_205, %c1_206, %c0_207, %c0_208] : memref<16x2x75x49xf32, #tpu.memory_space<vmem>>, vector<1x1x75x49xf32>
    %288 = vector.shape_cast %287 : vector<1x1x75x49xf32> to vector<75x49xf32>
    %cst_209 = arith.constant dense<0.000000e+00> : vector<8x49xf32>
    %289 = tpu.matmul %0, %288, %cst_209 {dimension_numbers = #tpu.dot_dimension_numbers<[1], [0], [0], [1], [0, 0, 1, 1], [], []>} : vector<8x75xf32>, vector<75x49xf32>, vector<8x49xf32> -> vector<8x49xf32>
    %290 = vector.broadcast %1 : vector<8x1xf32> to vector<8x49xf32>
    %291 = arith.addf %289, %290 : vector<8x49xf32>
    %cst_210 = arith.constant 0.000000e+00 : f32
    %292 = vector.broadcast %cst_210 : f32 to vector<8x49xf32>
    %293 = arith.maximumf %291, %292 : vector<8x49xf32>
    %294 = arith.maximumf %286, %293 : vector<8x49xf32>
    %295 = vector.extract_strided_slice %294 {offsets = [0, 0], sizes = [1, 49], strides = [1, 1]} : vector<8x49xf32> to vector<1x49xf32>
    %c0_211 = arith.constant 0 : index
    %c0_212 = arith.constant 0 : index
    %c0_213 = arith.constant 0 : index
    %296 = vector.load %arg3[%c0_211, %c0_212, %c0_213] : memref<8x49x10xf32, #tpu.memory_space<vmem>>, vector<1x49x10xf32>
    %297 = vector.shape_cast %296 : vector<1x49x10xf32> to vector<49x10xf32>
    %cst_214 = arith.constant dense<0.000000e+00> : vector<1x10xf32>
    %298 = tpu.matmul %295, %297, %cst_214 {dimension_numbers = #tpu.dot_dimension_numbers<[1], [0], [0], [1], [0, 0, 1, 1], [], []>} : vector<1x49xf32>, vector<49x10xf32>, vector<1x10xf32> -> vector<1x10xf32>
    %299 = vector.extract_strided_slice %294 {offsets = [1, 0], sizes = [1, 49], strides = [1, 1]} : vector<8x49xf32> to vector<1x49xf32>
    %c1_215 = arith.constant 1 : index
    %c0_216 = arith.constant 0 : index
    %c0_217 = arith.constant 0 : index
    %300 = vector.load %arg3[%c1_215, %c0_216, %c0_217] : memref<8x49x10xf32, #tpu.memory_space<vmem>>, vector<1x49x10xf32>
    %301 = vector.shape_cast %300 : vector<1x49x10xf32> to vector<49x10xf32>
    %cst_218 = arith.constant dense<0.000000e+00> : vector<1x10xf32>
    %302 = tpu.matmul %299, %301, %cst_218 {dimension_numbers = #tpu.dot_dimension_numbers<[1], [0], [0], [1], [0, 0, 1, 1], [], []>} : vector<1x49xf32>, vector<49x10xf32>, vector<1x10xf32> -> vector<1x10xf32>
    %303 = arith.addf %298, %302 : vector<1x10xf32>
    %304 = vector.extract_strided_slice %294 {offsets = [2, 0], sizes = [1, 49], strides = [1, 1]} : vector<8x49xf32> to vector<1x49xf32>
    %c2_219 = arith.constant 2 : index
    %c0_220 = arith.constant 0 : index
    %c0_221 = arith.constant 0 : index
    %305 = vector.load %arg3[%c2_219, %c0_220, %c0_221] : memref<8x49x10xf32, #tpu.memory_space<vmem>>, vector<1x49x10xf32>
    %306 = vector.shape_cast %305 : vector<1x49x10xf32> to vector<49x10xf32>
    %cst_222 = arith.constant dense<0.000000e+00> : vector<1x10xf32>
    %307 = tpu.matmul %304, %306, %cst_222 {dimension_numbers = #tpu.dot_dimension_numbers<[1], [0], [0], [1], [0, 0, 1, 1], [], []>} : vector<1x49xf32>, vector<49x10xf32>, vector<1x10xf32> -> vector<1x10xf32>
    %308 = arith.addf %303, %307 : vector<1x10xf32>
    %309 = vector.extract_strided_slice %294 {offsets = [3, 0], sizes = [1, 49], strides = [1, 1]} : vector<8x49xf32> to vector<1x49xf32>
    %c3_223 = arith.constant 3 : index
    %c0_224 = arith.constant 0 : index
    %c0_225 = arith.constant 0 : index
    %310 = vector.load %arg3[%c3_223, %c0_224, %c0_225] : memref<8x49x10xf32, #tpu.memory_space<vmem>>, vector<1x49x10xf32>
    %311 = vector.shape_cast %310 : vector<1x49x10xf32> to vector<49x10xf32>
    %cst_226 = arith.constant dense<0.000000e+00> : vector<1x10xf32>
    %312 = tpu.matmul %309, %311, %cst_226 {dimension_numbers = #tpu.dot_dimension_numbers<[1], [0], [0], [1], [0, 0, 1, 1], [], []>} : vector<1x49xf32>, vector<49x10xf32>, vector<1x10xf32> -> vector<1x10xf32>
    %313 = arith.addf %308, %312 : vector<1x10xf32>
    %314 = vector.extract_strided_slice %294 {offsets = [4, 0], sizes = [1, 49], strides = [1, 1]} : vector<8x49xf32> to vector<1x49xf32>
    %c4_227 = arith.constant 4 : index
    %c0_228 = arith.constant 0 : index
    %c0_229 = arith.constant 0 : index
    %315 = vector.load %arg3[%c4_227, %c0_228, %c0_229] : memref<8x49x10xf32, #tpu.memory_space<vmem>>, vector<1x49x10xf32>
    %316 = vector.shape_cast %315 : vector<1x49x10xf32> to vector<49x10xf32>
    %cst_230 = arith.constant dense<0.000000e+00> : vector<1x10xf32>
    %317 = tpu.matmul %314, %316, %cst_230 {dimension_numbers = #tpu.dot_dimension_numbers<[1], [0], [0], [1], [0, 0, 1, 1], [], []>} : vector<1x49xf32>, vector<49x10xf32>, vector<1x10xf32> -> vector<1x10xf32>
    %318 = arith.addf %313, %317 : vector<1x10xf32>
    %319 = vector.extract_strided_slice %294 {offsets = [5, 0], sizes = [1, 49], strides = [1, 1]} : vector<8x49xf32> to vector<1x49xf32>
    %c5_231 = arith.constant 5 : index
    %c0_232 = arith.constant 0 : index
    %c0_233 = arith.constant 0 : index
    %320 = vector.load %arg3[%c5_231, %c0_232, %c0_233] : memref<8x49x10xf32, #tpu.memory_space<vmem>>, vector<1x49x10xf32>
    %321 = vector.shape_cast %320 : vector<1x49x10xf32> to vector<49x10xf32>
    %cst_234 = arith.constant dense<0.000000e+00> : vector<1x10xf32>
    %322 = tpu.matmul %319, %321, %cst_234 {dimension_numbers = #tpu.dot_dimension_numbers<[1], [0], [0], [1], [0, 0, 1, 1], [], []>} : vector<1x49xf32>, vector<49x10xf32>, vector<1x10xf32> -> vector<1x10xf32>
    %323 = arith.addf %318, %322 : vector<1x10xf32>
    %324 = vector.extract_strided_slice %294 {offsets = [6, 0], sizes = [1, 49], strides = [1, 1]} : vector<8x49xf32> to vector<1x49xf32>
    %c6_235 = arith.constant 6 : index
    %c0_236 = arith.constant 0 : index
    %c0_237 = arith.constant 0 : index
    %325 = vector.load %arg3[%c6_235, %c0_236, %c0_237] : memref<8x49x10xf32, #tpu.memory_space<vmem>>, vector<1x49x10xf32>
    %326 = vector.shape_cast %325 : vector<1x49x10xf32> to vector<49x10xf32>
    %cst_238 = arith.constant dense<0.000000e+00> : vector<1x10xf32>
    %327 = tpu.matmul %324, %326, %cst_238 {dimension_numbers = #tpu.dot_dimension_numbers<[1], [0], [0], [1], [0, 0, 1, 1], [], []>} : vector<1x49xf32>, vector<49x10xf32>, vector<1x10xf32> -> vector<1x10xf32>
    %328 = arith.addf %323, %327 : vector<1x10xf32>
    %329 = vector.extract_strided_slice %294 {offsets = [7, 0], sizes = [1, 49], strides = [1, 1]} : vector<8x49xf32> to vector<1x49xf32>
    %c7_239 = arith.constant 7 : index
    %c0_240 = arith.constant 0 : index
    %c0_241 = arith.constant 0 : index
    %330 = vector.load %arg3[%c7_239, %c0_240, %c0_241] : memref<8x49x10xf32, #tpu.memory_space<vmem>>, vector<1x49x10xf32>
    %331 = vector.shape_cast %330 : vector<1x49x10xf32> to vector<49x10xf32>
    %cst_242 = arith.constant dense<0.000000e+00> : vector<1x10xf32>
    %332 = tpu.matmul %329, %331, %cst_242 {dimension_numbers = #tpu.dot_dimension_numbers<[1], [0], [0], [1], [0, 0, 1, 1], [], []>} : vector<1x49xf32>, vector<49x10xf32>, vector<1x10xf32> -> vector<1x10xf32>
    %333 = arith.addf %328, %332 : vector<1x10xf32>
    %334 = tpu.concatenate %167, %333 in 0 : vector<1x10xf32>, vector<1x10xf32> -> vector<2x10xf32>
    %c0_243 = arith.constant 0 : index
    %c0_244 = arith.constant 0 : index
    %335 = vector.load %arg4[%c0_243, %c0_244] : memref<1x10xf32, #tpu.memory_space<vmem>>, vector<1x10xf32>
    %336 = vector.broadcast %335 : vector<1x10xf32> to vector<2x10xf32>
    %337 = arith.addf %334, %336 : vector<2x10xf32>
    %c0_245 = arith.constant 0 : index
    %c0_246 = arith.constant 0 : index
    %338 = vector.load %arg5[%c0_245, %c0_246] : memref<2x10xf32, #tpu.memory_space<vmem>>, vector<2x10xf32>
    tpu.vector_store %arg5[%c0_245, %c0_246], %337 {strides = array<i32>} : memref<2x10xf32, #tpu.memory_space<vmem>>, vector<2x10xf32>,
    return
  }
}

</mosaic_0001>

<llo_original>
// kernel: third_net_forward.1
$region0: #{third_net_forward.1}
  #allocation0 [shape = 'u32[]', space=smem, size = 0x4, offset = 0x4, fixed_abs, tag = 'smem constant byte address 0x4 - core index']
  #allocation1 [shape = 'u32[144,128]{1,0:T(1,128)}', space=vmem, size = 0x12000, scoped, tag = 'internal scratch']
  %s0 = inlined_call_operand.vmem [shape: f32[16,2,75,49], index: 0, kind: input, shape index: {}]
  %s1 = inlined_call_operand.vmem [shape: f32[8,75], index: 1, kind: input, shape index: {}]
  %s2 = inlined_call_operand.vmem [shape: f32[8,1], index: 2, kind: input, shape index: {}]
  %s3 = inlined_call_operand.vmem [shape: f32[8,49,10], index: 3, kind: input, shape index: {}]
  %s4 = inlined_call_operand.vmem [shape: f32[1,10], index: 4, kind: input, shape index: {}]
  %s5 = inlined_call_operand.hbm [shape: f32[2,10], index: 5, kind: output, shape index: {}]
  %s6 = sld [smem:[#allocation0]]
  $region30: #{third_net_forward.1} parent=0
    _
  %s8 = ssub.s32 1, %s6
  %s9 = scalar_select 0, %s8, %s6
  $region1: #{third_net_forward.1} parent=0
    #allocation2 [shape = 'u8[1024]{0}', space=vmem, size = 0x400, scoped, tag = 'output window, operand 0, single buffered']
    #allocation3 [shape = 's32[1]{0}', space=sflag, size = 0x4, scoped, tag = 'scoped memory for third_net_forward.1']
    %10 = vsyncpa [#allocation3], 0
    // Predicated region
    $region2: #{third_net_forward.1} parent=1 // pred_check
      _
    $region3: #{third_net_forward.1} parent=1 // pred_check_branch
      %12 = sbr.rel (0) target = $region5
    $region4: #{third_net_forward.1} parent=1 // pred_region
      _
    $region5: #{third_net_forward.1} parent=1 // pred_fallthru
      _
    // Predicated region
    $region6: #{third_net_forward.1} parent=1 // pred_check
      _
    $region7: #{third_net_forward.1} parent=1 // pred_check_branch
      %14 = sbr.rel (0) target = $region9
    $region8: #{third_net_forward.1} parent=1 // pred_region
      _
    $region9: #{third_net_forward.1} parent=1 // pred_fallthru
      _
    // Predicated region
    $region10: #{third_net_forward.1} parent=1 // pred_check
      _
    $region11: #{third_net_forward.1} parent=1 // pred_check_branch
      %16 = sbr.rel (0) target = $region13
    $region12: #{third_net_forward.1} parent=1 // pred_region
      _
    $region13: #{third_net_forward.1} parent=1 // pred_fallthru
      _
    // Predicated region
    $region14: #{third_net_forward.1} parent=1 // pred_check
      _
    $region15: #{third_net_forward.1} parent=1 // pred_check_branch
      %18 = sbr.rel (0) target = $region17
    $region16: #{third_net_forward.1} parent=1 // pred_region
      _
    $region17: #{third_net_forward.1} parent=1 // pred_fallthru
      _
    // Predicated region
    $region18: #{third_net_forward.1} parent=1 // pred_check
      _
    $region19: #{third_net_forward.1} parent=1 // pred_check_branch
      %20 = sbr.rel (0) target = $region21
    $region20: #{third_net_forward.1} parent=1 // pred_region
      _
    $region21: #{third_net_forward.1} parent=1 // pred_fallthru
      _
    %v21 = vld [vmem:[%s1] sm:$0xff]
    %v22 = vld [vmem:[%s2] sm:$0xff]
    %v23 = vld [vmem:[%s0] sm:$0xff]
    %v24 = vld [vmem:[%s0 + $0x8] sm:$0xff]
    %v25 = vld [vmem:[%s0 + $0x10] sm:$0xff]
    %v26 = vld [vmem:[%s0 + $0x18] sm:$0xff]
    %v27 = vld [vmem:[%s0 + $0x20] sm:$0xff]
    %v28 = vld [vmem:[%s0 + $0x28] sm:$0xff]
    %v29 = vld [vmem:[%s0 + $0x30] sm:$0xff]
    %v30 = vld [vmem:[%s0 + $0x38] sm:$0xff]
    %v31 = vld [vmem:[%s0 + $0x40] sm:$0xff]
    %v32 = vld [vmem:[%s0 + $0x48] sm:$0x7]
    %34 = vset.pattern.permute.xlu0 0
    %35 = vperm.xlu0 %34, %v22
    %v36 = vpop.permute.xlu0 %35
    %vm38 = vcmask 613376
    %v40 = vsel %vm38, %v21, 0
    %vm42 = vcmask 1042432
    %v44 = vsel %vm42, %v32, 0
    %46 = vmatprep.subr.mxu0 0.0
    %47 = vmatpush1.msra.mxu0 0.0
    %48 = vmatprep.subr.mxu0 0.0
    %49 = vmatpush1.msra.mxu0 0.0
    %50 = vmatprep.subr.mxu0 0.0
    %51 = vmatpush1.msra.mxu0 0.0
    %52 = vmatprep.subr.mxu0 0.0
    %53 = vmatpush1.msra.mxu0 0.0
    %54 = vmatprep.subr.mxu0 0.0
    %55 = vmatpush1.msra.mxu0 0.0
    %56 = vmatprep.subr.mxu0 0.0
    %57 = vmatpush1.msra.mxu0 0.0
    %58 = vmatprep.subr.mxu0 0.0
    %59 = vmatpush1.msra.mxu0 %v44
    %60 = vmatprep.subr.mxu0 0.0
    %61 = vmatpush1.msra.mxu0 %v31
    %62 = vmatprep.subr.mxu0 0.0
    %63 = vmatpush1.msra.mxu0 %v30
    %64 = vmatprep.subr.mxu0 0.0
    %65 = vmatpush1.msra.mxu0 %v29
    %66 = vmatprep.subr.mxu0 0.0
    %67 = vmatpush1.msra.mxu0 %v28
    %68 = vmatprep.subr.mxu0 0.0
    %69 = vmatpush1.msra.mxu0 %v27
    %70 = vmatprep.subr.mxu0 0.0
    %71 = vmatpush1.msra.mxu0 %v26
    %72 = vmatprep.subr.mxu0 0.0
    %73 = vmatpush1.msra.mxu0 %v25
    %74 = vmatprep.subr.mxu0 0.0
    %75 = vmatpush1.msra.mxu0 %v24
    %76 = vmatprep.subr.mxu0 0.0
    %77 = vmatpush1.msra.mxu0 %v23
    %78 = vmatprep.subr.mxu0 0.0
    %79 = vmatpush2.msra.mxu0 0.0
    %80 = vmatprep.subr.mxu0 0.0
    %81 = vmatpush2.msra.mxu0 0.0
    %82 = vmatprep.subr.mxu0 0.0
    %83 = vmatpush2.msra.mxu0 0.0
    %84 = vmatprep.subr.mxu0 0.0
    %85 = vmatpush2.msra.mxu0 0.0
    %86 = vmatprep.subr.mxu0 0.0
    %87 = vmatpush2.msra.mxu0 0.0
    %88 = vmatprep.subr.mxu0 0.0
    %89 = vmatpush2.msra.mxu0 0.0
    %90 = vmatprep.subr.mxu0 0.0
    %91 = vmatpush2.msra.mxu0 0.0
    %92 = vmatprep.subr.mxu0 0.0
    %93 = vmatpush2.msra.mxu0 0.0
    %94 = vmatprep.subr.mxu0 0.0
    %95 = vmatpush2.msra.mxu0 0.0
    %96 = vmatprep.subr.mxu0 0.0
    %97 = vmatpush2.msra.mxu0 0.0
    %98 = vmatprep.subr.mxu0 0.0
    %99 = vmatpush2.msra.mxu0 0.0
    %100 = vmatprep.subr.mxu0 0.0
    %101 = vmatpush2.msra.mxu0 0.0
    %102 = vmatprep.subr.mxu0 0.0
    %103 = vmatpush2.msra.mxu0 0.0
    %104 = vmatprep.subr.mxu0 0.0
    %105 = vmatpush2.msra.mxu0 0.0
    %106 = vmatprep.subr.mxu0 0.0
    %107 = vmatpush2.msra.mxu0 0.0
    %108 = vmatprep.subr.mxu0 0.0
    %109 = vmatpush2.msra.mxu0 0.0
    %110 = vmatprep.mubr.f32.mxu0 0.0
    %111 = vmatmul.mubr.f32.gmra.mxu0 %v40
    %v112 = vpop.f32.mrf.mxu0
    %v113 = vadd.f32 %v36, %v112
    %v114 = vpop.f32.mrf.mxu0
    %115 = vdwg.mxu0
    %v116 = vmax.f32 %v113, 0.0
    %s117 = scalar_lea.vmem %s0, 160
    %v118 = vld [vmem:[%s117] sm:$0xff]
    %v119 = vld [vmem:[%s117 + $0x8] sm:$0xff]
    %v120 = vld [vmem:[%s117 + $0x10] sm:$0xff]
    %v121 = vld [vmem:[%s117 + $0x18] sm:$0xff]
    %v122 = vld [vmem:[%s117 + $0x20] sm:$0xff]
    %v123 = vld [vmem:[%s117 + $0x28] sm:$0xff]
    %v124 = vld [vmem:[%s117 + $0x30] sm:$0xff]
    %v125 = vld [vmem:[%s117 + $0x38] sm:$0xff]
    %v126 = vld [vmem:[%s117 + $0x40] sm:$0xff]
    %v127 = vld [vmem:[%s117 + $0x48] sm:$0x7]
    %v129 = vsel %vm42, %v127, 0
    %131 = vmatprep.subr.mxu0 0.0
    %132 = vmatpush1.msra.mxu0 0.0
    %133 = vmatprep.subr.mxu0 0.0
    %134 = vmatpush1.msra.mxu0 0.0
    %135 = vmatprep.subr.mxu0 0.0
    %136 = vmatpush1.msra.mxu0 0.0
    %137 = vmatprep.subr.mxu0 0.0
    %138 = vmatpush1.msra.mxu0 0.0
    %139 = vmatprep.subr.mxu0 0.0
    %140 = vmatpush1.msra.mxu0 0.0
    %141 = vmatprep.subr.mxu0 0.0
    %142 = vmatpush1.msra.mxu0 0.0
    %143 = vmatprep.subr.mxu0 0.0
    %144 = vmatpush1.msra.mxu0 %v129
    %145 = vmatprep.subr.mxu0 0.0
    %146 = vmatpush1.msra.mxu0 %v126
    %147 = vmatprep.subr.mxu0 0.0
    %148 = vmatpush1.msra.mxu0 %v125
    %149 = vmatprep.subr.mxu0 0.0
    %150 = vmatpush1.msra.mxu0 %v124
    %151 = vmatprep.subr.mxu0 0.0
    %152 = vmatpush1.msra.mxu0 %v123
    %153 = vmatprep.subr.mxu0 0.0
    %154 = vmatpush1.msra.mxu0 %v122
    %155 = vmatprep.subr.mxu0 0.0
    %156 = vmatpush1.msra.mxu0 %v121
    %157 = vmatprep.subr.mxu0 0.0
    %158 = vmatpush1.msra.mxu0 %v120
    %159 = vmatprep.subr.mxu0 0.0
    %160 = vmatpush1.msra.mxu0 %v119
    %161 = vmatprep.subr.mxu0 0.0
    %162 = vmatpush1.msra.mxu0 %v118
    %163 = vmatprep.subr.mxu0 0.0
    %164 = vmatpush2.msra.mxu0 0.0
    %165 = vmatprep.subr.mxu0 0.0
    %166 = vmatpush2.msra.mxu0 0.0
    %167 = vmatprep.subr.mxu0 0.0
    %168 = vmatpush2.msra.mxu0 0.0
    %169 = vmatprep.subr.mxu0 0.0
    %170 = vmatpush2.msra.mxu0 0.0
    %171 = vmatprep.subr.mxu0 0.0
    %172 = vmatpush2.msra.mxu0 0.0
    %173 = vmatprep.subr.mxu0 0.0
    %174 = vmatpush2.msra.mxu0 0.0
    %175 = vmatprep.subr.mxu0 0.0
    %176 = vmatpush2.msra.mxu0 0.0
    %177 = vmatprep.subr.mxu0 0.0
    %178 = vmatpush2.msra.mxu0 0.0
    %179 = vmatprep.subr.mxu0 0.0
    %180 = vmatpush2.msra.mxu0 0.0
    %181 = vmatprep.subr.mxu0 0.0
    %182 = vmatpush2.msra.mxu0 0.0
    %183 = vmatprep.subr.mxu0 0.0
    %184 = vmatpush2.msra.mxu0 0.0
    %185 = vmatprep.subr.mxu0 0.0
    %186 = vmatpush2.msra.mxu0 0.0
    %187 = vmatprep.subr.mxu0 0.0
    %188 = vmatpush2.msra.mxu0 0.0
    %189 = vmatprep.subr.mxu0 0.0
    %190 = vmatpush2.msra.mxu0 0.0
    %191 = vmatprep.subr.mxu0 0.0
    %192 = vmatpush2.msra.mxu0 0.0
    %193 = vmatprep.subr.mxu0 0.0
    %194 = vmatpush2.msra.mxu0 0.0
    %195 = vmatprep.mubr.f32.mxu0 0.0
    %196 = vmatmul.mubr.f32.gmra.mxu0 %v40
    %v197 = vpop.f32.mrf.mxu0
    %v198 = vadd.f32 %v36, %v197
    %v199 = vpop.f32.mrf.mxu0
    %200 = vdwg.mxu0
    %v201 = vmax.f32 %v198, 0.0
    %v202 = vmax.f32 %v116, %v201
    %s203 = scalar_lea.vmem %s0, 320
    %v204 = vld [vmem:[%s203] sm:$0xff]
    %v205 = vld [vmem:[%s203 + $0x8] sm:$0xff]
    %v206 = vld [vmem:[%s203 + $0x10] sm:$0xff]
    %v207 = vld [vmem:[%s203 + $0x18] sm:$0xff]
    %v208 = vld [vmem:[%s203 + $0x20] sm:$0xff]
    %v209 = vld [vmem:[%s203 + $0x28] sm:$0xff]
    %v210 = vld [vmem:[%s203 + $0x30] sm:$0xff]
    %v211 = vld [vmem:[%s203 + $0x38] sm:$0xff]
    %v212 = vld [vmem:[%s203 + $0x40] sm:$0xff]
    %v213 = vld [vmem:[%s203 + $0x48] sm:$0x7]
    %v215 = vsel %vm42, %v213, 0
    %217 = vmatprep.subr.mxu0 0.0
    %218 = vmatpush1.msra.mxu0 0.0
    %219 = vmatprep.subr.mxu0 0.0
    %220 = vmatpush1.msra.mxu0 0.0
    %221 = vmatprep.subr.mxu0 0.0
    %222 = vmatpush1.msra.mxu0 0.0
    %223 = vmatprep.subr.mxu0 0.0
    %224 = vmatpush1.msra.mxu0 0.0
    %225 = vmatprep.subr.mxu0 0.0
    %226 = vmatpush1.msra.mxu0 0.0
    %227 = vmatprep.subr.mxu0 0.0
    %228 = vmatpush1.msra.mxu0 0.0
    %229 = vmatprep.subr.mxu0 0.0
    %230 = vmatpush1.msra.mxu0 %v215
    %231 = vmatprep.subr.mxu0 0.0
    %232 = vmatpush1.msra.mxu0 %v212
    %233 = vmatprep.subr.mxu0 0.0
    %234 = vmatpush1.msra.mxu0 %v211
    %235 = vmatprep.subr.mxu0 0.0
    %236 = vmatpush1.msra.mxu0 %v210
    %237 = vmatprep.subr.mxu0 0.0
    %238 = vmatpush1.msra.mxu0 %v209
    %239 = vmatprep.subr.mxu0 0.0
    %240 = vmatpush1.msra.mxu0 %v208
    %241 = vmatprep.subr.mxu0 0.0
    %242 = vmatpush1.msra.mxu0 %v207
    %243 = vmatprep.subr.mxu0 0.0
    %244 = vmatpush1.msra.mxu0 %v206
    %245 = vmatprep.subr.mxu0 0.0
    %246 = vmatpush1.msra.mxu0 %v205
    %247 = vmatprep.subr.mxu0 0.0
    %248 = vmatpush1.msra.mxu0 %v204
    %249 = vmatprep.subr.mxu0 0.0
    %250 = vmatpush2.msra.mxu0 0.0
    %251 = vmatprep.subr.mxu0 0.0
    %252 = vmatpush2.msra.mxu0 0.0
    %253 = vmatprep.subr.mxu0 0.0
    %254 = vmatpush2.msra.mxu0 0.0
    %255 = vmatprep.subr.mxu0 0.0
    %256 = vmatpush2.msra.mxu0 0.0
    %257 = vmatprep.subr.mxu0 0.0
    %258 = vmatpush2.msra.mxu0 0.0
    %259 = vmatprep.subr.mxu0 0.0
    %260 = vmatpush2.msra.mxu0 0.0
    %261 = vmatprep.subr.mxu0 0.0
    %262 = vmatpush2.msra.mxu0 0.0
    %263 = vmatprep.subr.mxu0 0.0
    %264 = vmatpush2.msra.mxu0 0.0
    %265 = vmatprep.subr.mxu0 0.0
    %266 = vmatpush2.msra.mxu0 0.0
    %267 = vmatprep.subr.mxu0 0.0
    %268 = vmatpush2.msra.mxu0 0.0
    %269 = vmatprep.subr.mxu0 0.0
    %270 = vmatpush2.msra.mxu0 0.0
    %271 = vmatprep.subr.mxu0 0.0
    %272 = vmatpush2.msra.mxu0 0.0
    %273 = vmatprep.subr.mxu0 0.0
    %274 = vmatpush2.msra.mxu0 0.0
    %275 = vmatprep.subr.mxu0 0.0
    %276 = vmatpush2.msra.mxu0 0.0
    %277 = vmatprep.subr.mxu0 0.0
    %278 = vmatpush2.msra.mxu0 0.0
    %279 = vmatprep.subr.mxu0 0.0
    %280 = vmatpush2.msra.mxu0 0.0
    %281 = vmatprep.mubr.f32.mxu0 0.0
    %282 = vmatmul.mubr.f32.gmra.mxu0 %v40
    %v283 = vpop.f32.mrf.mxu0
    %v284 = vadd.f32 %v36, %v283
    %v285 = vpop.f32.mrf.mxu0
    %286 = vdwg.mxu0
    %v287 = vmax.f32 %v284, 0.0
    %v288 = vmax.f32 %v202, %v287
    %s289 = scalar_lea.vmem %s0, 480
    %v290 = vld [vmem:[%s289] sm:$0xff]
    %v291 = vld [vmem:[%s289 + $0x8] sm:$0xff]
    %v292 = vld [vmem:[%s289 + $0x10] sm:$0xff]
    %v293 = vld [vmem:[%s289 + $0x18] sm:$0xff]
    %v294 = vld [vmem:[%s289 + $0x20] sm:$0xff]
    %v295 = vld [vmem:[%s289 + $0x28] sm:$0xff]
    %v296 = vld [vmem:[%s289 + $0x30] sm:$0xff]
    %v297 = vld [vmem:[%s289 + $0x38] sm:$0xff]
    %v298 = vld [vmem:[%s289 + $0x40] sm:$0xff]
    %v299 = vld [vmem:[%s289 + $0x48] sm:$0x7]
    %v301 = vsel %vm42, %v299, 0
    %303 = vmatprep.subr.mxu0 0.0
    %304 = vmatpush1.msra.mxu0 0.0
    %305 = vmatprep.subr.mxu0 0.0
    %306 = vmatpush1.msra.mxu0 0.0
    %307 = vmatprep.subr.mxu0 0.0
    %308 = vmatpush1.msra.mxu0 0.0
    %309 = vmatprep.subr.mxu0 0.0
    %310 = vmatpush1.msra.mxu0 0.0
    %311 = vmatprep.subr.mxu0 0.0
    %312 = vmatpush1.msra.mxu0 0.0
    %313 = vmatprep.subr.mxu0 0.0
    %314 = vmatpush1.msra.mxu0 0.0
    %315 = vmatprep.subr.mxu0 0.0
    %316 = vmatpush1.msra.mxu0 %v301
    %317 = vmatprep.subr.mxu0 0.0
    %318 = vmatpush1.msra.mxu0 %v298
    %319 = vmatprep.subr.mxu0 0.0
    %320 = vmatpush1.msra.mxu0 %v297
    %321 = vmatprep.subr.mxu0 0.0
    %322 = vmatpush1.msra.mxu0 %v296
    %323 = vmatprep.subr.mxu0 0.0
    %324 = vmatpush1.msra.mxu0 %v295
    %325 = vmatprep.subr.mxu0 0.0
    %326 = vmatpush1.msra.mxu0 %v294
    %327 = vmatprep.subr.mxu0 0.0
    %328 = vmatpush1.msra.mxu0 %v293
    %329 = vmatprep.subr.mxu0 0.0
    %330 = vmatpush1.msra.mxu0 %v292
    %331 = vmatprep.subr.mxu0 0.0
    %332 = vmatpush1.msra.mxu0 %v291
    %333 = vmatprep.subr.mxu0 0.0
    %334 = vmatpush1.msra.mxu0 %v290
    %335 = vmatprep.subr.mxu0 0.0
    %336 = vmatpush2.msra.mxu0 0.0
    %337 = vmatprep.subr.mxu0 0.0
    %338 = vmatpush2.msra.mxu0 0.0
    %339 = vmatprep.subr.mxu0 0.0
    %340 = vmatpush2.msra.mxu0 0.0
    %341 = vmatprep.subr.mxu0 0.0
    %342 = vmatpush2.msra.mxu0 0.0
    %343 = vmatprep.subr.mxu0 0.0
    %344 = vmatpush2.msra.mxu0 0.0
    %345 = vmatprep.subr.mxu0 0.0
    %346 = vmatpush2.msra.mxu0 0.0
    %347 = vmatprep.subr.mxu0 0.0
    %348 = vmatpush2.msra.mxu0 0.0
    %349 = vmatprep.subr.mxu0 0.0
    %350 = vmatpush2.msra.mxu0 0.0
    %351 = vmatprep.subr.mxu0 0.0
    %352 = vmatpush2.msra.mxu0 0.0
    %353 = vmatprep.subr.mxu0 0.0
    %354 = vmatpush2.msra.mxu0 0.0
    %355 = vmatprep.subr.mxu0 0.0
    %356 = vmatpush2.msra.mxu0 0.0
    %357 = vmatprep.subr.mxu0 0.0
    %358 = vmatpush2.msra.mxu0 0.0
    %359 = vmatprep.subr.mxu0 0.0
    %360 = vmatpush2.msra.mxu0 0.0
    %361 = vmatprep.subr.mxu0 0.0
    %362 = vmatpush2.msra.mxu0 0.0
    %363 = vmatprep.subr.mxu0 0.0
    %364 = vmatpush2.msra.mxu0 0.0
    %365 = vmatprep.subr.mxu0 0.0
    %366 = vmatpush2.msra.mxu0 0.0
    %367 = vmatprep.mubr.f32.mxu0 0.0
    %368 = vmatmul.mubr.f32.gmra.mxu0 %v40
    %v369 = vpop.f32.mrf.mxu0
    %v370 = vadd.f32 %v36, %v369
    %v371 = vpop.f32.mrf.mxu0
    %372 = vdwg.mxu0
    %v373 = vmax.f32 %v370, 0.0
    %v374 = vmax.f32 %v288, %v373
    %s375 = scalar_lea.vmem %s0, 640
    %v376 = vld [vmem:[%s375] sm:$0xff]
    %v377 = vld [vmem:[%s375 + $0x8] sm:$0xff]
    %v378 = vld [vmem:[%s375 + $0x10] sm:$0xff]
    %v379 = vld [vmem:[%s375 + $0x18] sm:$0xff]
    %v380 = vld [vmem:[%s375 + $0x20] sm:$0xff]
    %v381 = vld [vmem:[%s375 + $0x28] sm:$0xff]
    %v382 = vld [vmem:[%s375 + $0x30] sm:$0xff]
    %v383 = vld [vmem:[%s375 + $0x38] sm:$0xff]
    %v384 = vld [vmem:[%s375 + $0x40] sm:$0xff]
    %v385 = vld [vmem:[%s375 + $0x48] sm:$0x7]
    %v387 = vsel %vm42, %v385, 0
    %389 = vmatprep.subr.mxu0 0.0
    %390 = vmatpush1.msra.mxu0 0.0
    %391 = vmatprep.subr.mxu0 0.0
    %392 = vmatpush1.msra.mxu0 0.0
    %393 = vmatprep.subr.mxu0 0.0
    %394 = vmatpush1.msra.mxu0 0.0
    %395 = vmatprep.subr.mxu0 0.0
    %396 = vmatpush1.msra.mxu0 0.0
    %397 = vmatprep.subr.mxu0 0.0
    %398 = vmatpush1.msra.mxu0 0.0
    %399 = vmatprep.subr.mxu0 0.0
    %400 = vmatpush1.msra.mxu0 0.0
    %401 = vmatprep.subr.mxu0 0.0
    %402 = vmatpush1.msra.mxu0 %v387
    %403 = vmatprep.subr.mxu0 0.0
    %404 = vmatpush1.msra.mxu0 %v384
    %405 = vmatprep.subr.mxu0 0.0
    %406 = vmatpush1.msra.mxu0 %v383
    %407 = vmatprep.subr.mxu0 0.0
    %408 = vmatpush1.msra.mxu0 %v382
    %409 = vmatprep.subr.mxu0 0.0
    %410 = vmatpush1.msra.mxu0 %v381
    %411 = vmatprep.subr.mxu0 0.0
    %412 = vmatpush1.msra.mxu0 %v380
    %413 = vmatprep.subr.mxu0 0.0
    %414 = vmatpush1.msra.mxu0 %v379
    %415 = vmatprep.subr.mxu0 0.0
    %416 = vmatpush1.msra.mxu0 %v378
    %417 = vmatprep.subr.mxu0 0.0
    %418 = vmatpush1.msra.mxu0 %v377
    %419 = vmatprep.subr.mxu0 0.0
    %420 = vmatpush1.msra.mxu0 %v376
    %421 = vmatprep.subr.mxu0 0.0
    %422 = vmatpush2.msra.mxu0 0.0
    %423 = vmatprep.subr.mxu0 0.0
    %424 = vmatpush2.msra.mxu0 0.0
    %425 = vmatprep.subr.mxu0 0.0
    %426 = vmatpush2.msra.mxu0 0.0
    %427 = vmatprep.subr.mxu0 0.0
    %428 = vmatpush2.msra.mxu0 0.0
    %429 = vmatprep.subr.mxu0 0.0
    %430 = vmatpush2.msra.mxu0 0.0
    %431 = vmatprep.subr.mxu0 0.0
    %432 = vmatpush2.msra.mxu0 0.0
    %433 = vmatprep.subr.mxu0 0.0
    %434 = vmatpush2.msra.mxu0 0.0
    %435 = vmatprep.subr.mxu0 0.0
    %436 = vmatpush2.msra.mxu0 0.0
    %437 = vmatprep.subr.mxu0 0.0
    %438 = vmatpush2.msra.mxu0 0.0
    %439 = vmatprep.subr.mxu0 0.0
    %440 = vmatpush2.msra.mxu0 0.0
    %441 = vmatprep.subr.mxu0 0.0
    %442 = vmatpush2.msra.mxu0 0.0
    %443 = vmatprep.subr.mxu0 0.0
    %444 = vmatpush2.msra.mxu0 0.0
    %445 = vmatprep.subr.mxu0 0.0
    %446 = vmatpush2.msra.mxu0 0.0
    %447 = vmatprep.subr.mxu0 0.0
    %448 = vmatpush2.msra.mxu0 0.0
    %449 = vmatprep.subr.mxu0 0.0
    %450 = vmatpush2.msra.mxu0 0.0
    %451 = vmatprep.subr.mxu0 0.0
    %452 = vmatpush2.msra.mxu0 0.0
    %453 = vmatprep.mubr.f32.mxu0 0.0
    %454 = vmatmul.mubr.f32.gmra.mxu0 %v40
    %v455 = vpop.f32.mrf.mxu0
    %v456 = vadd.f32 %v36, %v455
    %v457 = vpop.f32.mrf.mxu0
    %458 = vdwg.mxu0
    %v459 = vmax.f32 %v456, 0.0
    %v460 = vmax.f32 %v374, %v459
    %s461 = scalar_lea.vmem %s0, 800
    %v462 = vld [vmem:[%s461] sm:$0xff]
    %v463 = vld [vmem:[%s461 + $0x8] sm:$0xff]
    %v464 = vld [vmem:[%s461 + $0x10] sm:$0xff]
    %v465 = vld [vmem:[%s461 + $0x18] sm:$0xff]
    %v466 = vld [vmem:[%s461 + $0x20] sm:$0xff]
    %v467 = vld [vmem:[%s461 + $0x28] sm:$0xff]
    %v468 = vld [vmem:[%s461 + $0x30] sm:$0xff]
    %v469 = vld [vmem:[%s461 + $0x38] sm:$0xff]
    %v470 = vld [vmem:[%s461 + $0x40] sm:$0xff]
    %v471 = vld [vmem:[%s461 + $0x48] sm:$0x7]
    %v473 = vsel %vm42, %v471, 0
    %475 = vmatprep.subr.mxu0 0.0
    %476 = vmatpush1.msra.mxu0 0.0
    %477 = vmatprep.subr.mxu0 0.0
    %478 = vmatpush1.msra.mxu0 0.0
    %479 = vmatprep.subr.mxu0 0.0
    %480 = vmatpush1.msra.mxu0 0.0
    %481 = vmatprep.subr.mxu0 0.0
    %482 = vmatpush1.msra.mxu0 0.0
    %483 = vmatprep.subr.mxu0 0.0
    %484 = vmatpush1.msra.mxu0 0.0
    %485 = vmatprep.subr.mxu0 0.0
    %486 = vmatpush1.msra.mxu0 0.0
    %487 = vmatprep.subr.mxu0 0.0
    %488 = vmatpush1.msra.mxu0 %v473
    %489 = vmatprep.subr.mxu0 0.0
    %490 = vmatpush1.msra.mxu0 %v470
    %491 = vmatprep.subr.mxu0 0.0
    %492 = vmatpush1.msra.mxu0 %v469
    %493 = vmatprep.subr.mxu0 0.0
    %494 = vmatpush1.msra.mxu0 %v468
    %495 = vmatprep.subr.mxu0 0.0
    %496 = vmatpush1.msra.mxu0 %v467
    %497 = vmatprep.subr.mxu0 0.0
    %498 = vmatpush1.msra.mxu0 %v466
    %499 = vmatprep.subr.mxu0 0.0
    %500 = vmatpush1.msra.mxu0 %v465
    %501 = vmatprep.subr.mxu0 0.0
    %502 = vmatpush1.msra.mxu0 %v464
    %503 = vmatprep.subr.mxu0 0.0
    %504 = vmatpush1.msra.mxu0 %v463
    %505 = vmatprep.subr.mxu0 0.0
    %506 = vmatpush1.msra.mxu0 %v462
    %507 = vmatprep.subr.mxu0 0.0
    %508 = vmatpush2.msra.mxu0 0.0
    %509 = vmatprep.subr.mxu0 0.0
    %510 = vmatpush2.msra.mxu0 0.0
    %511 = vmatprep.subr.mxu0 0.0
    %512 = vmatpush2.msra.mxu0 0.0
    %513 = vmatprep.subr.mxu0 0.0
    %514 = vmatpush2.msra.mxu0 0.0
    %515 = vmatprep.subr.mxu0 0.0
    %516 = vmatpush2.msra.mxu0 0.0
    %517 = vmatprep.subr.mxu0 0.0
    %518 = vmatpush2.msra.mxu0 0.0
    %519 = vmatprep.subr.mxu0 0.0
    %520 = vmatpush2.msra.mxu0 0.0
    %521 = vmatprep.subr.mxu0 0.0
    %522 = vmatpush2.msra.mxu0 0.0
    %523 = vmatprep.subr.mxu0 0.0
    %524 = vmatpush2.msra.mxu0 0.0
    %525 = vmatprep.subr.mxu0 0.0
    %526 = vmatpush2.msra.mxu0 0.0
    %527 = vmatprep.subr.mxu0 0.0
    %528 = vmatpush2.msra.mxu0 0.0
    %529 = vmatprep.subr.mxu0 0.0
    %530 = vmatpush2.msra.mxu0 0.0
    %531 = vmatprep.subr.mxu0 0.0
    %532 = vmatpush2.msra.mxu0 0.0
    %533 = vmatprep.subr.mxu0 0.0
    %534 = vmatpush2.msra.mxu0 0.0
    %535 = vmatprep.subr.mxu0 0.0
    %536 = vmatpush2.msra.mxu0 0.0
    %537 = vmatprep.subr.mxu0 0.0
    %538 = vmatpush2.msra.mxu0 0.0
    %539 = vmatprep.mubr.f32.mxu0 0.0
    %540 = vmatmul.mubr.f32.gmra.mxu0 %v40
    %v541 = vpop.f32.mrf.mxu0
    %v542 = vadd.f32 %v36, %v541
    %v543 = vpop.f32.mrf.mxu0
    %544 = vdwg.mxu0
    %v545 = vmax.f32 %v542, 0.0
    %v546 = vmax.f32 %v460, %v545
    %s547 = scalar_lea.vmem %s0, 960
    %v548 = vld [vmem:[%s547] sm:$0xff]
    %v549 = vld [vmem:[%s547 + $0x8] sm:$0xff]
    %v550 = vld [vmem:[%s547 + $0x10] sm:$0xff]
    %v551 = vld [vmem:[%s547 + $0x18] sm:$0xff]
    %v552 = vld [vmem:[%s547 + $0x20] sm:$0xff]
    %v553 = vld [vmem:[%s547 + $0x28] sm:$0xff]
    %v554 = vld [vmem:[%s547 + $0x30] sm:$0xff]
    %v555 = vld [vmem:[%s547 + $0x38] sm:$0xff]
    %v556 = vld [vmem:[%s547 + $0x40] sm:$0xff]
    %v557 = vld [vmem:[%s547 + $0x48] sm:$0x7]
    %v559 = vsel %vm42, %v557, 0
    %561 = vmatprep.subr.mxu0 0.0
    %562 = vmatpush1.msra.mxu0 0.0
    %563 = vmatprep.subr.mxu0 0.0
    %564 = vmatpush1.msra.mxu0 0.0
    %565 = vmatprep.subr.mxu0 0.0
    %566 = vmatpush1.msra.mxu0 0.0
    %567 = vmatprep.subr.mxu0 0.0
    %568 = vmatpush1.msra.mxu0 0.0
    %569 = vmatprep.subr.mxu0 0.0
    %570 = vmatpush1.msra.mxu0 0.0
    %571 = vmatprep.subr.mxu0 0.0
    %572 = vmatpush1.msra.mxu0 0.0
    %573 = vmatprep.subr.mxu0 0.0
    %574 = vmatpush1.msra.mxu0 %v559
    %575 = vmatprep.subr.mxu0 0.0
    %576 = vmatpush1.msra.mxu0 %v556
    %577 = vmatprep.subr.mxu0 0.0
    %578 = vmatpush1.msra.mxu0 %v555
    %579 = vmatprep.subr.mxu0 0.0
    %580 = vmatpush1.msra.mxu0 %v554
    %581 = vmatprep.subr.mxu0 0.0
    %582 = vmatpush1.msra.mxu0 %v553
    %583 = vmatprep.subr.mxu0 0.0
    %584 = vmatpush1.msra.mxu0 %v552
    %585 = vmatprep.subr.mxu0 0.0
    %586 = vmatpush1.msra.mxu0 %v551
    %587 = vmatprep.subr.mxu0 0.0
    %588 = vmatpush1.msra.mxu0 %v550
    %589 = vmatprep.subr.mxu0 0.0
    %590 = vmatpush1.msra.mxu0 %v549
    %591 = vmatprep.subr.mxu0 0.0
    %592 = vmatpush1.msra.mxu0 %v548
    %593 = vmatprep.subr.mxu0 0.0
    %594 = vmatpush2.msra.mxu0 0.0
    %595 = vmatprep.subr.mxu0 0.0
    %596 = vmatpush2.msra.mxu0 0.0
    %597 = vmatprep.subr.mxu0 0.0
    %598 = vmatpush2.msra.mxu0 0.0
    %599 = vmatprep.subr.mxu0 0.0
    %600 = vmatpush2.msra.mxu0 0.0
    %601 = vmatprep.subr.mxu0 0.0
    %602 = vmatpush2.msra.mxu0 0.0
    %603 = vmatprep.subr.mxu0 0.0
    %604 = vmatpush2.msra.mxu0 0.0
    %605 = vmatprep.subr.mxu0 0.0
    %606 = vmatpush2.msra.mxu0 0.0
    %607 = vmatprep.subr.mxu0 0.0
    %608 = vmatpush2.msra.mxu0 0.0
    %609 = vmatprep.subr.mxu0 0.0
    %610 = vmatpush2.msra.mxu0 0.0
    %611 = vmatprep.subr.mxu0 0.0
    %612 = vmatpush2.msra.mxu0 0.0
    %613 = vmatprep.subr.mxu0 0.0
    %614 = vmatpush2.msra.mxu0 0.0
    %615 = vmatprep.subr.mxu0 0.0
    %616 = vmatpush2.msra.mxu0 0.0
    %617 = vmatprep.subr.mxu0 0.0
    %618 = vmatpush2.msra.mxu0 0.0
    %619 = vmatprep.subr.mxu0 0.0
    %620 = vmatpush2.msra.mxu0 0.0
    %621 = vmatprep.subr.mxu0 0.0
    %622 = vmatpush2.msra.mxu0 0.0
    %623 = vmatprep.subr.mxu0 0.0
    %624 = vmatpush2.msra.mxu0 0.0
    %625 = vmatprep.mubr.f32.mxu0 0.0
    %626 = vmatmul.mubr.f32.gmra.mxu0 %v40
    %v627 = vpop.f32.mrf.mxu0
    %v628 = vadd.f32 %v36, %v627
    %v629 = vpop.f32.mrf.mxu0
    %630 = vdwg.mxu0
    %v631 = vmax.f32 %v628, 0.0
    %v632 = vmax.f32 %v546, %v631
    %s633 = scalar_lea.vmem %s0, 1120
    %v634 = vld [vmem:[%s633] sm:$0xff]
    %v635 = vld [vmem:[%s633 + $0x8] sm:$0xff]
    %v636 = vld [vmem:[%s633 + $0x10] sm:$0xff]
    %v637 = vld [vmem:[%s633 + $0x18] sm:$0xff]
    %v638 = vld [vmem:[%s633 + $0x20] sm:$0xff]
    %v639 = vld [vmem:[%s633 + $0x28] sm:$0xff]
    %v640 = vld [vmem:[%s633 + $0x30] sm:$0xff]
    %v641 = vld [vmem:[%s633 + $0x38] sm:$0xff]
    %v642 = vld [vmem:[%s633 + $0x40] sm:$0xff]
    %v643 = vld [vmem:[%s633 + $0x48] sm:$0x7]
    %v645 = vsel %vm42, %v643, 0
    %647 = vmatprep.subr.mxu0 0.0
    %648 = vmatpush1.msra.mxu0 0.0
    %649 = vmatprep.subr.mxu0 0.0
    %650 = vmatpush1.msra.mxu0 0.0
    %651 = vmatprep.subr.mxu0 0.0
    %652 = vmatpush1.msra.mxu0 0.0
    %653 = vmatprep.subr.mxu0 0.0
    %654 = vmatpush1.msra.mxu0 0.0
    %655 = vmatprep.subr.mxu0 0.0
    %656 = vmatpush1.msra.mxu0 0.0
    %657 = vmatprep.subr.mxu0 0.0
    %658 = vmatpush1.msra.mxu0 0.0
    %659 = vmatprep.subr.mxu0 0.0
    %660 = vmatpush1.msra.mxu0 %v645
    %661 = vmatprep.subr.mxu0 0.0
    %662 = vmatpush1.msra.mxu0 %v642
    %663 = vmatprep.subr.mxu0 0.0
    %664 = vmatpush1.msra.mxu0 %v641
    %665 = vmatprep.subr.mxu0 0.0
    %666 = vmatpush1.msra.mxu0 %v640
    %667 = vmatprep.subr.mxu0 0.0
    %668 = vmatpush1.msra.mxu0 %v639
    %669 = vmatprep.subr.mxu0 0.0
    %670 = vmatpush1.msra.mxu0 %v638
    %671 = vmatprep.subr.mxu0 0.0
    %672 = vmatpush1.msra.mxu0 %v637
    %673 = vmatprep.subr.mxu0 0.0
    %674 = vmatpush1.msra.mxu0 %v636
    %675 = vmatprep.subr.mxu0 0.0
    %676 = vmatpush1.msra.mxu0 %v635
    %677 = vmatprep.subr.mxu0 0.0
    %678 = vmatpush1.msra.mxu0 %v634
    %679 = vmatprep.subr.mxu0 0.0
    %680 = vmatpush2.msra.mxu0 0.0
    %681 = vmatprep.subr.mxu0 0.0
    %682 = vmatpush2.msra.mxu0 0.0
    %683 = vmatprep.subr.mxu0 0.0
    %684 = vmatpush2.msra.mxu0 0.0
    %685 = vmatprep.subr.mxu0 0.0
    %686 = vmatpush2.msra.mxu0 0.0
    %687 = vmatprep.subr.mxu0 0.0
    %688 = vmatpush2.msra.mxu0 0.0
    %689 = vmatprep.subr.mxu0 0.0
    %690 = vmatpush2.msra.mxu0 0.0
    %691 = vmatprep.subr.mxu0 0.0
    %692 = vmatpush2.msra.mxu0 0.0
    %693 = vmatprep.subr.mxu0 0.0
    %694 = vmatpush2.msra.mxu0 0.0
    %695 = vmatprep.subr.mxu0 0.0
    %696 = vmatpush2.msra.mxu0 0.0
    %697 = vmatprep.subr.mxu0 0.0
    %698 = vmatpush2.msra.mxu0 0.0
    %699 = vmatprep.subr.mxu0 0.0
    %700 = vmatpush2.msra.mxu0 0.0
    %701 = vmatprep.subr.mxu0 0.0
    %702 = vmatpush2.msra.mxu0 0.0
    %703 = vmatprep.subr.mxu0 0.0
    %704 = vmatpush2.msra.mxu0 0.0
    %705 = vmatprep.subr.mxu0 0.0
    %706 = vmatpush2.msra.mxu0 0.0
    %707 = vmatprep.subr.mxu0 0.0
    %708 = vmatpush2.msra.mxu0 0.0
    %709 = vmatprep.subr.mxu0 0.0
    %710 = vmatpush2.msra.mxu0 0.0
    %711 = vmatprep.mubr.f32.mxu0 0.0
    %712 = vmatmul.mubr.f32.gmra.mxu0 %v40
    %v713 = vpop.f32.mrf.mxu0
    %v714 = vadd.f32 %v36, %v713
    %v715 = vpop.f32.mrf.mxu0
    %716 = vdwg.mxu0
    %v717 = vmax.f32 %v714, 0.0
    %v718 = vmax.f32 %v632, %v717
    %s719 = scalar_lea.vmem %s0, 1280
    %v720 = vld [vmem:[%s719] sm:$0xff]
    %v721 = vld [vmem:[%s719 + $0x8] sm:$0xff]
    %v722 = vld [vmem:[%s719 + $0x10] sm:$0xff]
    %v723 = vld [vmem:[%s719 + $0x18] sm:$0xff]
    %v724 = vld [vmem:[%s719 + $0x20] sm:$0xff]
    %v725 = vld [vmem:[%s719 + $0x28] sm:$0xff]
    %v726 = vld [vmem:[%s719 + $0x30] sm:$0xff]
    %v727 = vld [vmem:[%s719 + $0x38] sm:$0xff]
    %v728 = vld [vmem:[%s719 + $0x40] sm:$0xff]
    %v729 = vld [vmem:[%s719 + $0x48] sm:$0x7]
    %v731 = vsel %vm42, %v729, 0
    %733 = vmatprep.subr.mxu0 0.0
    %734 = vmatpush1.msra.mxu0 0.0
    %735 = vmatprep.subr.mxu0 0.0
    %736 = vmatpush1.msra.mxu0 0.0
    %737 = vmatprep.subr.mxu0 0.0
    %738 = vmatpush1.msra.mxu0 0.0
    %739 = vmatprep.subr.mxu0 0.0
    %740 = vmatpush1.msra.mxu0 0.0
    %741 = vmatprep.subr.mxu0 0.0
    %742 = vmatpush1.msra.mxu0 0.0
    %743 = vmatprep.subr.mxu0 0.0
    %744 = vmatpush1.msra.mxu0 0.0
    %745 = vmatprep.subr.mxu0 0.0
    %746 = vmatpush1.msra.mxu0 %v731
    %747 = vmatprep.subr.mxu0 0.0
    %748 = vmatpush1.msra.mxu0 %v728
    %749 = vmatprep.subr.mxu0 0.0
    %750 = vmatpush1.msra.mxu0 %v727
    %751 = vmatprep.subr.mxu0 0.0
    %752 = vmatpush1.msra.mxu0 %v726
    %753 = vmatprep.subr.mxu0 0.0
    %754 = vmatpush1.msra.mxu0 %v725
    %755 = vmatprep.subr.mxu0 0.0
    %756 = vmatpush1.msra.mxu0 %v724
    %757 = vmatprep.subr.mxu0 0.0
    %758 = vmatpush1.msra.mxu0 %v723
    %759 = vmatprep.subr.mxu0 0.0
    %760 = vmatpush1.msra.mxu0 %v722
    %761 = vmatprep.subr.mxu0 0.0
    %762 = vmatpush1.msra.mxu0 %v721
    %763 = vmatprep.subr.mxu0 0.0
    %764 = vmatpush1.msra.mxu0 %v720
    %765 = vmatprep.subr.mxu0 0.0
    %766 = vmatpush2.msra.mxu0 0.0
    %767 = vmatprep.subr.mxu0 0.0
    %768 = vmatpush2.msra.mxu0 0.0
    %769 = vmatprep.subr.mxu0 0.0
    %770 = vmatpush2.msra.mxu0 0.0
    %771 = vmatprep.subr.mxu0 0.0
    %772 = vmatpush2.msra.mxu0 0.0
    %773 = vmatprep.subr.mxu0 0.0
    %774 = vmatpush2.msra.mxu0 0.0
    %775 = vmatprep.subr.mxu0 0.0
    %776 = vmatpush2.msra.mxu0 0.0
    %777 = vmatprep.subr.mxu0 0.0
    %778 = vmatpush2.msra.mxu0 0.0
    %779 = vmatprep.subr.mxu0 0.0
    %780 = vmatpush2.msra.mxu0 0.0
    %781 = vmatprep.subr.mxu0 0.0
    %782 = vmatpush2.msra.mxu0 0.0
    %783 = vmatprep.subr.mxu0 0.0
    %784 = vmatpush2.msra.mxu0 0.0
    %785 = vmatprep.subr.mxu0 0.0
    %786 = vmatpush2.msra.mxu0 0.0
    %787 = vmatprep.subr.mxu0 0.0
    %788 = vmatpush2.msra.mxu0 0.0
    %789 = vmatprep.subr.mxu0 0.0
    %790 = vmatpush2.msra.mxu0 0.0
    %791 = vmatprep.subr.mxu0 0.0
    %792 = vmatpush2.msra.mxu0 0.0
    %793 = vmatprep.subr.mxu0 0.0
    %794 = vmatpush2.msra.mxu0 0.0
    %795 = vmatprep.subr.mxu0 0.0
    %796 = vmatpush2.msra.mxu0 0.0
    %797 = vmatprep.mubr.f32.mxu0 0.0
    %798 = vmatmul.mubr.f32.gmra.mxu0 %v40
    %v799 = vpop.f32.mrf.mxu0
    %v800 = vadd.f32 %v36, %v799
    %v801 = vpop.f32.mrf.mxu0
    %802 = vdwg.mxu0
    %v803 = vmax.f32 %v800, 0.0
    %v804 = vmax.f32 %v718, %v803
    %s805 = scalar_lea.vmem %s0, 1440
    %v806 = vld [vmem:[%s805] sm:$0xff]
    %v807 = vld [vmem:[%s805 + $0x8] sm:$0xff]
    %v808 = vld [vmem:[%s805 + $0x10] sm:$0xff]
    %v809 = vld [vmem:[%s805 + $0x18] sm:$0xff]
    %v810 = vld [vmem:[%s805 + $0x20] sm:$0xff]
    %v811 = vld [vmem:[%s805 + $0x28] sm:$0xff]
    %v812 = vld [vmem:[%s805 + $0x30] sm:$0xff]
    %v813 = vld [vmem:[%s805 + $0x38] sm:$0xff]
    %v814 = vld [vmem:[%s805 + $0x40] sm:$0xff]
    %v815 = vld [vmem:[%s805 + $0x48] sm:$0x7]
    %v817 = vsel %vm42, %v815, 0
    %819 = vmatprep.subr.mxu0 0.0
    %820 = vmatpush1.msra.mxu0 0.0
    %821 = vmatprep.subr.mxu0 0.0
    %822 = vmatpush1.msra.mxu0 0.0
    %823 = vmatprep.subr.mxu0 0.0
    %824 = vmatpush1.msra.mxu0 0.0
    %825 = vmatprep.subr.mxu0 0.0
    %826 = vmatpush1.msra.mxu0 0.0
    %827 = vmatprep.subr.mxu0 0.0
    %828 = vmatpush1.msra.mxu0 0.0
    %829 = vmatprep.subr.mxu0 0.0
    %830 = vmatpush1.msra.mxu0 0.0
    %831 = vmatprep.subr.mxu0 0.0
    %832 = vmatpush1.msra.mxu0 %v817
    %833 = vmatprep.subr.mxu0 0.0
    %834 = vmatpush1.msra.mxu0 %v814
    %835 = vmatprep.subr.mxu0 0.0
    %836 = vmatpush1.msra.mxu0 %v813
    %837 = vmatprep.subr.mxu0 0.0
    %838 = vmatpush1.msra.mxu0 %v812
    %839 = vmatprep.subr.mxu0 0.0
    %840 = vmatpush1.msra.mxu0 %v811
    %841 = vmatprep.subr.mxu0 0.0
    %842 = vmatpush1.msra.mxu0 %v810
    %843 = vmatprep.subr.mxu0 0.0
    %844 = vmatpush1.msra.mxu0 %v809
    %845 = vmatprep.subr.mxu0 0.0
    %846 = vmatpush1.msra.mxu0 %v808
    %847 = vmatprep.subr.mxu0 0.0
    %848 = vmatpush1.msra.mxu0 %v807
    %849 = vmatprep.subr.mxu0 0.0
    %850 = vmatpush1.msra.mxu0 %v806
    %851 = vmatprep.subr.mxu0 0.0
    %852 = vmatpush2.msra.mxu0 0.0
    %853 = vmatprep.subr.mxu0 0.0
    %854 = vmatpush2.msra.mxu0 0.0
    %855 = vmatprep.subr.mxu0 0.0
    %856 = vmatpush2.msra.mxu0 0.0
    %857 = vmatprep.subr.mxu0 0.0
    %858 = vmatpush2.msra.mxu0 0.0
    %859 = vmatprep.subr.mxu0 0.0
    %860 = vmatpush2.msra.mxu0 0.0
    %861 = vmatprep.subr.mxu0 0.0
    %862 = vmatpush2.msra.mxu0 0.0
    %863 = vmatprep.subr.mxu0 0.0
    %864 = vmatpush2.msra.mxu0 0.0
    %865 = vmatprep.subr.mxu0 0.0
    %866 = vmatpush2.msra.mxu0 0.0
    %867 = vmatprep.subr.mxu0 0.0
    %868 = vmatpush2.msra.mxu0 0.0
    %869 = vmatprep.subr.mxu0 0.0
    %870 = vmatpush2.msra.mxu0 0.0
    %871 = vmatprep.subr.mxu0 0.0
    %872 = vmatpush2.msra.mxu0 0.0
    %873 = vmatprep.subr.mxu0 0.0
    %874 = vmatpush2.msra.mxu0 0.0
    %875 = vmatprep.subr.mxu0 0.0
    %876 = vmatpush2.msra.mxu0 0.0
    %877 = vmatprep.subr.mxu0 0.0
    %878 = vmatpush2.msra.mxu0 0.0
    %879 = vmatprep.subr.mxu0 0.0
    %880 = vmatpush2.msra.mxu0 0.0
    %881 = vmatprep.subr.mxu0 0.0
    %882 = vmatpush2.msra.mxu0 0.0
    %883 = vmatprep.mubr.f32.mxu0 0.0
    %884 = vmatmul.mubr.f32.gmra.mxu0 %v40
    %v885 = vpop.f32.mrf.mxu0
    %v886 = vadd.f32 %v36, %v885
    %v887 = vpop.f32.mrf.mxu0
    %888 = vdwg.mxu0
    %v889 = vmax.f32 %v886, 0.0
    %v890 = vmax.f32 %v804, %v889
    %s891 = scalar_lea.vmem %s0, 1600
    %v892 = vld [vmem:[%s891] sm:$0xff]
    %v893 = vld [vmem:[%s891 + $0x8] sm:$0xff]
    %v894 = vld [vmem:[%s891 + $0x10] sm:$0xff]
    %v895 = vld [vmem:[%s891 + $0x18] sm:$0xff]
    %v896 = vld [vmem:[%s891 + $0x20] sm:$0xff]
    %v897 = vld [vmem:[%s891 + $0x28] sm:$0xff]
    %v898 = vld [vmem:[%s891 + $0x30] sm:$0xff]
    %v899 = vld [vmem:[%s891 + $0x38] sm:$0xff]
    %v900 = vld [vmem:[%s891 + $0x40] sm:$0xff]
    %v901 = vld [vmem:[%s891 + $0x48] sm:$0x7]
    %v903 = vsel %vm42, %v901, 0
    %905 = vmatprep.subr.mxu0 0.0
    %906 = vmatpush1.msra.mxu0 0.0
    %907 = vmatprep.subr.mxu0 0.0
    %908 = vmatpush1.msra.mxu0 0.0
    %909 = vmatprep.subr.mxu0 0.0
    %910 = vmatpush1.msra.mxu0 0.0
    %911 = vmatprep.subr.mxu0 0.0
    %912 = vmatpush1.msra.mxu0 0.0
    %913 = vmatprep.subr.mxu0 0.0
    %914 = vmatpush1.msra.mxu0 0.0
    %915 = vmatprep.subr.mxu0 0.0
    %916 = vmatpush1.msra.mxu0 0.0
    %917 = vmatprep.subr.mxu0 0.0
    %918 = vmatpush1.msra.mxu0 %v903
    %919 = vmatprep.subr.mxu0 0.0
    %920 = vmatpush1.msra.mxu0 %v900
    %921 = vmatprep.subr.mxu0 0.0
    %922 = vmatpush1.msra.mxu0 %v899
    %923 = vmatprep.subr.mxu0 0.0
    %924 = vmatpush1.msra.mxu0 %v898
    %925 = vmatprep.subr.mxu0 0.0
    %926 = vmatpush1.msra.mxu0 %v897
    %927 = vmatprep.subr.mxu0 0.0
    %928 = vmatpush1.msra.mxu0 %v896
    %929 = vmatprep.subr.mxu0 0.0
    %930 = vmatpush1.msra.mxu0 %v895
    %931 = vmatprep.subr.mxu0 0.0
    %932 = vmatpush1.msra.mxu0 %v894
    %933 = vmatprep.subr.mxu0 0.0
    %934 = vmatpush1.msra.mxu0 %v893
    %935 = vmatprep.subr.mxu0 0.0
    %936 = vmatpush1.msra.mxu0 %v892
    %937 = vmatprep.subr.mxu0 0.0
    %938 = vmatpush2.msra.mxu0 0.0
    %939 = vmatprep.subr.mxu0 0.0
    %940 = vmatpush2.msra.mxu0 0.0
    %941 = vmatprep.subr.mxu0 0.0
    %942 = vmatpush2.msra.mxu0 0.0
    %943 = vmatprep.subr.mxu0 0.0
    %944 = vmatpush2.msra.mxu0 0.0
    %945 = vmatprep.subr.mxu0 0.0
    %946 = vmatpush2.msra.mxu0 0.0
    %947 = vmatprep.subr.mxu0 0.0
    %948 = vmatpush2.msra.mxu0 0.0
    %949 = vmatprep.subr.mxu0 0.0
    %950 = vmatpush2.msra.mxu0 0.0
    %951 = vmatprep.subr.mxu0 0.0
    %952 = vmatpush2.msra.mxu0 0.0
    %953 = vmatprep.subr.mxu0 0.0
    %954 = vmatpush2.msra.mxu0 0.0
    %955 = vmatprep.subr.mxu0 0.0
    %956 = vmatpush2.msra.mxu0 0.0
    %957 = vmatprep.subr.mxu0 0.0
    %958 = vmatpush2.msra.mxu0 0.0
    %959 = vmatprep.subr.mxu0 0.0
    %960 = vmatpush2.msra.mxu0 0.0
    %961 = vmatprep.subr.mxu0 0.0
    %962 = vmatpush2.msra.mxu0 0.0
    %963 = vmatprep.subr.mxu0 0.0
    %964 = vmatpush2.msra.mxu0 0.0
    %965 = vmatprep.subr.mxu0 0.0
    %966 = vmatpush2.msra.mxu0 0.0
    %967 = vmatprep.subr.mxu0 0.0
    %968 = vmatpush2.msra.mxu0 0.0
    %969 = vmatprep.mubr.f32.mxu0 0.0
    %970 = vmatmul.mubr.f32.gmra.mxu0 %v40
    %v971 = vpop.f32.mrf.mxu0
    %v972 = vadd.f32 %v36, %v971
    %v973 = vpop.f32.mrf.mxu0
    %974 = vdwg.mxu0
    %v975 = vmax.f32 %v972, 0.0
    %v976 = vmax.f32 %v890, %v975
    %s977 = scalar_lea.vmem %s0, 1760
    %v978 = vld [vmem:[%s977] sm:$0xff]
    %v979 = vld [vmem:[%s977 + $0x8] sm:$0xff]
    %v980 = vld [vmem:[%s977 + $0x10] sm:$0xff]
    %v981 = vld [vmem:[%s977 + $0x18] sm:$0xff]
    %v982 = vld [vmem:[%s977 + $0x20] sm:$0xff]
    %v983 = vld [vmem:[%s977 + $0x28] sm:$0xff]
    %v984 = vld [vmem:[%s977 + $0x30] sm:$0xff]
    %v985 = vld [vmem:[%s977 + $0x38] sm:$0xff]
    %v986 = vld [vmem:[%s977 + $0x40] sm:$0xff]
    %v987 = vld [vmem:[%s977 + $0x48] sm:$0x7]
    %v989 = vsel %vm42, %v987, 0
    %991 = vmatprep.subr.mxu0 0.0
    %992 = vmatpush1.msra.mxu0 0.0
    %993 = vmatprep.subr.mxu0 0.0
    %994 = vmatpush1.msra.mxu0 0.0
    %995 = vmatprep.subr.mxu0 0.0
    %996 = vmatpush1.msra.mxu0 0.0
    %997 = vmatprep.subr.mxu0 0.0
    %998 = vmatpush1.msra.mxu0 0.0
    %999 = vmatprep.subr.mxu0 0.0
    %1000 = vmatpush1.msra.mxu0 0.0
    %1001 = vmatprep.subr.mxu0 0.0
    %1002 = vmatpush1.msra.mxu0 0.0
    %1003 = vmatprep.subr.mxu0 0.0
    %1004 = vmatpush1.msra.mxu0 %v989
    %1005 = vmatprep.subr.mxu0 0.0
    %1006 = vmatpush1.msra.mxu0 %v986
    %1007 = vmatprep.subr.mxu0 0.0
    %1008 = vmatpush1.msra.mxu0 %v985
    %1009 = vmatprep.subr.mxu0 0.0
    %1010 = vmatpush1.msra.mxu0 %v984
    %1011 = vmatprep.subr.mxu0 0.0
    %1012 = vmatpush1.msra.mxu0 %v983
    %1013 = vmatprep.subr.mxu0 0.0
    %1014 = vmatpush1.msra.mxu0 %v982
    %1015 = vmatprep.subr.mxu0 0.0
    %1016 = vmatpush1.msra.mxu0 %v981
    %1017 = vmatprep.subr.mxu0 0.0
    %1018 = vmatpush1.msra.mxu0 %v980
    %1019 = vmatprep.subr.mxu0 0.0
    %1020 = vmatpush1.msra.mxu0 %v979
    %1021 = vmatprep.subr.mxu0 0.0
    %1022 = vmatpush1.msra.mxu0 %v978
    %1023 = vmatprep.subr.mxu0 0.0
    %1024 = vmatpush2.msra.mxu0 0.0
    %1025 = vmatprep.subr.mxu0 0.0
    %1026 = vmatpush2.msra.mxu0 0.0
    %1027 = vmatprep.subr.mxu0 0.0
    %1028 = vmatpush2.msra.mxu0 0.0
    %1029 = vmatprep.subr.mxu0 0.0
    %1030 = vmatpush2.msra.mxu0 0.0
    %1031 = vmatprep.subr.mxu0 0.0
    %1032 = vmatpush2.msra.mxu0 0.0
    %1033 = vmatprep.subr.mxu0 0.0
    %1034 = vmatpush2.msra.mxu0 0.0
    %1035 = vmatprep.subr.mxu0 0.0
    %1036 = vmatpush2.msra.mxu0 0.0
    %1037 = vmatprep.subr.mxu0 0.0
    %1038 = vmatpush2.msra.mxu0 0.0
    %1039 = vmatprep.subr.mxu0 0.0
    %1040 = vmatpush2.msra.mxu0 0.0
    %1041 = vmatprep.subr.mxu0 0.0
    %1042 = vmatpush2.msra.mxu0 0.0
    %1043 = vmatprep.subr.mxu0 0.0
    %1044 = vmatpush2.msra.mxu0 0.0
    %1045 = vmatprep.subr.mxu0 0.0
    %1046 = vmatpush2.msra.mxu0 0.0
    %1047 = vmatprep.subr.mxu0 0.0
    %1048 = vmatpush2.msra.mxu0 0.0
    %1049 = vmatprep.subr.mxu0 0.0
    %1050 = vmatpush2.msra.mxu0 0.0
    %1051 = vmatprep.subr.mxu0 0.0
    %1052 = vmatpush2.msra.mxu0 0.0
    %1053 = vmatprep.subr.mxu0 0.0
    %1054 = vmatpush2.msra.mxu0 0.0
    %1055 = vmatprep.mubr.f32.mxu0 0.0
    %1056 = vmatmul.mubr.f32.gmra.mxu0 %v40
    %v1057 = vpop.f32.mrf.mxu0
    %v1058 = vadd.f32 %v36, %v1057
    %v1059 = vpop.f32.mrf.mxu0
    %1060 = vdwg.mxu0
    %v1061 = vmax.f32 %v1058, 0.0
    %v1062 = vmax.f32 %v976, %v1061
    %s1063 = scalar_lea.vmem %s0, 1920
    %v1064 = vld [vmem:[%s1063] sm:$0xff]
    %v1065 = vld [vmem:[%s1063 + $0x8] sm:$0xff]
    %v1066 = vld [vmem:[%s1063 + $0x10] sm:$0xff]
    %v1067 = vld [vmem:[%s1063 + $0x18] sm:$0xff]
    %v1068 = vld [vmem:[%s1063 + $0x20] sm:$0xff]
    %v1069 = vld [vmem:[%s1063 + $0x28] sm:$0xff]
    %v1070 = vld [vmem:[%s1063 + $0x30] sm:$0xff]
    %v1071 = vld [vmem:[%s1063 + $0x38] sm:$0xff]
    %v1072 = vld [vmem:[%s1063 + $0x40] sm:$0xff]
    %v1073 = vld [vmem:[%s1063 + $0x48] sm:$0x7]
    %v1075 = vsel %vm42, %v1073, 0
    %1077 = vmatprep.subr.mxu0 0.0
    %1078 = vmatpush1.msra.mxu0 0.0
    %1079 = vmatprep.subr.mxu0 0.0
    %1080 = vmatpush1.msra.mxu0 0.0
    %1081 = vmatprep.subr.mxu0 0.0
    %1082 = vmatpush1.msra.mxu0 0.0
    %1083 = vmatprep.subr.mxu0 0.0
    %1084 = vmatpush1.msra.mxu0 0.0
    %1085 = vmatprep.subr.mxu0 0.0
    %1086 = vmatpush1.msra.mxu0 0.0
    %1087 = vmatprep.subr.mxu0 0.0
    %1088 = vmatpush1.msra.mxu0 0.0
    %1089 = vmatprep.subr.mxu0 0.0
    %1090 = vmatpush1.msra.mxu0 %v1075
    %1091 = vmatprep.subr.mxu0 0.0
    %1092 = vmatpush1.msra.mxu0 %v1072
    %1093 = vmatprep.subr.mxu0 0.0
    %1094 = vmatpush1.msra.mxu0 %v1071
    %1095 = vmatprep.subr.mxu0 0.0
    %1096 = vmatpush1.msra.mxu0 %v1070
    %1097 = vmatprep.subr.mxu0 0.0
    %1098 = vmatpush1.msra.mxu0 %v1069
    %1099 = vmatprep.subr.mxu0 0.0
    %1100 = vmatpush1.msra.mxu0 %v1068
    %1101 = vmatprep.subr.mxu0 0.0
    %1102 = vmatpush1.msra.mxu0 %v1067
    %1103 = vmatprep.subr.mxu0 0.0
    %1104 = vmatpush1.msra.mxu0 %v1066
    %1105 = vmatprep.subr.mxu0 0.0
    %1106 = vmatpush1.msra.mxu0 %v1065
    %1107 = vmatprep.subr.mxu0 0.0
    %1108 = vmatpush1.msra.mxu0 %v1064
    %1109 = vmatprep.subr.mxu0 0.0
    %1110 = vmatpush2.msra.mxu0 0.0
    %1111 = vmatprep.subr.mxu0 0.0
    %1112 = vmatpush2.msra.mxu0 0.0
    %1113 = vmatprep.subr.mxu0 0.0
    %1114 = vmatpush2.msra.mxu0 0.0
    %1115 = vmatprep.subr.mxu0 0.0
    %1116 = vmatpush2.msra.mxu0 0.0
    %1117 = vmatprep.subr.mxu0 0.0
    %1118 = vmatpush2.msra.mxu0 0.0
    %1119 = vmatprep.subr.mxu0 0.0
    %1120 = vmatpush2.msra.mxu0 0.0
    %1121 = vmatprep.subr.mxu0 0.0
    %1122 = vmatpush2.msra.mxu0 0.0
    %1123 = vmatprep.subr.mxu0 0.0
    %1124 = vmatpush2.msra.mxu0 0.0
    %1125 = vmatprep.subr.mxu0 0.0
    %1126 = vmatpush2.msra.mxu0 0.0
    %1127 = vmatprep.subr.mxu0 0.0
    %1128 = vmatpush2.msra.mxu0 0.0
    %1129 = vmatprep.subr.mxu0 0.0
    %1130 = vmatpush2.msra.mxu0 0.0
    %1131 = vmatprep.subr.mxu0 0.0
    %1132 = vmatpush2.msra.mxu0 0.0
    %1133 = vmatprep.subr.mxu0 0.0
    %1134 = vmatpush2.msra.mxu0 0.0
    %1135 = vmatprep.subr.mxu0 0.0
    %1136 = vmatpush2.msra.mxu0 0.0
    %1137 = vmatprep.subr.mxu0 0.0
    %1138 = vmatpush2.msra.mxu0 0.0
    %1139 = vmatprep.subr.mxu0 0.0
    %1140 = vmatpush2.msra.mxu0 0.0
    %1141 = vmatprep.mubr.f32.mxu0 0.0
    %1142 = vmatmul.mubr.f32.gmra.mxu0 %v40
    %v1143 = vpop.f32.mrf.mxu0
    %v1144 = vadd.f32 %v36, %v1143
    %v1145 = vpop.f32.mrf.mxu0
    %1146 = vdwg.mxu0
    %v1147 = vmax.f32 %v1144, 0.0
    %v1148 = vmax.f32 %v1062, %v1147
    %s1149 = scalar_lea.vmem %s0, 2080
    %v1150 = vld [vmem:[%s1149] sm:$0xff]
    %v1151 = vld [vmem:[%s1149 + $0x8] sm:$0xff]
    %v1152 = vld [vmem:[%s1149 + $0x10] sm:$0xff]
    %v1153 = vld [vmem:[%s1149 + $0x18] sm:$0xff]
    %v1154 = vld [vmem:[%s1149 + $0x20] sm:$0xff]
    %v1155 = vld [vmem:[%s1149 + $0x28] sm:$0xff]
    %v1156 = vld [vmem:[%s1149 + $0x30] sm:$0xff]
    %v1157 = vld [vmem:[%s1149 + $0x38] sm:$0xff]
    %v1158 = vld [vmem:[%s1149 + $0x40] sm:$0xff]
    %v1159 = vld [vmem:[%s1149 + $0x48] sm:$0x7]
    %v1161 = vsel %vm42, %v1159, 0
    %1163 = vmatprep.subr.mxu0 0.0
    %1164 = vmatpush1.msra.mxu0 0.0
    %1165 = vmatprep.subr.mxu0 0.0
    %1166 = vmatpush1.msra.mxu0 0.0
    %1167 = vmatprep.subr.mxu0 0.0
    %1168 = vmatpush1.msra.mxu0 0.0
    %1169 = vmatprep.subr.mxu0 0.0
    %1170 = vmatpush1.msra.mxu0 0.0
    %1171 = vmatprep.subr.mxu0 0.0
    %1172 = vmatpush1.msra.mxu0 0.0
    %1173 = vmatprep.subr.mxu0 0.0
    %1174 = vmatpush1.msra.mxu0 0.0
    %1175 = vmatprep.subr.mxu0 0.0
    %1176 = vmatpush1.msra.mxu0 %v1161
    %1177 = vmatprep.subr.mxu0 0.0
    %1178 = vmatpush1.msra.mxu0 %v1158
    %1179 = vmatprep.subr.mxu0 0.0
    %1180 = vmatpush1.msra.mxu0 %v1157
    %1181 = vmatprep.subr.mxu0 0.0
    %1182 = vmatpush1.msra.mxu0 %v1156
    %1183 = vmatprep.subr.mxu0 0.0
    %1184 = vmatpush1.msra.mxu0 %v1155
    %1185 = vmatprep.subr.mxu0 0.0
    %1186 = vmatpush1.msra.mxu0 %v1154
    %1187 = vmatprep.subr.mxu0 0.0
    %1188 = vmatpush1.msra.mxu0 %v1153
    %1189 = vmatprep.subr.mxu0 0.0
    %1190 = vmatpush1.msra.mxu0 %v1152
    %1191 = vmatprep.subr.mxu0 0.0
    %1192 = vmatpush1.msra.mxu0 %v1151
    %1193 = vmatprep.subr.mxu0 0.0
    %1194 = vmatpush1.msra.mxu0 %v1150
    %1195 = vmatprep.subr.mxu0 0.0
    %1196 = vmatpush2.msra.mxu0 0.0
    %1197 = vmatprep.subr.mxu0 0.0
    %1198 = vmatpush2.msra.mxu0 0.0
    %1199 = vmatprep.subr.mxu0 0.0
    %1200 = vmatpush2.msra.mxu0 0.0
    %1201 = vmatprep.subr.mxu0 0.0
    %1202 = vmatpush2.msra.mxu0 0.0
    %1203 = vmatprep.subr.mxu0 0.0
    %1204 = vmatpush2.msra.mxu0 0.0
    %1205 = vmatprep.subr.mxu0 0.0
    %1206 = vmatpush2.msra.mxu0 0.0
    %1207 = vmatprep.subr.mxu0 0.0
    %1208 = vmatpush2.msra.mxu0 0.0
    %1209 = vmatprep.subr.mxu0 0.0
    %1210 = vmatpush2.msra.mxu0 0.0
    %1211 = vmatprep.subr.mxu0 0.0
    %1212 = vmatpush2.msra.mxu0 0.0
    %1213 = vmatprep.subr.mxu0 0.0
    %1214 = vmatpush2.msra.mxu0 0.0
    %1215 = vmatprep.subr.mxu0 0.0
    %1216 = vmatpush2.msra.mxu0 0.0
    %1217 = vmatprep.subr.mxu0 0.0
    %1218 = vmatpush2.msra.mxu0 0.0
    %1219 = vmatprep.subr.mxu0 0.0
    %1220 = vmatpush2.msra.mxu0 0.0
    %1221 = vmatprep.subr.mxu0 0.0
    %1222 = vmatpush2.msra.mxu0 0.0
    %1223 = vmatprep.subr.mxu0 0.0
    %1224 = vmatpush2.msra.mxu0 0.0
    %1225 = vmatprep.subr.mxu0 0.0
    %1226 = vmatpush2.msra.mxu0 0.0
    %1227 = vmatprep.mubr.f32.mxu0 0.0
    %1228 = vmatmul.mubr.f32.gmra.mxu0 %v40
    %v1229 = vpop.f32.mrf.mxu0
    %v1230 = vadd.f32 %v36, %v1229
    %v1231 = vpop.f32.mrf.mxu0
    %1232 = vdwg.mxu0
    %v1233 = vmax.f32 %v1230, 0.0
    %v1234 = vmax.f32 %v1148, %v1233
    %s1235 = scalar_lea.vmem %s0, 2240
    %v1236 = vld [vmem:[%s1235] sm:$0xff]
    %v1237 = vld [vmem:[%s1235 + $0x8] sm:$0xff]
    %v1238 = vld [vmem:[%s1235 + $0x10] sm:$0xff]
    %v1239 = vld [vmem:[%s1235 + $0x18] sm:$0xff]
    %v1240 = vld [vmem:[%s1235 + $0x20] sm:$0xff]
    %v1241 = vld [vmem:[%s1235 + $0x28] sm:$0xff]
    %v1242 = vld [vmem:[%s1235 + $0x30] sm:$0xff]
    %v1243 = vld [vmem:[%s1235 + $0x38] sm:$0xff]
    %v1244 = vld [vmem:[%s1235 + $0x40] sm:$0xff]
    %v1245 = vld [vmem:[%s1235 + $0x48] sm:$0x7]
    %v1247 = vsel %vm42, %v1245, 0
    %1249 = vmatprep.subr.mxu0 0.0
    %1250 = vmatpush1.msra.mxu0 0.0
    %1251 = vmatprep.subr.mxu0 0.0
    %1252 = vmatpush1.msra.mxu0 0.0
    %1253 = vmatprep.subr.mxu0 0.0
    %1254 = vmatpush1.msra.mxu0 0.0
    %1255 = vmatprep.subr.mxu0 0.0
    %1256 = vmatpush1.msra.mxu0 0.0
    %1257 = vmatprep.subr.mxu0 0.0
    %1258 = vmatpush1.msra.mxu0 0.0
    %1259 = vmatprep.subr.mxu0 0.0
    %1260 = vmatpush1.msra.mxu0 0.0
    %1261 = vmatprep.subr.mxu0 0.0
    %1262 = vmatpush1.msra.mxu0 %v1247
    %1263 = vmatprep.subr.mxu0 0.0
    %1264 = vmatpush1.msra.mxu0 %v1244
    %1265 = vmatprep.subr.mxu0 0.0
    %1266 = vmatpush1.msra.mxu0 %v1243
    %1267 = vmatprep.subr.mxu0 0.0
    %1268 = vmatpush1.msra.mxu0 %v1242
    %1269 = vmatprep.subr.mxu0 0.0
    %1270 = vmatpush1.msra.mxu0 %v1241
    %1271 = vmatprep.subr.mxu0 0.0
    %1272 = vmatpush1.msra.mxu0 %v1240
    %1273 = vmatprep.subr.mxu0 0.0
    %1274 = vmatpush1.msra.mxu0 %v1239
    %1275 = vmatprep.subr.mxu0 0.0
    %1276 = vmatpush1.msra.mxu0 %v1238
    %1277 = vmatprep.subr.mxu0 0.0
    %1278 = vmatpush1.msra.mxu0 %v1237
    %1279 = vmatprep.subr.mxu0 0.0
    %1280 = vmatpush1.msra.mxu0 %v1236
    %1281 = vmatprep.subr.mxu0 0.0
    %1282 = vmatpush2.msra.mxu0 0.0
    %1283 = vmatprep.subr.mxu0 0.0
    %1284 = vmatpush2.msra.mxu0 0.0
    %1285 = vmatprep.subr.mxu0 0.0
    %1286 = vmatpush2.msra.mxu0 0.0
    %1287 = vmatprep.subr.mxu0 0.0
    %1288 = vmatpush2.msra.mxu0 0.0
    %1289 = vmatprep.subr.mxu0 0.0
    %1290 = vmatpush2.msra.mxu0 0.0
    %1291 = vmatprep.subr.mxu0 0.0
    %1292 = vmatpush2.msra.mxu0 0.0
    %1293 = vmatprep.subr.mxu0 0.0
    %1294 = vmatpush2.msra.mxu0 0.0
    %1295 = vmatprep.subr.mxu0 0.0
    %1296 = vmatpush2.msra.mxu0 0.0
    %1297 = vmatprep.subr.mxu0 0.0
    %1298 = vmatpush2.msra.mxu0 0.0
    %1299 = vmatprep.subr.mxu0 0.0
    %1300 = vmatpush2.msra.mxu0 0.0
    %1301 = vmatprep.subr.mxu0 0.0
    %1302 = vmatpush2.msra.mxu0 0.0
    %1303 = vmatprep.subr.mxu0 0.0
    %1304 = vmatpush2.msra.mxu0 0.0
    %1305 = vmatprep.subr.mxu0 0.0
    %1306 = vmatpush2.msra.mxu0 0.0
    %1307 = vmatprep.subr.mxu0 0.0
    %1308 = vmatpush2.msra.mxu0 0.0
    %1309 = vmatprep.subr.mxu0 0.0
    %1310 = vmatpush2.msra.mxu0 0.0
    %1311 = vmatprep.subr.mxu0 0.0
    %1312 = vmatpush2.msra.mxu0 0.0
    %1313 = vmatprep.mubr.f32.mxu0 0.0
    %1314 = vmatmul.mubr.f32.gmra.mxu0 %v40
    %v1315 = vpop.f32.mrf.mxu0
    %v1316 = vadd.f32 %v36, %v1315
    %v1317 = vpop.f32.mrf.mxu0
    %1318 = vdwg.mxu0
    %v1319 = vmax.f32 %v1316, 0.0
    %v1320 = vmax.f32 %v1234, %v1319
    %s1321 = scalar_lea.vmem %s0, 2400
    %v1322 = vld [vmem:[%s1321] sm:$0xff]
    %v1323 = vld [vmem:[%s1321 + $0x8] sm:$0xff]
    %v1324 = vld [vmem:[%s1321 + $0x10] sm:$0xff]
    %v1325 = vld [vmem:[%s1321 + $0x18] sm:$0xff]
    %v1326 = vld [vmem:[%s1321 + $0x20] sm:$0xff]
    %v1327 = vld [vmem:[%s1321 + $0x28] sm:$0xff]
    %v1328 = vld [vmem:[%s1321 + $0x30] sm:$0xff]
    %v1329 = vld [vmem:[%s1321 + $0x38] sm:$0xff]
    %v1330 = vld [vmem:[%s1321 + $0x40] sm:$0xff]
    %v1331 = vld [vmem:[%s1321 + $0x48] sm:$0x7]
    %v1333 = vsel %vm42, %v1331, 0
    %1335 = vmatprep.subr.mxu0 0.0
    %1336 = vmatpush1.msra.mxu0 0.0
    %1337 = vmatprep.subr.mxu0 0.0
    %1338 = vmatpush1.msra.mxu0 0.0
    %1339 = vmatprep.subr.mxu0 0.0
    %1340 = vmatpush1.msra.mxu0 0.0
    %1341 = vmatprep.subr.mxu0 0.0
    %1342 = vmatpush1.msra.mxu0 0.0
    %1343 = vmatprep.subr.mxu0 0.0
    %1344 = vmatpush1.msra.mxu0 0.0
    %1345 = vmatprep.subr.mxu0 0.0
    %1346 = vmatpush1.msra.mxu0 0.0
    %1347 = vmatprep.subr.mxu0 0.0
    %1348 = vmatpush1.msra.mxu0 %v1333
    %1349 = vmatprep.subr.mxu0 0.0
    %1350 = vmatpush1.msra.mxu0 %v1330
    %1351 = vmatprep.subr.mxu0 0.0
    %1352 = vmatpush1.msra.mxu0 %v1329
    %1353 = vmatprep.subr.mxu0 0.0
    %1354 = vmatpush1.msra.mxu0 %v1328
    %1355 = vmatprep.subr.mxu0 0.0
    %1356 = vmatpush1.msra.mxu0 %v1327
    %1357 = vmatprep.subr.mxu0 0.0
    %1358 = vmatpush1.msra.mxu0 %v1326
    %1359 = vmatprep.subr.mxu0 0.0
    %1360 = vmatpush1.msra.mxu0 %v1325
    %1361 = vmatprep.subr.mxu0 0.0
    %1362 = vmatpush1.msra.mxu0 %v1324
    %1363 = vmatprep.subr.mxu0 0.0
    %1364 = vmatpush1.msra.mxu0 %v1323
    %1365 = vmatprep.subr.mxu0 0.0
    %1366 = vmatpush1.msra.mxu0 %v1322
    %1367 = vmatprep.subr.mxu0 0.0
    %1368 = vmatpush2.msra.mxu0 0.0
    %1369 = vmatprep.subr.mxu0 0.0
    %1370 = vmatpush2.msra.mxu0 0.0
    %1371 = vmatprep.subr.mxu0 0.0
    %1372 = vmatpush2.msra.mxu0 0.0
    %1373 = vmatprep.subr.mxu0 0.0
    %1374 = vmatpush2.msra.mxu0 0.0
    %1375 = vmatprep.subr.mxu0 0.0
    %1376 = vmatpush2.msra.mxu0 0.0
    %1377 = vmatprep.subr.mxu0 0.0
    %1378 = vmatpush2.msra.mxu0 0.0
    %1379 = vmatprep.subr.mxu0 0.0
    %1380 = vmatpush2.msra.mxu0 0.0
    %1381 = vmatprep.subr.mxu0 0.0
    %1382 = vmatpush2.msra.mxu0 0.0
    %1383 = vmatprep.subr.mxu0 0.0
    %1384 = vmatpush2.msra.mxu0 0.0
    %1385 = vmatprep.subr.mxu0 0.0
    %1386 = vmatpush2.msra.mxu0 0.0
    %1387 = vmatprep.subr.mxu0 0.0
    %1388 = vmatpush2.msra.mxu0 0.0
    %1389 = vmatprep.subr.mxu0 0.0
    %1390 = vmatpush2.msra.mxu0 0.0
    %1391 = vmatprep.subr.mxu0 0.0
    %1392 = vmatpush2.msra.mxu0 0.0
    %1393 = vmatprep.subr.mxu0 0.0
    %1394 = vmatpush2.msra.mxu0 0.0
    %1395 = vmatprep.subr.mxu0 0.0
    %1396 = vmatpush2.msra.mxu0 0.0
    %1397 = vmatprep.subr.mxu0 0.0
    %1398 = vmatpush2.msra.mxu0 0.0
    %1399 = vmatprep.mubr.f32.mxu0 0.0
    %1400 = vmatmul.mubr.f32.gmra.mxu0 %v40
    %v1401 = vpop.f32.mrf.mxu0
    %v1402 = vadd.f32 %v36, %v1401
    %v1403 = vpop.f32.mrf.mxu0
    %1404 = vdwg.mxu0
    %v1405 = vmax.f32 %v1402, 0.0
    %v1406 = vmax.f32 %v1320, %v1405
    %v1407 = vld [vmem:[%s3] sm:$0xff]
    %v1408 = vld [vmem:[%s3 + $0x8] sm:$0xff]
    %v1409 = vld [vmem:[%s3 + $0x10] sm:$0xff]
    %v1410 = vld [vmem:[%s3 + $0x18] sm:$0xff]
    %v1411 = vld [vmem:[%s3 + $0x20] sm:$0xff]
    %v1412 = vld [vmem:[%s3 + $0x28] sm:$0xff]
    %v1413 = vld [vmem:[%s3 + $0x30] sm:$0x1]
    %s1414 = scalar_lea.vmem %s3, 56
    %v1415 = vld [vmem:[%s1414] sm:$0xff]
    %v1416 = vld [vmem:[%s1414 + $0x8] sm:$0xff]
    %v1417 = vld [vmem:[%s1414 + $0x10] sm:$0xff]
    %v1418 = vld [vmem:[%s1414 + $0x18] sm:$0xff]
    %v1419 = vld [vmem:[%s1414 + $0x20] sm:$0xff]
    %v1420 = vld [vmem:[%s1414 + $0x28] sm:$0xff]
    %v1421 = vld [vmem:[%s1414 + $0x30] sm:$0x1]
    %v1423 = vrot.slane %v1406, 1
    %vm1424 = vcmask 400384
    %v1425 = vsel %vm1424, %v1423, 0
    %vm1427 = vcmask 1040384
    %v1429 = vsel %vm1427, %v1421, 0
    %1431 = vmatprep.subr.mxu0 0.0
    %1432 = vmatpush1.msra.mxu0 0.0
    %1433 = vmatprep.subr.mxu0 0.0
    %1434 = vmatpush1.msra.mxu0 0.0
    %1435 = vmatprep.subr.mxu0 0.0
    %1436 = vmatpush1.msra.mxu0 0.0
    %1437 = vmatprep.subr.mxu0 0.0
    %1438 = vmatpush1.msra.mxu0 0.0
    %1439 = vmatprep.subr.mxu0 0.0
    %1440 = vmatpush1.msra.mxu0 0.0
    %1441 = vmatprep.subr.mxu0 0.0
    %1442 = vmatpush1.msra.mxu0 0.0
    %1443 = vmatprep.subr.mxu0 0.0
    %1444 = vmatpush1.msra.mxu0 0.0
    %1445 = vmatprep.subr.mxu0 0.0
    %1446 = vmatpush1.msra.mxu0 0.0
    %1447 = vmatprep.subr.mxu0 0.0
    %1448 = vmatpush1.msra.mxu0 0.0
    %1449 = vmatprep.subr.mxu0 0.0
    %1450 = vmatpush1.msra.mxu0 %v1429
    %1451 = vmatprep.subr.mxu0 0.0
    %1452 = vmatpush1.msra.mxu0 %v1420
    %1453 = vmatprep.subr.mxu0 0.0
    %1454 = vmatpush1.msra.mxu0 %v1419
    %1455 = vmatprep.subr.mxu0 0.0
    %1456 = vmatpush1.msra.mxu0 %v1418
    %1457 = vmatprep.subr.mxu0 0.0
    %1458 = vmatpush1.msra.mxu0 %v1417
    %1459 = vmatprep.subr.mxu0 0.0
    %1460 = vmatpush1.msra.mxu0 %v1416
    %1461 = vmatprep.subr.mxu0 0.0
    %1462 = vmatpush1.msra.mxu0 %v1415
    %1463 = vmatprep.subr.mxu0 0.0
    %1464 = vmatpush2.msra.mxu0 0.0
    %1465 = vmatprep.subr.mxu0 0.0
    %1466 = vmatpush2.msra.mxu0 0.0
    %1467 = vmatprep.subr.mxu0 0.0
    %1468 = vmatpush2.msra.mxu0 0.0
    %1469 = vmatprep.subr.mxu0 0.0
    %1470 = vmatpush2.msra.mxu0 0.0
    %1471 = vmatprep.subr.mxu0 0.0
    %1472 = vmatpush2.msra.mxu0 0.0
    %1473 = vmatprep.subr.mxu0 0.0
    %1474 = vmatpush2.msra.mxu0 0.0
    %1475 = vmatprep.subr.mxu0 0.0
    %1476 = vmatpush2.msra.mxu0 0.0
    %1477 = vmatprep.subr.mxu0 0.0
    %1478 = vmatpush2.msra.mxu0 0.0
    %1479 = vmatprep.subr.mxu0 0.0
    %1480 = vmatpush2.msra.mxu0 0.0
    %1481 = vmatprep.subr.mxu0 0.0
    %1482 = vmatpush2.msra.mxu0 0.0
    %1483 = vmatprep.subr.mxu0 0.0
    %1484 = vmatpush2.msra.mxu0 0.0
    %1485 = vmatprep.subr.mxu0 0.0
    %1486 = vmatpush2.msra.mxu0 0.0
    %1487 = vmatprep.subr.mxu0 0.0
    %1488 = vmatpush2.msra.mxu0 0.0
    %1489 = vmatprep.subr.mxu0 0.0
    %1490 = vmatpush2.msra.mxu0 0.0
    %1491 = vmatprep.subr.mxu0 0.0
    %1492 = vmatpush2.msra.mxu0 0.0
    %1493 = vmatprep.subr.mxu0 0.0
    %1494 = vmatpush2.msra.mxu0 0.0
    %1495 = vmatprep.mubr.f32.mxu0 0.0
    %1496 = vmatmul.mubr.f32.gmra.mxu0 %v1425
    %v1497 = vpop.f32.mrf.mxu0
    %v1498 = vadd.f32 0.0, %v1497
    %v1499 = vpop.f32.mrf.mxu0
    %1500 = vdwg.mxu0
    %v1501 = vsel %vm1424, %v1406, 0
    %v1504 = vsel %vm1427, %v1413, 0
    %1506 = vmatprep.subr.mxu0 0.0
    %1507 = vmatpush1.msra.mxu0 0.0
    %1508 = vmatprep.subr.mxu0 0.0
    %1509 = vmatpush1.msra.mxu0 0.0
    %1510 = vmatprep.subr.mxu0 0.0
    %1511 = vmatpush1.msra.mxu0 0.0
    %1512 = vmatprep.subr.mxu0 0.0
    %1513 = vmatpush1.msra.mxu0 0.0
    %1514 = vmatprep.subr.mxu0 0.0
    %1515 = vmatpush1.msra.mxu0 0.0
    %1516 = vmatprep.subr.mxu0 0.0
    %1517 = vmatpush1.msra.mxu0 0.0
    %1518 = vmatprep.subr.mxu0 0.0
    %1519 = vmatpush1.msra.mxu0 0.0
    %1520 = vmatprep.subr.mxu0 0.0
    %1521 = vmatpush1.msra.mxu0 0.0
    %1522 = vmatprep.subr.mxu0 0.0
    %1523 = vmatpush1.msra.mxu0 0.0
    %1524 = vmatprep.subr.mxu0 0.0
    %1525 = vmatpush1.msra.mxu0 %v1504
    %1526 = vmatprep.subr.mxu0 0.0
    %1527 = vmatpush1.msra.mxu0 %v1412
    %1528 = vmatprep.subr.mxu0 0.0
    %1529 = vmatpush1.msra.mxu0 %v1411
    %1530 = vmatprep.subr.mxu0 0.0
    %1531 = vmatpush1.msra.mxu0 %v1410
    %1532 = vmatprep.subr.mxu0 0.0
    %1533 = vmatpush1.msra.mxu0 %v1409
    %1534 = vmatprep.subr.mxu0 0.0
    %1535 = vmatpush1.msra.mxu0 %v1408
    %1536 = vmatprep.subr.mxu0 0.0
    %1537 = vmatpush1.msra.mxu0 %v1407
    %1538 = vmatprep.subr.mxu0 0.0
    %1539 = vmatpush2.msra.mxu0 0.0
    %1540 = vmatprep.subr.mxu0 0.0
    %1541 = vmatpush2.msra.mxu0 0.0
    %1542 = vmatprep.subr.mxu0 0.0
    %1543 = vmatpush2.msra.mxu0 0.0
    %1544 = vmatprep.subr.mxu0 0.0
    %1545 = vmatpush2.msra.mxu0 0.0
    %1546 = vmatprep.subr.mxu0 0.0
    %1547 = vmatpush2.msra.mxu0 0.0
    %1548 = vmatprep.subr.mxu0 0.0
    %1549 = vmatpush2.msra.mxu0 0.0
    %1550 = vmatprep.subr.mxu0 0.0
    %1551 = vmatpush2.msra.mxu0 0.0
    %1552 = vmatprep.subr.mxu0 0.0
    %1553 = vmatpush2.msra.mxu0 0.0
    %1554 = vmatprep.subr.mxu0 0.0
    %1555 = vmatpush2.msra.mxu0 0.0
    %1556 = vmatprep.subr.mxu0 0.0
    %1557 = vmatpush2.msra.mxu0 0.0
    %1558 = vmatprep.subr.mxu0 0.0
    %1559 = vmatpush2.msra.mxu0 0.0
    %1560 = vmatprep.subr.mxu0 0.0
    %1561 = vmatpush2.msra.mxu0 0.0
    %1562 = vmatprep.subr.mxu0 0.0
    %1563 = vmatpush2.msra.mxu0 0.0
    %1564 = vmatprep.subr.mxu0 0.0
    %1565 = vmatpush2.msra.mxu0 0.0
    %1566 = vmatprep.subr.mxu0 0.0
    %1567 = vmatpush2.msra.mxu0 0.0
    %1568 = vmatprep.subr.mxu0 0.0
    %1569 = vmatpush2.msra.mxu0 0.0
    %1570 = vmatprep.mubr.f32.mxu0 0.0
    %1571 = vmatmul.mubr.f32.gmra.mxu0 %v1501
    %v1572 = vpop.f32.mrf.mxu0
    %v1573 = vadd.f32 %v1498, %v1572
    %v1574 = vpop.f32.mrf.mxu0
    %1575 = vdwg.mxu0
    %s1576 = scalar_lea.vmem %s3, 112
    %v1577 = vld [vmem:[%s1576] sm:$0xff]
    %v1578 = vld [vmem:[%s1576 + $0x8] sm:$0xff]
    %v1579 = vld [vmem:[%s1576 + $0x10] sm:$0xff]
    %v1580 = vld [vmem:[%s1576 + $0x18] sm:$0xff]
    %v1581 = vld [vmem:[%s1576 + $0x20] sm:$0xff]
    %v1582 = vld [vmem:[%s1576 + $0x28] sm:$0xff]
    %v1583 = vld [vmem:[%s1576 + $0x30] sm:$0x1]
    %v1584 = vrot.slane %v1406, 2
    %v1585 = vsel %vm1424, %v1584, 0
    %v1588 = vsel %vm1427, %v1583, 0
    %1590 = vmatprep.subr.mxu0 0.0
    %1591 = vmatpush1.msra.mxu0 0.0
    %1592 = vmatprep.subr.mxu0 0.0
    %1593 = vmatpush1.msra.mxu0 0.0
    %1594 = vmatprep.subr.mxu0 0.0
    %1595 = vmatpush1.msra.mxu0 0.0
    %1596 = vmatprep.subr.mxu0 0.0
    %1597 = vmatpush1.msra.mxu0 0.0
    %1598 = vmatprep.subr.mxu0 0.0
    %1599 = vmatpush1.msra.mxu0 0.0
    %1600 = vmatprep.subr.mxu0 0.0
    %1601 = vmatpush1.msra.mxu0 0.0
    %1602 = vmatprep.subr.mxu0 0.0
    %1603 = vmatpush1.msra.mxu0 0.0
    %1604 = vmatprep.subr.mxu0 0.0
    %1605 = vmatpush1.msra.mxu0 0.0
    %1606 = vmatprep.subr.mxu0 0.0
    %1607 = vmatpush1.msra.mxu0 0.0
    %1608 = vmatprep.subr.mxu0 0.0
    %1609 = vmatpush1.msra.mxu0 %v1588
    %1610 = vmatprep.subr.mxu0 0.0
    %1611 = vmatpush1.msra.mxu0 %v1582
    %1612 = vmatprep.subr.mxu0 0.0
    %1613 = vmatpush1.msra.mxu0 %v1581
    %1614 = vmatprep.subr.mxu0 0.0
    %1615 = vmatpush1.msra.mxu0 %v1580
    %1616 = vmatprep.subr.mxu0 0.0
    %1617 = vmatpush1.msra.mxu0 %v1579
    %1618 = vmatprep.subr.mxu0 0.0
    %1619 = vmatpush1.msra.mxu0 %v1578
    %1620 = vmatprep.subr.mxu0 0.0
    %1621 = vmatpush1.msra.mxu0 %v1577
    %1622 = vmatprep.subr.mxu0 0.0
    %1623 = vmatpush2.msra.mxu0 0.0
    %1624 = vmatprep.subr.mxu0 0.0
    %1625 = vmatpush2.msra.mxu0 0.0
    %1626 = vmatprep.subr.mxu0 0.0
    %1627 = vmatpush2.msra.mxu0 0.0
    %1628 = vmatprep.subr.mxu0 0.0
    %1629 = vmatpush2.msra.mxu0 0.0
    %1630 = vmatprep.subr.mxu0 0.0
    %1631 = vmatpush2.msra.mxu0 0.0
    %1632 = vmatprep.subr.mxu0 0.0
    %1633 = vmatpush2.msra.mxu0 0.0
    %1634 = vmatprep.subr.mxu0 0.0
    %1635 = vmatpush2.msra.mxu0 0.0
    %1636 = vmatprep.subr.mxu0 0.0
    %1637 = vmatpush2.msra.mxu0 0.0
    %1638 = vmatprep.subr.mxu0 0.0
    %1639 = vmatpush2.msra.mxu0 0.0
    %1640 = vmatprep.subr.mxu0 0.0
    %1641 = vmatpush2.msra.mxu0 0.0
    %1642 = vmatprep.subr.mxu0 0.0
    %1643 = vmatpush2.msra.mxu0 0.0
    %1644 = vmatprep.subr.mxu0 0.0
    %1645 = vmatpush2.msra.mxu0 0.0
    %1646 = vmatprep.subr.mxu0 0.0
    %1647 = vmatpush2.msra.mxu0 0.0
    %1648 = vmatprep.subr.mxu0 0.0
    %1649 = vmatpush2.msra.mxu0 0.0
    %1650 = vmatprep.subr.mxu0 0.0
    %1651 = vmatpush2.msra.mxu0 0.0
    %1652 = vmatprep.subr.mxu0 0.0
    %1653 = vmatpush2.msra.mxu0 0.0
    %1654 = vmatprep.mubr.f32.mxu0 0.0
    %1655 = vmatmul.mubr.f32.gmra.mxu0 %v1585
    %v1656 = vpop.f32.mrf.mxu0
    %v1657 = vadd.f32 0.0, %v1656
    %v1658 = vpop.f32.mrf.mxu0
    %1659 = vdwg.mxu0
    %v1660 = vadd.f32 %v1573, %v1657
    %s1661 = scalar_lea.vmem %s3, 168
    %v1662 = vld [vmem:[%s1661] sm:$0xff]
    %v1663 = vld [vmem:[%s1661 + $0x8] sm:$0xff]
    %v1664 = vld [vmem:[%s1661 + $0x10] sm:$0xff]
    %v1665 = vld [vmem:[%s1661 + $0x18] sm:$0xff]
    %v1666 = vld [vmem:[%s1661 + $0x20] sm:$0xff]
    %v1667 = vld [vmem:[%s1661 + $0x28] sm:$0xff]
    %v1668 = vld [vmem:[%s1661 + $0x30] sm:$0x1]
    %v1669 = vrot.slane %v1406, 3
    %v1670 = vsel %vm1424, %v1669, 0
    %v1673 = vsel %vm1427, %v1668, 0
    %1675 = vmatprep.subr.mxu0 0.0
    %1676 = vmatpush1.msra.mxu0 0.0
    %1677 = vmatprep.subr.mxu0 0.0
    %1678 = vmatpush1.msra.mxu0 0.0
    %1679 = vmatprep.subr.mxu0 0.0
    %1680 = vmatpush1.msra.mxu0 0.0
    %1681 = vmatprep.subr.mxu0 0.0
    %1682 = vmatpush1.msra.mxu0 0.0
    %1683 = vmatprep.subr.mxu0 0.0
    %1684 = vmatpush1.msra.mxu0 0.0
    %1685 = vmatprep.subr.mxu0 0.0
    %1686 = vmatpush1.msra.mxu0 0.0
    %1687 = vmatprep.subr.mxu0 0.0
    %1688 = vmatpush1.msra.mxu0 0.0
    %1689 = vmatprep.subr.mxu0 0.0
    %1690 = vmatpush1.msra.mxu0 0.0
    %1691 = vmatprep.subr.mxu0 0.0
    %1692 = vmatpush1.msra.mxu0 0.0
    %1693 = vmatprep.subr.mxu0 0.0
    %1694 = vmatpush1.msra.mxu0 %v1673
    %1695 = vmatprep.subr.mxu0 0.0
    %1696 = vmatpush1.msra.mxu0 %v1667
    %1697 = vmatprep.subr.mxu0 0.0
    %1698 = vmatpush1.msra.mxu0 %v1666
    %1699 = vmatprep.subr.mxu0 0.0
    %1700 = vmatpush1.msra.mxu0 %v1665
    %1701 = vmatprep.subr.mxu0 0.0
    %1702 = vmatpush1.msra.mxu0 %v1664
    %1703 = vmatprep.subr.mxu0 0.0
    %1704 = vmatpush1.msra.mxu0 %v1663
    %1705 = vmatprep.subr.mxu0 0.0
    %1706 = vmatpush1.msra.mxu0 %v1662
    %1707 = vmatprep.subr.mxu0 0.0
    %1708 = vmatpush2.msra.mxu0 0.0
    %1709 = vmatprep.subr.mxu0 0.0
    %1710 = vmatpush2.msra.mxu0 0.0
    %1711 = vmatprep.subr.mxu0 0.0
    %1712 = vmatpush2.msra.mxu0 0.0
    %1713 = vmatprep.subr.mxu0 0.0
    %1714 = vmatpush2.msra.mxu0 0.0
    %1715 = vmatprep.subr.mxu0 0.0
    %1716 = vmatpush2.msra.mxu0 0.0
    %1717 = vmatprep.subr.mxu0 0.0
    %1718 = vmatpush2.msra.mxu0 0.0
    %1719 = vmatprep.subr.mxu0 0.0
    %1720 = vmatpush2.msra.mxu0 0.0
    %1721 = vmatprep.subr.mxu0 0.0
    %1722 = vmatpush2.msra.mxu0 0.0
    %1723 = vmatprep.subr.mxu0 0.0
    %1724 = vmatpush2.msra.mxu0 0.0
    %1725 = vmatprep.subr.mxu0 0.0
    %1726 = vmatpush2.msra.mxu0 0.0
    %1727 = vmatprep.subr.mxu0 0.0
    %1728 = vmatpush2.msra.mxu0 0.0
    %1729 = vmatprep.subr.mxu0 0.0
    %1730 = vmatpush2.msra.mxu0 0.0
    %1731 = vmatprep.subr.mxu0 0.0
    %1732 = vmatpush2.msra.mxu0 0.0
    %1733 = vmatprep.subr.mxu0 0.0
    %1734 = vmatpush2.msra.mxu0 0.0
    %1735 = vmatprep.subr.mxu0 0.0
    %1736 = vmatpush2.msra.mxu0 0.0
    %1737 = vmatprep.subr.mxu0 0.0
    %1738 = vmatpush2.msra.mxu0 0.0
    %1739 = vmatprep.mubr.f32.mxu0 0.0
    %1740 = vmatmul.mubr.f32.gmra.mxu0 %v1670
    %v1741 = vpop.f32.mrf.mxu0
    %v1742 = vadd.f32 0.0, %v1741
    %v1743 = vpop.f32.mrf.mxu0
    %1744 = vdwg.mxu0
    %v1745 = vadd.f32 %v1660, %v1742
    %s1746 = scalar_lea.vmem %s3, 224
    %v1747 = vld [vmem:[%s1746] sm:$0xff]
    %v1748 = vld [vmem:[%s1746 + $0x8] sm:$0xff]
    %v1749 = vld [vmem:[%s1746 + $0x10] sm:$0xff]
    %v1750 = vld [vmem:[%s1746 + $0x18] sm:$0xff]
    %v1751 = vld [vmem:[%s1746 + $0x20] sm:$0xff]
    %v1752 = vld [vmem:[%s1746 + $0x28] sm:$0xff]
    %v1753 = vld [vmem:[%s1746 + $0x30] sm:$0x1]
    %v1754 = vrot.slane %v1406, 4
    %v1755 = vsel %vm1424, %v1754, 0
    %v1758 = vsel %vm1427, %v1753, 0
    %1760 = vmatprep.subr.mxu0 0.0
    %1761 = vmatpush1.msra.mxu0 0.0
    %1762 = vmatprep.subr.mxu0 0.0
    %1763 = vmatpush1.msra.mxu0 0.0
    %1764 = vmatprep.subr.mxu0 0.0
    %1765 = vmatpush1.msra.mxu0 0.0
    %1766 = vmatprep.subr.mxu0 0.0
    %1767 = vmatpush1.msra.mxu0 0.0
    %1768 = vmatprep.subr.mxu0 0.0
    %1769 = vmatpush1.msra.mxu0 0.0
    %1770 = vmatprep.subr.mxu0 0.0
    %1771 = vmatpush1.msra.mxu0 0.0
    %1772 = vmatprep.subr.mxu0 0.0
    %1773 = vmatpush1.msra.mxu0 0.0
    %1774 = vmatprep.subr.mxu0 0.0
    %1775 = vmatpush1.msra.mxu0 0.0
    %1776 = vmatprep.subr.mxu0 0.0
    %1777 = vmatpush1.msra.mxu0 0.0
    %1778 = vmatprep.subr.mxu0 0.0
    %1779 = vmatpush1.msra.mxu0 %v1758
    %1780 = vmatprep.subr.mxu0 0.0
    %1781 = vmatpush1.msra.mxu0 %v1752
    %1782 = vmatprep.subr.mxu0 0.0
    %1783 = vmatpush1.msra.mxu0 %v1751
    %1784 = vmatprep.subr.mxu0 0.0
    %1785 = vmatpush1.msra.mxu0 %v1750
    %1786 = vmatprep.subr.mxu0 0.0
    %1787 = vmatpush1.msra.mxu0 %v1749
    %1788 = vmatprep.subr.mxu0 0.0
    %1789 = vmatpush1.msra.mxu0 %v1748
    %1790 = vmatprep.subr.mxu0 0.0
    %1791 = vmatpush1.msra.mxu0 %v1747
    %1792 = vmatprep.subr.mxu0 0.0
    %1793 = vmatpush2.msra.mxu0 0.0
    %1794 = vmatprep.subr.mxu0 0.0
    %1795 = vmatpush2.msra.mxu0 0.0
    %1796 = vmatprep.subr.mxu0 0.0
    %1797 = vmatpush2.msra.mxu0 0.0
    %1798 = vmatprep.subr.mxu0 0.0
    %1799 = vmatpush2.msra.mxu0 0.0
    %1800 = vmatprep.subr.mxu0 0.0
    %1801 = vmatpush2.msra.mxu0 0.0
    %1802 = vmatprep.subr.mxu0 0.0
    %1803 = vmatpush2.msra.mxu0 0.0
    %1804 = vmatprep.subr.mxu0 0.0
    %1805 = vmatpush2.msra.mxu0 0.0
    %1806 = vmatprep.subr.mxu0 0.0
    %1807 = vmatpush2.msra.mxu0 0.0
    %1808 = vmatprep.subr.mxu0 0.0
    %1809 = vmatpush2.msra.mxu0 0.0
    %1810 = vmatprep.subr.mxu0 0.0
    %1811 = vmatpush2.msra.mxu0 0.0
    %1812 = vmatprep.subr.mxu0 0.0
    %1813 = vmatpush2.msra.mxu0 0.0
    %1814 = vmatprep.subr.mxu0 0.0
    %1815 = vmatpush2.msra.mxu0 0.0
    %1816 = vmatprep.subr.mxu0 0.0
    %1817 = vmatpush2.msra.mxu0 0.0
    %1818 = vmatprep.subr.mxu0 0.0
    %1819 = vmatpush2.msra.mxu0 0.0
    %1820 = vmatprep.subr.mxu0 0.0
    %1821 = vmatpush2.msra.mxu0 0.0
    %1822 = vmatprep.subr.mxu0 0.0
    %1823 = vmatpush2.msra.mxu0 0.0
    %1824 = vmatprep.mubr.f32.mxu0 0.0
    %1825 = vmatmul.mubr.f32.gmra.mxu0 %v1755
    %v1826 = vpop.f32.mrf.mxu0
    %v1827 = vadd.f32 0.0, %v1826
    %v1828 = vpop.f32.mrf.mxu0
    %1829 = vdwg.mxu0
    %v1830 = vadd.f32 %v1745, %v1827
    %s1831 = scalar_lea.vmem %s3, 280
    %v1832 = vld [vmem:[%s1831] sm:$0xff]
    %v1833 = vld [vmem:[%s1831 + $0x8] sm:$0xff]
    %v1834 = vld [vmem:[%s1831 + $0x10] sm:$0xff]
    %v1835 = vld [vmem:[%s1831 + $0x18] sm:$0xff]
    %v1836 = vld [vmem:[%s1831 + $0x20] sm:$0xff]
    %v1837 = vld [vmem:[%s1831 + $0x28] sm:$0xff]
    %v1838 = vld [vmem:[%s1831 + $0x30] sm:$0x1]
    %v1839 = vrot.slane %v1406, 5
    %v1840 = vsel %vm1424, %v1839, 0
    %v1843 = vsel %vm1427, %v1838, 0
    %1845 = vmatprep.subr.mxu0 0.0
    %1846 = vmatpush1.msra.mxu0 0.0
    %1847 = vmatprep.subr.mxu0 0.0
    %1848 = vmatpush1.msra.mxu0 0.0
    %1849 = vmatprep.subr.mxu0 0.0
    %1850 = vmatpush1.msra.mxu0 0.0
    %1851 = vmatprep.subr.mxu0 0.0
    %1852 = vmatpush1.msra.mxu0 0.0
    %1853 = vmatprep.subr.mxu0 0.0
    %1854 = vmatpush1.msra.mxu0 0.0
    %1855 = vmatprep.subr.mxu0 0.0
    %1856 = vmatpush1.msra.mxu0 0.0
    %1857 = vmatprep.subr.mxu0 0.0
    %1858 = vmatpush1.msra.mxu0 0.0
    %1859 = vmatprep.subr.mxu0 0.0
    %1860 = vmatpush1.msra.mxu0 0.0
    %1861 = vmatprep.subr.mxu0 0.0
    %1862 = vmatpush1.msra.mxu0 0.0
    %1863 = vmatprep.subr.mxu0 0.0
    %1864 = vmatpush1.msra.mxu0 %v1843
    %1865 = vmatprep.subr.mxu0 0.0
    %1866 = vmatpush1.msra.mxu0 %v1837
    %1867 = vmatprep.subr.mxu0 0.0
    %1868 = vmatpush1.msra.mxu0 %v1836
    %1869 = vmatprep.subr.mxu0 0.0
    %1870 = vmatpush1.msra.mxu0 %v1835
    %1871 = vmatprep.subr.mxu0 0.0
    %1872 = vmatpush1.msra.mxu0 %v1834
    %1873 = vmatprep.subr.mxu0 0.0
    %1874 = vmatpush1.msra.mxu0 %v1833
    %1875 = vmatprep.subr.mxu0 0.0
    %1876 = vmatpush1.msra.mxu0 %v1832
    %1877 = vmatprep.subr.mxu0 0.0
    %1878 = vmatpush2.msra.mxu0 0.0
    %1879 = vmatprep.subr.mxu0 0.0
    %1880 = vmatpush2.msra.mxu0 0.0
    %1881 = vmatprep.subr.mxu0 0.0
    %1882 = vmatpush2.msra.mxu0 0.0
    %1883 = vmatprep.subr.mxu0 0.0
    %1884 = vmatpush2.msra.mxu0 0.0
    %1885 = vmatprep.subr.mxu0 0.0
    %1886 = vmatpush2.msra.mxu0 0.0
    %1887 = vmatprep.subr.mxu0 0.0
    %1888 = vmatpush2.msra.mxu0 0.0
    %1889 = vmatprep.subr.mxu0 0.0
    %1890 = vmatpush2.msra.mxu0 0.0
    %1891 = vmatprep.subr.mxu0 0.0
    %1892 = vmatpush2.msra.mxu0 0.0
    %1893 = vmatprep.subr.mxu0 0.0
    %1894 = vmatpush2.msra.mxu0 0.0
    %1895 = vmatprep.subr.mxu0 0.0
    %1896 = vmatpush2.msra.mxu0 0.0
    %1897 = vmatprep.subr.mxu0 0.0
    %1898 = vmatpush2.msra.mxu0 0.0
    %1899 = vmatprep.subr.mxu0 0.0
    %1900 = vmatpush2.msra.mxu0 0.0
    %1901 = vmatprep.subr.mxu0 0.0
    %1902 = vmatpush2.msra.mxu0 0.0
    %1903 = vmatprep.subr.mxu0 0.0
    %1904 = vmatpush2.msra.mxu0 0.0
    %1905 = vmatprep.subr.mxu0 0.0
    %1906 = vmatpush2.msra.mxu0 0.0
    %1907 = vmatprep.subr.mxu0 0.0
    %1908 = vmatpush2.msra.mxu0 0.0
    %1909 = vmatprep.mubr.f32.mxu0 0.0
    %1910 = vmatmul.mubr.f32.gmra.mxu0 %v1840
    %v1911 = vpop.f32.mrf.mxu0
    %v1912 = vadd.f32 0.0, %v1911
    %v1913 = vpop.f32.mrf.mxu0
    %1914 = vdwg.mxu0
    %v1915 = vadd.f32 %v1830, %v1912
    %s1916 = scalar_lea.vmem %s3, 336
    %v1917 = vld [vmem:[%s1916] sm:$0xff]
    %v1918 = vld [vmem:[%s1916 + $0x8] sm:$0xff]
    %v1919 = vld [vmem:[%s1916 + $0x10] sm:$0xff]
    %v1920 = vld [vmem:[%s1916 + $0x18] sm:$0xff]
    %v1921 = vld [vmem:[%s1916 + $0x20] sm:$0xff]
    %v1922 = vld [vmem:[%s1916 + $0x28] sm:$0xff]
    %v1923 = vld [vmem:[%s1916 + $0x30] sm:$0x1]
    %v1924 = vrot.slane %v1406, 6
    %v1925 = vsel %vm1424, %v1924, 0
    %v1928 = vsel %vm1427, %v1923, 0
    %1930 = vmatprep.subr.mxu0 0.0
    %1931 = vmatpush1.msra.mxu0 0.0
    %1932 = vmatprep.subr.mxu0 0.0
    %1933 = vmatpush1.msra.mxu0 0.0
    %1934 = vmatprep.subr.mxu0 0.0
    %1935 = vmatpush1.msra.mxu0 0.0
    %1936 = vmatprep.subr.mxu0 0.0
    %1937 = vmatpush1.msra.mxu0 0.0
    %1938 = vmatprep.subr.mxu0 0.0
    %1939 = vmatpush1.msra.mxu0 0.0
    %1940 = vmatprep.subr.mxu0 0.0
    %1941 = vmatpush1.msra.mxu0 0.0
    %1942 = vmatprep.subr.mxu0 0.0
    %1943 = vmatpush1.msra.mxu0 0.0
    %1944 = vmatprep.subr.mxu0 0.0
    %1945 = vmatpush1.msra.mxu0 0.0
    %1946 = vmatprep.subr.mxu0 0.0
    %1947 = vmatpush1.msra.mxu0 0.0
    %1948 = vmatprep.subr.mxu0 0.0
    %1949 = vmatpush1.msra.mxu0 %v1928
    %1950 = vmatprep.subr.mxu0 0.0
    %1951 = vmatpush1.msra.mxu0 %v1922
    %1952 = vmatprep.subr.mxu0 0.0
    %1953 = vmatpush1.msra.mxu0 %v1921
    %1954 = vmatprep.subr.mxu0 0.0
    %1955 = vmatpush1.msra.mxu0 %v1920
    %1956 = vmatprep.subr.mxu0 0.0
    %1957 = vmatpush1.msra.mxu0 %v1919
    %1958 = vmatprep.subr.mxu0 0.0
    %1959 = vmatpush1.msra.mxu0 %v1918
    %1960 = vmatprep.subr.mxu0 0.0
    %1961 = vmatpush1.msra.mxu0 %v1917
    %1962 = vmatprep.subr.mxu0 0.0
    %1963 = vmatpush2.msra.mxu0 0.0
    %1964 = vmatprep.subr.mxu0 0.0
    %1965 = vmatpush2.msra.mxu0 0.0
    %1966 = vmatprep.subr.mxu0 0.0
    %1967 = vmatpush2.msra.mxu0 0.0
    %1968 = vmatprep.subr.mxu0 0.0
    %1969 = vmatpush2.msra.mxu0 0.0
    %1970 = vmatprep.subr.mxu0 0.0
    %1971 = vmatpush2.msra.mxu0 0.0
    %1972 = vmatprep.subr.mxu0 0.0
    %1973 = vmatpush2.msra.mxu0 0.0
    %1974 = vmatprep.subr.mxu0 0.0
    %1975 = vmatpush2.msra.mxu0 0.0
    %1976 = vmatprep.subr.mxu0 0.0
    %1977 = vmatpush2.msra.mxu0 0.0
    %1978 = vmatprep.subr.mxu0 0.0
    %1979 = vmatpush2.msra.mxu0 0.0
    %1980 = vmatprep.subr.mxu0 0.0
    %1981 = vmatpush2.msra.mxu0 0.0
    %1982 = vmatprep.subr.mxu0 0.0
    %1983 = vmatpush2.msra.mxu0 0.0
    %1984 = vmatprep.subr.mxu0 0.0
    %1985 = vmatpush2.msra.mxu0 0.0
    %1986 = vmatprep.subr.mxu0 0.0
    %1987 = vmatpush2.msra.mxu0 0.0
    %1988 = vmatprep.subr.mxu0 0.0
    %1989 = vmatpush2.msra.mxu0 0.0
    %1990 = vmatprep.subr.mxu0 0.0
    %1991 = vmatpush2.msra.mxu0 0.0
    %1992 = vmatprep.subr.mxu0 0.0
    %1993 = vmatpush2.msra.mxu0 0.0
    %1994 = vmatprep.mubr.f32.mxu0 0.0
    %1995 = vmatmul.mubr.f32.gmra.mxu0 %v1925
    %v1996 = vpop.f32.mrf.mxu0
    %v1997 = vadd.f32 0.0, %v1996
    %v1998 = vpop.f32.mrf.mxu0
    %1999 = vdwg.mxu0
    %v2000 = vadd.f32 %v1915, %v1997
    %s2001 = scalar_lea.vmem %s3, 392
    %v2002 = vld [vmem:[%s2001] sm:$0xff]
    %v2003 = vld [vmem:[%s2001 + $0x8] sm:$0xff]
    %v2004 = vld [vmem:[%s2001 + $0x10] sm:$0xff]
    %v2005 = vld [vmem:[%s2001 + $0x18] sm:$0xff]
    %v2006 = vld [vmem:[%s2001 + $0x20] sm:$0xff]
    %v2007 = vld [vmem:[%s2001 + $0x28] sm:$0xff]
    %v2008 = vld [vmem:[%s2001 + $0x30] sm:$0x1]
    %v2009 = vrot.slane %v1406, 7
    %v2010 = vsel %vm1424, %v2009, 0
    %v2013 = vsel %vm1427, %v2008, 0
    %2015 = vmatprep.subr.mxu0 0.0
    %2016 = vmatpush1.msra.mxu0 0.0
    %2017 = vmatprep.subr.mxu0 0.0
    %2018 = vmatpush1.msra.mxu0 0.0
    %2019 = vmatprep.subr.mxu0 0.0
    %2020 = vmatpush1.msra.mxu0 0.0
    %2021 = vmatprep.subr.mxu0 0.0
    %2022 = vmatpush1.msra.mxu0 0.0
    %2023 = vmatprep.subr.mxu0 0.0
    %2024 = vmatpush1.msra.mxu0 0.0
    %2025 = vmatprep.subr.mxu0 0.0
    %2026 = vmatpush1.msra.mxu0 0.0
    %2027 = vmatprep.subr.mxu0 0.0
    %2028 = vmatpush1.msra.mxu0 0.0
    %2029 = vmatprep.subr.mxu0 0.0
    %2030 = vmatpush1.msra.mxu0 0.0
    %2031 = vmatprep.subr.mxu0 0.0
    %2032 = vmatpush1.msra.mxu0 0.0
    %2033 = vmatprep.subr.mxu0 0.0
    %2034 = vmatpush1.msra.mxu0 %v2013
    %2035 = vmatprep.subr.mxu0 0.0
    %2036 = vmatpush1.msra.mxu0 %v2007
    %2037 = vmatprep.subr.mxu0 0.0
    %2038 = vmatpush1.msra.mxu0 %v2006
    %2039 = vmatprep.subr.mxu0 0.0
    %2040 = vmatpush1.msra.mxu0 %v2005
    %2041 = vmatprep.subr.mxu0 0.0
    %2042 = vmatpush1.msra.mxu0 %v2004
    %2043 = vmatprep.subr.mxu0 0.0
    %2044 = vmatpush1.msra.mxu0 %v2003
    %2045 = vmatprep.subr.mxu0 0.0
    %2046 = vmatpush1.msra.mxu0 %v2002
    %2047 = vmatprep.subr.mxu0 0.0
    %2048 = vmatpush2.msra.mxu0 0.0
    %2049 = vmatprep.subr.mxu0 0.0
    %2050 = vmatpush2.msra.mxu0 0.0
    %2051 = vmatprep.subr.mxu0 0.0
    %2052 = vmatpush2.msra.mxu0 0.0
    %2053 = vmatprep.subr.mxu0 0.0
    %2054 = vmatpush2.msra.mxu0 0.0
    %2055 = vmatprep.subr.mxu0 0.0
    %2056 = vmatpush2.msra.mxu0 0.0
    %2057 = vmatprep.subr.mxu0 0.0
    %2058 = vmatpush2.msra.mxu0 0.0
    %2059 = vmatprep.subr.mxu0 0.0
    %2060 = vmatpush2.msra.mxu0 0.0
    %2061 = vmatprep.subr.mxu0 0.0
    %2062 = vmatpush2.msra.mxu0 0.0
    %2063 = vmatprep.subr.mxu0 0.0
    %2064 = vmatpush2.msra.mxu0 0.0
    %2065 = vmatprep.subr.mxu0 0.0
    %2066 = vmatpush2.msra.mxu0 0.0
    %2067 = vmatprep.subr.mxu0 0.0
    %2068 = vmatpush2.msra.mxu0 0.0
    %2069 = vmatprep.subr.mxu0 0.0
    %2070 = vmatpush2.msra.mxu0 0.0
    %2071 = vmatprep.subr.mxu0 0.0
    %2072 = vmatpush2.msra.mxu0 0.0
    %2073 = vmatprep.subr.mxu0 0.0
    %2074 = vmatpush2.msra.mxu0 0.0
    %2075 = vmatprep.subr.mxu0 0.0
    %2076 = vmatpush2.msra.mxu0 0.0
    %2077 = vmatprep.subr.mxu0 0.0
    %2078 = vmatpush2.msra.mxu0 0.0
    %2079 = vmatprep.mubr.f32.mxu0 0.0
    %2080 = vmatmul.mubr.f32.gmra.mxu0 %v2010
    %v2081 = vpop.f32.mrf.mxu0
    %v2082 = vadd.f32 0.0, %v2081
    %v2083 = vpop.f32.mrf.mxu0
    %2084 = vdwg.mxu0
    %v2085 = vadd.f32 %v2000, %v2082
    %s2086 = scalar_lea.vmem %s0, 80
    %v2087 = vld [vmem:[%s2086] sm:$0xff]
    %v2088 = vld [vmem:[%s2086 + $0x8] sm:$0xff]
    %v2089 = vld [vmem:[%s2086 + $0x10] sm:$0xff]
    %v2090 = vld [vmem:[%s2086 + $0x18] sm:$0xff]
    %v2091 = vld [vmem:[%s2086 + $0x20] sm:$0xff]
    %v2092 = vld [vmem:[%s2086 + $0x28] sm:$0xff]
    %v2093 = vld [vmem:[%s2086 + $0x30] sm:$0xff]
    %v2094 = vld [vmem:[%s2086 + $0x38] sm:$0xff]
    %v2095 = vld [vmem:[%s2086 + $0x40] sm:$0xff]
    %v2096 = vld [vmem:[%s2086 + $0x48] sm:$0x7]
    %v2098 = vsel %vm42, %v2096, 0
    %2100 = vmatprep.subr.mxu0 0.0
    %2101 = vmatpush1.msra.mxu0 0.0
    %2102 = vmatprep.subr.mxu0 0.0
    %2103 = vmatpush1.msra.mxu0 0.0
    %2104 = vmatprep.subr.mxu0 0.0
    %2105 = vmatpush1.msra.mxu0 0.0
    %2106 = vmatprep.subr.mxu0 0.0
    %2107 = vmatpush1.msra.mxu0 0.0
    %2108 = vmatprep.subr.mxu0 0.0
    %2109 = vmatpush1.msra.mxu0 0.0
    %2110 = vmatprep.subr.mxu0 0.0
    %2111 = vmatpush1.msra.mxu0 0.0
    %2112 = vmatprep.subr.mxu0 0.0
    %2113 = vmatpush1.msra.mxu0 %v2098
    %2114 = vmatprep.subr.mxu0 0.0
    %2115 = vmatpush1.msra.mxu0 %v2095
    %2116 = vmatprep.subr.mxu0 0.0
    %2117 = vmatpush1.msra.mxu0 %v2094
    %2118 = vmatprep.subr.mxu0 0.0
    %2119 = vmatpush1.msra.mxu0 %v2093
    %2120 = vmatprep.subr.mxu0 0.0
    %2121 = vmatpush1.msra.mxu0 %v2092
    %2122 = vmatprep.subr.mxu0 0.0
    %2123 = vmatpush1.msra.mxu0 %v2091
    %2124 = vmatprep.subr.mxu0 0.0
    %2125 = vmatpush1.msra.mxu0 %v2090
    %2126 = vmatprep.subr.mxu0 0.0
    %2127 = vmatpush1.msra.mxu0 %v2089
    %2128 = vmatprep.subr.mxu0 0.0
    %2129 = vmatpush1.msra.mxu0 %v2088
    %2130 = vmatprep.subr.mxu0 0.0
    %2131 = vmatpush1.msra.mxu0 %v2087
    %2132 = vmatprep.subr.mxu0 0.0
    %2133 = vmatpush2.msra.mxu0 0.0
    %2134 = vmatprep.subr.mxu0 0.0
    %2135 = vmatpush2.msra.mxu0 0.0
    %2136 = vmatprep.subr.mxu0 0.0
    %2137 = vmatpush2.msra.mxu0 0.0
    %2138 = vmatprep.subr.mxu0 0.0
    %2139 = vmatpush2.msra.mxu0 0.0
    %2140 = vmatprep.subr.mxu0 0.0
    %2141 = vmatpush2.msra.mxu0 0.0
    %2142 = vmatprep.subr.mxu0 0.0
    %2143 = vmatpush2.msra.mxu0 0.0
    %2144 = vmatprep.subr.mxu0 0.0
    %2145 = vmatpush2.msra.mxu0 0.0
    %2146 = vmatprep.subr.mxu0 0.0
    %2147 = vmatpush2.msra.mxu0 0.0
    %2148 = vmatprep.subr.mxu0 0.0
    %2149 = vmatpush2.msra.mxu0 0.0
    %2150 = vmatprep.subr.mxu0 0.0
    %2151 = vmatpush2.msra.mxu0 0.0
    %2152 = vmatprep.subr.mxu0 0.0
    %2153 = vmatpush2.msra.mxu0 0.0
    %2154 = vmatprep.subr.mxu0 0.0
    %2155 = vmatpush2.msra.mxu0 0.0
    %2156 = vmatprep.subr.mxu0 0.0
    %2157 = vmatpush2.msra.mxu0 0.0
    %2158 = vmatprep.subr.mxu0 0.0
    %2159 = vmatpush2.msra.mxu0 0.0
    %2160 = vmatprep.subr.mxu0 0.0
    %2161 = vmatpush2.msra.mxu0 0.0
    %2162 = vmatprep.subr.mxu0 0.0
    %2163 = vmatpush2.msra.mxu0 0.0
    %2164 = vmatprep.mubr.f32.mxu0 0.0
    %2165 = vmatmul.mubr.f32.gmra.mxu0 %v40
    %v2166 = vpop.f32.mrf.mxu0
    %v2167 = vadd.f32 %v36, %v2166
    %v2168 = vpop.f32.mrf.mxu0
    %2169 = vdwg.mxu0
    %v2170 = vmax.f32 %v2167, 0.0
    %s2171 = scalar_lea.vmem %s0, 240
    %v2172 = vld [vmem:[%s2171] sm:$0xff]
    %v2173 = vld [vmem:[%s2171 + $0x8] sm:$0xff]
    %v2174 = vld [vmem:[%s2171 + $0x10] sm:$0xff]
    %v2175 = vld [vmem:[%s2171 + $0x18] sm:$0xff]
    %v2176 = vld [vmem:[%s2171 + $0x20] sm:$0xff]
    %v2177 = vld [vmem:[%s2171 + $0x28] sm:$0xff]
    %v2178 = vld [vmem:[%s2171 + $0x30] sm:$0xff]
    %v2179 = vld [vmem:[%s2171 + $0x38] sm:$0xff]
    %v2180 = vld [vmem:[%s2171 + $0x40] sm:$0xff]
    %v2181 = vld [vmem:[%s2171 + $0x48] sm:$0x7]
    %v2183 = vsel %vm42, %v2181, 0
    %2185 = vmatprep.subr.mxu0 0.0
    %2186 = vmatpush1.msra.mxu0 0.0
    %2187 = vmatprep.subr.mxu0 0.0
    %2188 = vmatpush1.msra.mxu0 0.0
    %2189 = vmatprep.subr.mxu0 0.0
    %2190 = vmatpush1.msra.mxu0 0.0
    %2191 = vmatprep.subr.mxu0 0.0
    %2192 = vmatpush1.msra.mxu0 0.0
    %2193 = vmatprep.subr.mxu0 0.0
    %2194 = vmatpush1.msra.mxu0 0.0
    %2195 = vmatprep.subr.mxu0 0.0
    %2196 = vmatpush1.msra.mxu0 0.0
    %2197 = vmatprep.subr.mxu0 0.0
    %2198 = vmatpush1.msra.mxu0 %v2183
    %2199 = vmatprep.subr.mxu0 0.0
    %2200 = vmatpush1.msra.mxu0 %v2180
    %2201 = vmatprep.subr.mxu0 0.0
    %2202 = vmatpush1.msra.mxu0 %v2179
    %2203 = vmatprep.subr.mxu0 0.0
    %2204 = vmatpush1.msra.mxu0 %v2178
    %2205 = vmatprep.subr.mxu0 0.0
    %2206 = vmatpush1.msra.mxu0 %v2177
    %2207 = vmatprep.subr.mxu0 0.0
    %2208 = vmatpush1.msra.mxu0 %v2176
    %2209 = vmatprep.subr.mxu0 0.0
    %2210 = vmatpush1.msra.mxu0 %v2175
    %2211 = vmatprep.subr.mxu0 0.0
    %2212 = vmatpush1.msra.mxu0 %v2174
    %2213 = vmatprep.subr.mxu0 0.0
    %2214 = vmatpush1.msra.mxu0 %v2173
    %2215 = vmatprep.subr.mxu0 0.0
    %2216 = vmatpush1.msra.mxu0 %v2172
    %2217 = vmatprep.subr.mxu0 0.0
    %2218 = vmatpush2.msra.mxu0 0.0
    %2219 = vmatprep.subr.mxu0 0.0
    %2220 = vmatpush2.msra.mxu0 0.0
    %2221 = vmatprep.subr.mxu0 0.0
    %2222 = vmatpush2.msra.mxu0 0.0
    %2223 = vmatprep.subr.mxu0 0.0
    %2224 = vmatpush2.msra.mxu0 0.0
    %2225 = vmatprep.subr.mxu0 0.0
    %2226 = vmatpush2.msra.mxu0 0.0
    %2227 = vmatprep.subr.mxu0 0.0
    %2228 = vmatpush2.msra.mxu0 0.0
    %2229 = vmatprep.subr.mxu0 0.0
    %2230 = vmatpush2.msra.mxu0 0.0
    %2231 = vmatprep.subr.mxu0 0.0
    %2232 = vmatpush2.msra.mxu0 0.0
    %2233 = vmatprep.subr.mxu0 0.0
    %2234 = vmatpush2.msra.mxu0 0.0
    %2235 = vmatprep.subr.mxu0 0.0
    %2236 = vmatpush2.msra.mxu0 0.0
    %2237 = vmatprep.subr.mxu0 0.0
    %2238 = vmatpush2.msra.mxu0 0.0
    %2239 = vmatprep.subr.mxu0 0.0
    %2240 = vmatpush2.msra.mxu0 0.0
    %2241 = vmatprep.subr.mxu0 0.0
    %2242 = vmatpush2.msra.mxu0 0.0
    %2243 = vmatprep.subr.mxu0 0.0
    %2244 = vmatpush2.msra.mxu0 0.0
    %2245 = vmatprep.subr.mxu0 0.0
    %2246 = vmatpush2.msra.mxu0 0.0
    %2247 = vmatprep.subr.mxu0 0.0
    %2248 = vmatpush2.msra.mxu0 0.0
    %2249 = vmatprep.mubr.f32.mxu0 0.0
    %2250 = vmatmul.mubr.f32.gmra.mxu0 %v40
    %v2251 = vpop.f32.mrf.mxu0
    %v2252 = vadd.f32 %v36, %v2251
    %v2253 = vpop.f32.mrf.mxu0
    %2254 = vdwg.mxu0
    %v2255 = vmax.f32 %v2252, 0.0
    %v2256 = vmax.f32 %v2170, %v2255
    %s2257 = scalar_lea.vmem %s0, 400
    %v2258 = vld [vmem:[%s2257] sm:$0xff]
    %v2259 = vld [vmem:[%s2257 + $0x8] sm:$0xff]
    %v2260 = vld [vmem:[%s2257 + $0x10] sm:$0xff]
    %v2261 = vld [vmem:[%s2257 + $0x18] sm:$0xff]
    %v2262 = vld [vmem:[%s2257 + $0x20] sm:$0xff]
    %v2263 = vld [vmem:[%s2257 + $0x28] sm:$0xff]
    %v2264 = vld [vmem:[%s2257 + $0x30] sm:$0xff]
    %v2265 = vld [vmem:[%s2257 + $0x38] sm:$0xff]
    %v2266 = vld [vmem:[%s2257 + $0x40] sm:$0xff]
    %v2267 = vld [vmem:[%s2257 + $0x48] sm:$0x7]
    %v2269 = vsel %vm42, %v2267, 0
    %2271 = vmatprep.subr.mxu0 0.0
    %2272 = vmatpush1.msra.mxu0 0.0
    %2273 = vmatprep.subr.mxu0 0.0
    %2274 = vmatpush1.msra.mxu0 0.0
    %2275 = vmatprep.subr.mxu0 0.0
    %2276 = vmatpush1.msra.mxu0 0.0
    %2277 = vmatprep.subr.mxu0 0.0
    %2278 = vmatpush1.msra.mxu0 0.0
    %2279 = vmatprep.subr.mxu0 0.0
    %2280 = vmatpush1.msra.mxu0 0.0
    %2281 = vmatprep.subr.mxu0 0.0
    %2282 = vmatpush1.msra.mxu0 0.0
    %2283 = vmatprep.subr.mxu0 0.0
    %2284 = vmatpush1.msra.mxu0 %v2269
    %2285 = vmatprep.subr.mxu0 0.0
    %2286 = vmatpush1.msra.mxu0 %v2266
    %2287 = vmatprep.subr.mxu0 0.0
    %2288 = vmatpush1.msra.mxu0 %v2265
    %2289 = vmatprep.subr.mxu0 0.0
    %2290 = vmatpush1.msra.mxu0 %v2264
    %2291 = vmatprep.subr.mxu0 0.0
    %2292 = vmatpush1.msra.mxu0 %v2263
    %2293 = vmatprep.subr.mxu0 0.0
    %2294 = vmatpush1.msra.mxu0 %v2262
    %2295 = vmatprep.subr.mxu0 0.0
    %2296 = vmatpush1.msra.mxu0 %v2261
    %2297 = vmatprep.subr.mxu0 0.0
    %2298 = vmatpush1.msra.mxu0 %v2260
    %2299 = vmatprep.subr.mxu0 0.0
    %2300 = vmatpush1.msra.mxu0 %v2259
    %2301 = vmatprep.subr.mxu0 0.0
    %2302 = vmatpush1.msra.mxu0 %v2258
    %2303 = vmatprep.subr.mxu0 0.0
    %2304 = vmatpush2.msra.mxu0 0.0
    %2305 = vmatprep.subr.mxu0 0.0
    %2306 = vmatpush2.msra.mxu0 0.0
    %2307 = vmatprep.subr.mxu0 0.0
    %2308 = vmatpush2.msra.mxu0 0.0
    %2309 = vmatprep.subr.mxu0 0.0
    %2310 = vmatpush2.msra.mxu0 0.0
    %2311 = vmatprep.subr.mxu0 0.0
    %2312 = vmatpush2.msra.mxu0 0.0
    %2313 = vmatprep.subr.mxu0 0.0
    %2314 = vmatpush2.msra.mxu0 0.0
    %2315 = vmatprep.subr.mxu0 0.0
    %2316 = vmatpush2.msra.mxu0 0.0
    %2317 = vmatprep.subr.mxu0 0.0
    %2318 = vmatpush2.msra.mxu0 0.0
    %2319 = vmatprep.subr.mxu0 0.0
    %2320 = vmatpush2.msra.mxu0 0.0
    %2321 = vmatprep.subr.mxu0 0.0
    %2322 = vmatpush2.msra.mxu0 0.0
    %2323 = vmatprep.subr.mxu0 0.0
    %2324 = vmatpush2.msra.mxu0 0.0
    %2325 = vmatprep.subr.mxu0 0.0
    %2326 = vmatpush2.msra.mxu0 0.0
    %2327 = vmatprep.subr.mxu0 0.0
    %2328 = vmatpush2.msra.mxu0 0.0
    %2329 = vmatprep.subr.mxu0 0.0
    %2330 = vmatpush2.msra.mxu0 0.0
    %2331 = vmatprep.subr.mxu0 0.0
    %2332 = vmatpush2.msra.mxu0 0.0
    %2333 = vmatprep.subr.mxu0 0.0
    %2334 = vmatpush2.msra.mxu0 0.0
    %2335 = vmatprep.mubr.f32.mxu0 0.0
    %2336 = vmatmul.mubr.f32.gmra.mxu0 %v40
    %v2337 = vpop.f32.mrf.mxu0
    %v2338 = vadd.f32 %v36, %v2337
    %v2339 = vpop.f32.mrf.mxu0
    %2340 = vdwg.mxu0
    %v2341 = vmax.f32 %v2338, 0.0
    %v2342 = vmax.f32 %v2256, %v2341
    %s2343 = scalar_lea.vmem %s0, 560
    %v2344 = vld [vmem:[%s2343] sm:$0xff]
    %v2345 = vld [vmem:[%s2343 + $0x8] sm:$0xff]
    %v2346 = vld [vmem:[%s2343 + $0x10] sm:$0xff]
    %v2347 = vld [vmem:[%s2343 + $0x18] sm:$0xff]
    %v2348 = vld [vmem:[%s2343 + $0x20] sm:$0xff]
    %v2349 = vld [vmem:[%s2343 + $0x28] sm:$0xff]
    %v2350 = vld [vmem:[%s2343 + $0x30] sm:$0xff]
    %v2351 = vld [vmem:[%s2343 + $0x38] sm:$0xff]
    %v2352 = vld [vmem:[%s2343 + $0x40] sm:$0xff]
    %v2353 = vld [vmem:[%s2343 + $0x48] sm:$0x7]
    %v2355 = vsel %vm42, %v2353, 0
    %2357 = vmatprep.subr.mxu0 0.0
    %2358 = vmatpush1.msra.mxu0 0.0
    %2359 = vmatprep.subr.mxu0 0.0
    %2360 = vmatpush1.msra.mxu0 0.0
    %2361 = vmatprep.subr.mxu0 0.0
    %2362 = vmatpush1.msra.mxu0 0.0
    %2363 = vmatprep.subr.mxu0 0.0
    %2364 = vmatpush1.msra.mxu0 0.0
    %2365 = vmatprep.subr.mxu0 0.0
    %2366 = vmatpush1.msra.mxu0 0.0
    %2367 = vmatprep.subr.mxu0 0.0
    %2368 = vmatpush1.msra.mxu0 0.0
    %2369 = vmatprep.subr.mxu0 0.0
    %2370 = vmatpush1.msra.mxu0 %v2355
    %2371 = vmatprep.subr.mxu0 0.0
    %2372 = vmatpush1.msra.mxu0 %v2352
    %2373 = vmatprep.subr.mxu0 0.0
    %2374 = vmatpush1.msra.mxu0 %v2351
    %2375 = vmatprep.subr.mxu0 0.0
    %2376 = vmatpush1.msra.mxu0 %v2350
    %2377 = vmatprep.subr.mxu0 0.0
    %2378 = vmatpush1.msra.mxu0 %v2349
    %2379 = vmatprep.subr.mxu0 0.0
    %2380 = vmatpush1.msra.mxu0 %v2348
    %2381 = vmatprep.subr.mxu0 0.0
    %2382 = vmatpush1.msra.mxu0 %v2347
    %2383 = vmatprep.subr.mxu0 0.0
    %2384 = vmatpush1.msra.mxu0 %v2346
    %2385 = vmatprep.subr.mxu0 0.0
    %2386 = vmatpush1.msra.mxu0 %v2345
    %2387 = vmatprep.subr.mxu0 0.0
    %2388 = vmatpush1.msra.mxu0 %v2344
    %2389 = vmatprep.subr.mxu0 0.0
    %2390 = vmatpush2.msra.mxu0 0.0
    %2391 = vmatprep.subr.mxu0 0.0
    %2392 = vmatpush2.msra.mxu0 0.0
    %2393 = vmatprep.subr.mxu0 0.0
    %2394 = vmatpush2.msra.mxu0 0.0
    %2395 = vmatprep.subr.mxu0 0.0
    %2396 = vmatpush2.msra.mxu0 0.0
    %2397 = vmatprep.subr.mxu0 0.0
    %2398 = vmatpush2.msra.mxu0 0.0
    %2399 = vmatprep.subr.mxu0 0.0
    %2400 = vmatpush2.msra.mxu0 0.0
    %2401 = vmatprep.subr.mxu0 0.0
    %2402 = vmatpush2.msra.mxu0 0.0
    %2403 = vmatprep.subr.mxu0 0.0
    %2404 = vmatpush2.msra.mxu0 0.0
    %2405 = vmatprep.subr.mxu0 0.0
    %2406 = vmatpush2.msra.mxu0 0.0
    %2407 = vmatprep.subr.mxu0 0.0
    %2408 = vmatpush2.msra.mxu0 0.0
    %2409 = vmatprep.subr.mxu0 0.0
    %2410 = vmatpush2.msra.mxu0 0.0
    %2411 = vmatprep.subr.mxu0 0.0
    %2412 = vmatpush2.msra.mxu0 0.0
    %2413 = vmatprep.subr.mxu0 0.0
    %2414 = vmatpush2.msra.mxu0 0.0
    %2415 = vmatprep.subr.mxu0 0.0
    %2416 = vmatpush2.msra.mxu0 0.0
    %2417 = vmatprep.subr.mxu0 0.0
    %2418 = vmatpush2.msra.mxu0 0.0
    %2419 = vmatprep.subr.mxu0 0.0
    %2420 = vmatpush2.msra.mxu0 0.0
    %2421 = vmatprep.mubr.f32.mxu0 0.0
    %2422 = vmatmul.mubr.f32.gmra.mxu0 %v40
    %v2423 = vpop.f32.mrf.mxu0
    %v2424 = vadd.f32 %v36, %v2423
    %v2425 = vpop.f32.mrf.mxu0
    %2426 = vdwg.mxu0
    %v2427 = vmax.f32 %v2424, 0.0
    %v2428 = vmax.f32 %v2342, %v2427
    %s2429 = scalar_lea.vmem %s0, 720
    %v2430 = vld [vmem:[%s2429] sm:$0xff]
    %v2431 = vld [vmem:[%s2429 + $0x8] sm:$0xff]
    %v2432 = vld [vmem:[%s2429 + $0x10] sm:$0xff]
    %v2433 = vld [vmem:[%s2429 + $0x18] sm:$0xff]
    %v2434 = vld [vmem:[%s2429 + $0x20] sm:$0xff]
    %v2435 = vld [vmem:[%s2429 + $0x28] sm:$0xff]
    %v2436 = vld [vmem:[%s2429 + $0x30] sm:$0xff]
    %v2437 = vld [vmem:[%s2429 + $0x38] sm:$0xff]
    %v2438 = vld [vmem:[%s2429 + $0x40] sm:$0xff]
    %v2439 = vld [vmem:[%s2429 + $0x48] sm:$0x7]
    %v2441 = vsel %vm42, %v2439, 0
    %2443 = vmatprep.subr.mxu0 0.0
    %2444 = vmatpush1.msra.mxu0 0.0
    %2445 = vmatprep.subr.mxu0 0.0
    %2446 = vmatpush1.msra.mxu0 0.0
    %2447 = vmatprep.subr.mxu0 0.0
    %2448 = vmatpush1.msra.mxu0 0.0
    %2449 = vmatprep.subr.mxu0 0.0
    %2450 = vmatpush1.msra.mxu0 0.0
    %2451 = vmatprep.subr.mxu0 0.0
    %2452 = vmatpush1.msra.mxu0 0.0
    %2453 = vmatprep.subr.mxu0 0.0
    %2454 = vmatpush1.msra.mxu0 0.0
    %2455 = vmatprep.subr.mxu0 0.0
    %2456 = vmatpush1.msra.mxu0 %v2441
    %2457 = vmatprep.subr.mxu0 0.0
    %2458 = vmatpush1.msra.mxu0 %v2438
    %2459 = vmatprep.subr.mxu0 0.0
    %2460 = vmatpush1.msra.mxu0 %v2437
    %2461 = vmatprep.subr.mxu0 0.0
    %2462 = vmatpush1.msra.mxu0 %v2436
    %2463 = vmatprep.subr.mxu0 0.0
    %2464 = vmatpush1.msra.mxu0 %v2435
    %2465 = vmatprep.subr.mxu0 0.0
    %2466 = vmatpush1.msra.mxu0 %v2434
    %2467 = vmatprep.subr.mxu0 0.0
    %2468 = vmatpush1.msra.mxu0 %v2433
    %2469 = vmatprep.subr.mxu0 0.0
    %2470 = vmatpush1.msra.mxu0 %v2432
    %2471 = vmatprep.subr.mxu0 0.0
    %2472 = vmatpush1.msra.mxu0 %v2431
    %2473 = vmatprep.subr.mxu0 0.0
    %2474 = vmatpush1.msra.mxu0 %v2430
    %2475 = vmatprep.subr.mxu0 0.0
    %2476 = vmatpush2.msra.mxu0 0.0
    %2477 = vmatprep.subr.mxu0 0.0
    %2478 = vmatpush2.msra.mxu0 0.0
    %2479 = vmatprep.subr.mxu0 0.0
    %2480 = vmatpush2.msra.mxu0 0.0
    %2481 = vmatprep.subr.mxu0 0.0
    %2482 = vmatpush2.msra.mxu0 0.0
    %2483 = vmatprep.subr.mxu0 0.0
    %2484 = vmatpush2.msra.mxu0 0.0
    %2485 = vmatprep.subr.mxu0 0.0
    %2486 = vmatpush2.msra.mxu0 0.0
    %2487 = vmatprep.subr.mxu0 0.0
    %2488 = vmatpush2.msra.mxu0 0.0
    %2489 = vmatprep.subr.mxu0 0.0
    %2490 = vmatpush2.msra.mxu0 0.0
    %2491 = vmatprep.subr.mxu0 0.0
    %2492 = vmatpush2.msra.mxu0 0.0
    %2493 = vmatprep.subr.mxu0 0.0
    %2494 = vmatpush2.msra.mxu0 0.0
    %2495 = vmatprep.subr.mxu0 0.0
    %2496 = vmatpush2.msra.mxu0 0.0
    %2497 = vmatprep.subr.mxu0 0.0
    %2498 = vmatpush2.msra.mxu0 0.0
    %2499 = vmatprep.subr.mxu0 0.0
    %2500 = vmatpush2.msra.mxu0 0.0
    %2501 = vmatprep.subr.mxu0 0.0
    %2502 = vmatpush2.msra.mxu0 0.0
    %2503 = vmatprep.subr.mxu0 0.0
    %2504 = vmatpush2.msra.mxu0 0.0
    %2505 = vmatprep.subr.mxu0 0.0
    %2506 = vmatpush2.msra.mxu0 0.0
    %2507 = vmatprep.mubr.f32.mxu0 0.0
    %2508 = vmatmul.mubr.f32.gmra.mxu0 %v40
    %v2509 = vpop.f32.mrf.mxu0
    %v2510 = vadd.f32 %v36, %v2509
    %v2511 = vpop.f32.mrf.mxu0
    %2512 = vdwg.mxu0
    %v2513 = vmax.f32 %v2510, 0.0
    %v2514 = vmax.f32 %v2428, %v2513
    %s2515 = scalar_lea.vmem %s0, 880
    %v2516 = vld [vmem:[%s2515] sm:$0xff]
    %v2517 = vld [vmem:[%s2515 + $0x8] sm:$0xff]
    %v2518 = vld [vmem:[%s2515 + $0x10] sm:$0xff]
    %v2519 = vld [vmem:[%s2515 + $0x18] sm:$0xff]
    %v2520 = vld [vmem:[%s2515 + $0x20] sm:$0xff]
    %v2521 = vld [vmem:[%s2515 + $0x28] sm:$0xff]
    %v2522 = vld [vmem:[%s2515 + $0x30] sm:$0xff]
    %v2523 = vld [vmem:[%s2515 + $0x38] sm:$0xff]
    %v2524 = vld [vmem:[%s2515 + $0x40] sm:$0xff]
    %v2525 = vld [vmem:[%s2515 + $0x48] sm:$0x7]
    %v2527 = vsel %vm42, %v2525, 0
    %2529 = vmatprep.subr.mxu0 0.0
    %2530 = vmatpush1.msra.mxu0 0.0
    %2531 = vmatprep.subr.mxu0 0.0
    %2532 = vmatpush1.msra.mxu0 0.0
    %2533 = vmatprep.subr.mxu0 0.0
    %2534 = vmatpush1.msra.mxu0 0.0
    %2535 = vmatprep.subr.mxu0 0.0
    %2536 = vmatpush1.msra.mxu0 0.0
    %2537 = vmatprep.subr.mxu0 0.0
    %2538 = vmatpush1.msra.mxu0 0.0
    %2539 = vmatprep.subr.mxu0 0.0
    %2540 = vmatpush1.msra.mxu0 0.0
    %2541 = vmatprep.subr.mxu0 0.0
    %2542 = vmatpush1.msra.mxu0 %v2527
    %2543 = vmatprep.subr.mxu0 0.0
    %2544 = vmatpush1.msra.mxu0 %v2524
    %2545 = vmatprep.subr.mxu0 0.0
    %2546 = vmatpush1.msra.mxu0 %v2523
    %2547 = vmatprep.subr.mxu0 0.0
    %2548 = vmatpush1.msra.mxu0 %v2522
    %2549 = vmatprep.subr.mxu0 0.0
    %2550 = vmatpush1.msra.mxu0 %v2521
    %2551 = vmatprep.subr.mxu0 0.0
    %2552 = vmatpush1.msra.mxu0 %v2520
    %2553 = vmatprep.subr.mxu0 0.0
    %2554 = vmatpush1.msra.mxu0 %v2519
    %2555 = vmatprep.subr.mxu0 0.0
    %2556 = vmatpush1.msra.mxu0 %v2518
    %2557 = vmatprep.subr.mxu0 0.0
    %2558 = vmatpush1.msra.mxu0 %v2517
    %2559 = vmatprep.subr.mxu0 0.0
    %2560 = vmatpush1.msra.mxu0 %v2516
    %2561 = vmatprep.subr.mxu0 0.0
    %2562 = vmatpush2.msra.mxu0 0.0
    %2563 = vmatprep.subr.mxu0 0.0
    %2564 = vmatpush2.msra.mxu0 0.0
    %2565 = vmatprep.subr.mxu0 0.0
    %2566 = vmatpush2.msra.mxu0 0.0
    %2567 = vmatprep.subr.mxu0 0.0
    %2568 = vmatpush2.msra.mxu0 0.0
    %2569 = vmatprep.subr.mxu0 0.0
    %2570 = vmatpush2.msra.mxu0 0.0
    %2571 = vmatprep.subr.mxu0 0.0
    %2572 = vmatpush2.msra.mxu0 0.0
    %2573 = vmatprep.subr.mxu0 0.0
    %2574 = vmatpush2.msra.mxu0 0.0
    %2575 = vmatprep.subr.mxu0 0.0
    %2576 = vmatpush2.msra.mxu0 0.0
    %2577 = vmatprep.subr.mxu0 0.0
    %2578 = vmatpush2.msra.mxu0 0.0
    %2579 = vmatprep.subr.mxu0 0.0
    %2580 = vmatpush2.msra.mxu0 0.0
    %2581 = vmatprep.subr.mxu0 0.0
    %2582 = vmatpush2.msra.mxu0 0.0
    %2583 = vmatprep.subr.mxu0 0.0
    %2584 = vmatpush2.msra.mxu0 0.0
    %2585 = vmatprep.subr.mxu0 0.0
    %2586 = vmatpush2.msra.mxu0 0.0
    %2587 = vmatprep.subr.mxu0 0.0
    %2588 = vmatpush2.msra.mxu0 0.0
    %2589 = vmatprep.subr.mxu0 0.0
    %2590 = vmatpush2.msra.mxu0 0.0
    %2591 = vmatprep.subr.mxu0 0.0
    %2592 = vmatpush2.msra.mxu0 0.0
    %2593 = vmatprep.mubr.f32.mxu0 0.0
    %2594 = vmatmul.mubr.f32.gmra.mxu0 %v40
    %v2595 = vpop.f32.mrf.mxu0
    %v2596 = vadd.f32 %v36, %v2595
    %v2597 = vpop.f32.mrf.mxu0
    %2598 = vdwg.mxu0
    %v2599 = vmax.f32 %v2596, 0.0
    %v2600 = vmax.f32 %v2514, %v2599
    %s2601 = scalar_lea.vmem %s0, 1040
    %v2602 = vld [vmem:[%s2601] sm:$0xff]
    %v2603 = vld [vmem:[%s2601 + $0x8] sm:$0xff]
    %v2604 = vld [vmem:[%s2601 + $0x10] sm:$0xff]
    %v2605 = vld [vmem:[%s2601 + $0x18] sm:$0xff]
    %v2606 = vld [vmem:[%s2601 + $0x20] sm:$0xff]
    %v2607 = vld [vmem:[%s2601 + $0x28] sm:$0xff]
    %v2608 = vld [vmem:[%s2601 + $0x30] sm:$0xff]
    %v2609 = vld [vmem:[%s2601 + $0x38] sm:$0xff]
    %v2610 = vld [vmem:[%s2601 + $0x40] sm:$0xff]
    %v2611 = vld [vmem:[%s2601 + $0x48] sm:$0x7]
    %v2613 = vsel %vm42, %v2611, 0
    %2615 = vmatprep.subr.mxu0 0.0
    %2616 = vmatpush1.msra.mxu0 0.0
    %2617 = vmatprep.subr.mxu0 0.0
    %2618 = vmatpush1.msra.mxu0 0.0
    %2619 = vmatprep.subr.mxu0 0.0
    %2620 = vmatpush1.msra.mxu0 0.0
    %2621 = vmatprep.subr.mxu0 0.0
    %2622 = vmatpush1.msra.mxu0 0.0
    %2623 = vmatprep.subr.mxu0 0.0
    %2624 = vmatpush1.msra.mxu0 0.0
    %2625 = vmatprep.subr.mxu0 0.0
    %2626 = vmatpush1.msra.mxu0 0.0
    %2627 = vmatprep.subr.mxu0 0.0
    %2628 = vmatpush1.msra.mxu0 %v2613
    %2629 = vmatprep.subr.mxu0 0.0
    %2630 = vmatpush1.msra.mxu0 %v2610
    %2631 = vmatprep.subr.mxu0 0.0
    %2632 = vmatpush1.msra.mxu0 %v2609
    %2633 = vmatprep.subr.mxu0 0.0
    %2634 = vmatpush1.msra.mxu0 %v2608
    %2635 = vmatprep.subr.mxu0 0.0
    %2636 = vmatpush1.msra.mxu0 %v2607
    %2637 = vmatprep.subr.mxu0 0.0
    %2638 = vmatpush1.msra.mxu0 %v2606
    %2639 = vmatprep.subr.mxu0 0.0
    %2640 = vmatpush1.msra.mxu0 %v2605
    %2641 = vmatprep.subr.mxu0 0.0
    %2642 = vmatpush1.msra.mxu0 %v2604
    %2643 = vmatprep.subr.mxu0 0.0
    %2644 = vmatpush1.msra.mxu0 %v2603
    %2645 = vmatprep.subr.mxu0 0.0
    %2646 = vmatpush1.msra.mxu0 %v2602
    %2647 = vmatprep.subr.mxu0 0.0
    %2648 = vmatpush2.msra.mxu0 0.0
    %2649 = vmatprep.subr.mxu0 0.0
    %2650 = vmatpush2.msra.mxu0 0.0
    %2651 = vmatprep.subr.mxu0 0.0
    %2652 = vmatpush2.msra.mxu0 0.0
    %2653 = vmatprep.subr.mxu0 0.0
    %2654 = vmatpush2.msra.mxu0 0.0
    %2655 = vmatprep.subr.mxu0 0.0
    %2656 = vmatpush2.msra.mxu0 0.0
    %2657 = vmatprep.subr.mxu0 0.0
    %2658 = vmatpush2.msra.mxu0 0.0
    %2659 = vmatprep.subr.mxu0 0.0
    %2660 = vmatpush2.msra.mxu0 0.0
    %2661 = vmatprep.subr.mxu0 0.0
    %2662 = vmatpush2.msra.mxu0 0.0
    %2663 = vmatprep.subr.mxu0 0.0
    %2664 = vmatpush2.msra.mxu0 0.0
    %2665 = vmatprep.subr.mxu0 0.0
    %2666 = vmatpush2.msra.mxu0 0.0
    %2667 = vmatprep.subr.mxu0 0.0
    %2668 = vmatpush2.msra.mxu0 0.0
    %2669 = vmatprep.subr.mxu0 0.0
    %2670 = vmatpush2.msra.mxu0 0.0
    %2671 = vmatprep.subr.mxu0 0.0
    %2672 = vmatpush2.msra.mxu0 0.0
    %2673 = vmatprep.subr.mxu0 0.0
    %2674 = vmatpush2.msra.mxu0 0.0
    %2675 = vmatprep.subr.mxu0 0.0
    %2676 = vmatpush2.msra.mxu0 0.0
    %2677 = vmatprep.subr.mxu0 0.0
    %2678 = vmatpush2.msra.mxu0 0.0
    %2679 = vmatprep.mubr.f32.mxu0 0.0
    %2680 = vmatmul.mubr.f32.gmra.mxu0 %v40
    %v2681 = vpop.f32.mrf.mxu0
    %v2682 = vadd.f32 %v36, %v2681
    %v2683 = vpop.f32.mrf.mxu0
    %2684 = vdwg.mxu0
    %v2685 = vmax.f32 %v2682, 0.0
    %v2686 = vmax.f32 %v2600, %v2685
    %s2687 = scalar_lea.vmem %s0, 1200
    %v2688 = vld [vmem:[%s2687] sm:$0xff]
    %v2689 = vld [vmem:[%s2687 + $0x8] sm:$0xff]
    %v2690 = vld [vmem:[%s2687 + $0x10] sm:$0xff]
    %v2691 = vld [vmem:[%s2687 + $0x18] sm:$0xff]
    %v2692 = vld [vmem:[%s2687 + $0x20] sm:$0xff]
    %v2693 = vld [vmem:[%s2687 + $0x28] sm:$0xff]
    %v2694 = vld [vmem:[%s2687 + $0x30] sm:$0xff]
    %v2695 = vld [vmem:[%s2687 + $0x38] sm:$0xff]
    %v2696 = vld [vmem:[%s2687 + $0x40] sm:$0xff]
    %v2697 = vld [vmem:[%s2687 + $0x48] sm:$0x7]
    %v2699 = vsel %vm42, %v2697, 0
    %2701 = vmatprep.subr.mxu0 0.0
    %2702 = vmatpush1.msra.mxu0 0.0
    %2703 = vmatprep.subr.mxu0 0.0
    %2704 = vmatpush1.msra.mxu0 0.0
    %2705 = vmatprep.subr.mxu0 0.0
    %2706 = vmatpush1.msra.mxu0 0.0
    %2707 = vmatprep.subr.mxu0 0.0
    %2708 = vmatpush1.msra.mxu0 0.0
    %2709 = vmatprep.subr.mxu0 0.0
    %2710 = vmatpush1.msra.mxu0 0.0
    %2711 = vmatprep.subr.mxu0 0.0
    %2712 = vmatpush1.msra.mxu0 0.0
    %2713 = vmatprep.subr.mxu0 0.0
    %2714 = vmatpush1.msra.mxu0 %v2699
    %2715 = vmatprep.subr.mxu0 0.0
    %2716 = vmatpush1.msra.mxu0 %v2696
    %2717 = vmatprep.subr.mxu0 0.0
    %2718 = vmatpush1.msra.mxu0 %v2695
    %2719 = vmatprep.subr.mxu0 0.0
    %2720 = vmatpush1.msra.mxu0 %v2694
    %2721 = vmatprep.subr.mxu0 0.0
    %2722 = vmatpush1.msra.mxu0 %v2693
    %2723 = vmatprep.subr.mxu0 0.0
    %2724 = vmatpush1.msra.mxu0 %v2692
    %2725 = vmatprep.subr.mxu0 0.0
    %2726 = vmatpush1.msra.mxu0 %v2691
    %2727 = vmatprep.subr.mxu0 0.0
    %2728 = vmatpush1.msra.mxu0 %v2690
    %2729 = vmatprep.subr.mxu0 0.0
    %2730 = vmatpush1.msra.mxu0 %v2689
    %2731 = vmatprep.subr.mxu0 0.0
    %2732 = vmatpush1.msra.mxu0 %v2688
    %2733 = vmatprep.subr.mxu0 0.0
    %2734 = vmatpush2.msra.mxu0 0.0
    %2735 = vmatprep.subr.mxu0 0.0
    %2736 = vmatpush2.msra.mxu0 0.0
    %2737 = vmatprep.subr.mxu0 0.0
    %2738 = vmatpush2.msra.mxu0 0.0
    %2739 = vmatprep.subr.mxu0 0.0
    %2740 = vmatpush2.msra.mxu0 0.0
    %2741 = vmatprep.subr.mxu0 0.0
    %2742 = vmatpush2.msra.mxu0 0.0
    %2743 = vmatprep.subr.mxu0 0.0
    %2744 = vmatpush2.msra.mxu0 0.0
    %2745 = vmatprep.subr.mxu0 0.0
    %2746 = vmatpush2.msra.mxu0 0.0
    %2747 = vmatprep.subr.mxu0 0.0
    %2748 = vmatpush2.msra.mxu0 0.0
    %2749 = vmatprep.subr.mxu0 0.0
    %2750 = vmatpush2.msra.mxu0 0.0
    %2751 = vmatprep.subr.mxu0 0.0
    %2752 = vmatpush2.msra.mxu0 0.0
    %2753 = vmatprep.subr.mxu0 0.0
    %2754 = vmatpush2.msra.mxu0 0.0
    %2755 = vmatprep.subr.mxu0 0.0
    %2756 = vmatpush2.msra.mxu0 0.0
    %2757 = vmatprep.subr.mxu0 0.0
    %2758 = vmatpush2.msra.mxu0 0.0
    %2759 = vmatprep.subr.mxu0 0.0
    %2760 = vmatpush2.msra.mxu0 0.0
    %2761 = vmatprep.subr.mxu0 0.0
    %2762 = vmatpush2.msra.mxu0 0.0
    %2763 = vmatprep.subr.mxu0 0.0
    %2764 = vmatpush2.msra.mxu0 0.0
    %2765 = vmatprep.mubr.f32.mxu0 0.0
    %2766 = vmatmul.mubr.f32.gmra.mxu0 %v40
    %v2767 = vpop.f32.mrf.mxu0
    %v2768 = vadd.f32 %v36, %v2767
    %v2769 = vpop.f32.mrf.mxu0
    %2770 = vdwg.mxu0
    %v2771 = vmax.f32 %v2768, 0.0
    %v2772 = vmax.f32 %v2686, %v2771
    %s2773 = scalar_lea.vmem %s0, 1360
    %v2774 = vld [vmem:[%s2773] sm:$0xff]
    %v2775 = vld [vmem:[%s2773 + $0x8] sm:$0xff]
    %v2776 = vld [vmem:[%s2773 + $0x10] sm:$0xff]
    %v2777 = vld [vmem:[%s2773 + $0x18] sm:$0xff]
    %v2778 = vld [vmem:[%s2773 + $0x20] sm:$0xff]
    %v2779 = vld [vmem:[%s2773 + $0x28] sm:$0xff]
    %v2780 = vld [vmem:[%s2773 + $0x30] sm:$0xff]
    %v2781 = vld [vmem:[%s2773 + $0x38] sm:$0xff]
    %v2782 = vld [vmem:[%s2773 + $0x40] sm:$0xff]
    %v2783 = vld [vmem:[%s2773 + $0x48] sm:$0x7]
    %v2785 = vsel %vm42, %v2783, 0
    %2787 = vmatprep.subr.mxu0 0.0
    %2788 = vmatpush1.msra.mxu0 0.0
    %2789 = vmatprep.subr.mxu0 0.0
    %2790 = vmatpush1.msra.mxu0 0.0
    %2791 = vmatprep.subr.mxu0 0.0
    %2792 = vmatpush1.msra.mxu0 0.0
    %2793 = vmatprep.subr.mxu0 0.0
    %2794 = vmatpush1.msra.mxu0 0.0
    %2795 = vmatprep.subr.mxu0 0.0
    %2796 = vmatpush1.msra.mxu0 0.0
    %2797 = vmatprep.subr.mxu0 0.0
    %2798 = vmatpush1.msra.mxu0 0.0
    %2799 = vmatprep.subr.mxu0 0.0
    %2800 = vmatpush1.msra.mxu0 %v2785
    %2801 = vmatprep.subr.mxu0 0.0
    %2802 = vmatpush1.msra.mxu0 %v2782
    %2803 = vmatprep.subr.mxu0 0.0
    %2804 = vmatpush1.msra.mxu0 %v2781
    %2805 = vmatprep.subr.mxu0 0.0
    %2806 = vmatpush1.msra.mxu0 %v2780
    %2807 = vmatprep.subr.mxu0 0.0
    %2808 = vmatpush1.msra.mxu0 %v2779
    %2809 = vmatprep.subr.mxu0 0.0
    %2810 = vmatpush1.msra.mxu0 %v2778
    %2811 = vmatprep.subr.mxu0 0.0
    %2812 = vmatpush1.msra.mxu0 %v2777
    %2813 = vmatprep.subr.mxu0 0.0
    %2814 = vmatpush1.msra.mxu0 %v2776
    %2815 = vmatprep.subr.mxu0 0.0
    %2816 = vmatpush1.msra.mxu0 %v2775
    %2817 = vmatprep.subr.mxu0 0.0
    %2818 = vmatpush1.msra.mxu0 %v2774
    %2819 = vmatprep.subr.mxu0 0.0
    %2820 = vmatpush2.msra.mxu0 0.0
    %2821 = vmatprep.subr.mxu0 0.0
    %2822 = vmatpush2.msra.mxu0 0.0
    %2823 = vmatprep.subr.mxu0 0.0
    %2824 = vmatpush2.msra.mxu0 0.0
    %2825 = vmatprep.subr.mxu0 0.0
    %2826 = vmatpush2.msra.mxu0 0.0
    %2827 = vmatprep.subr.mxu0 0.0
    %2828 = vmatpush2.msra.mxu0 0.0
    %2829 = vmatprep.subr.mxu0 0.0
    %2830 = vmatpush2.msra.mxu0 0.0
    %2831 = vmatprep.subr.mxu0 0.0
    %2832 = vmatpush2.msra.mxu0 0.0
    %2833 = vmatprep.subr.mxu0 0.0
    %2834 = vmatpush2.msra.mxu0 0.0
    %2835 = vmatprep.subr.mxu0 0.0
    %2836 = vmatpush2.msra.mxu0 0.0
    %2837 = vmatprep.subr.mxu0 0.0
    %2838 = vmatpush2.msra.mxu0 0.0
    %2839 = vmatprep.subr.mxu0 0.0
    %2840 = vmatpush2.msra.mxu0 0.0
    %2841 = vmatprep.subr.mxu0 0.0
    %2842 = vmatpush2.msra.mxu0 0.0
    %2843 = vmatprep.subr.mxu0 0.0
    %2844 = vmatpush2.msra.mxu0 0.0
    %2845 = vmatprep.subr.mxu0 0.0
    %2846 = vmatpush2.msra.mxu0 0.0
    %2847 = vmatprep.subr.mxu0 0.0
    %2848 = vmatpush2.msra.mxu0 0.0
    %2849 = vmatprep.subr.mxu0 0.0
    %2850 = vmatpush2.msra.mxu0 0.0
    %2851 = vmatprep.mubr.f32.mxu0 0.0
    %2852 = vmatmul.mubr.f32.gmra.mxu0 %v40
    %v2853 = vpop.f32.mrf.mxu0
    %v2854 = vadd.f32 %v36, %v2853
    %v2855 = vpop.f32.mrf.mxu0
    %2856 = vdwg.mxu0
    %v2857 = vmax.f32 %v2854, 0.0
    %v2858 = vmax.f32 %v2772, %v2857
    %s2859 = scalar_lea.vmem %s0, 1520
    %v2860 = vld [vmem:[%s2859] sm:$0xff]
    %v2861 = vld [vmem:[%s2859 + $0x8] sm:$0xff]
    %v2862 = vld [vmem:[%s2859 + $0x10] sm:$0xff]
    %v2863 = vld [vmem:[%s2859 + $0x18] sm:$0xff]
    %v2864 = vld [vmem:[%s2859 + $0x20] sm:$0xff]
    %v2865 = vld [vmem:[%s2859 + $0x28] sm:$0xff]
    %v2866 = vld [vmem:[%s2859 + $0x30] sm:$0xff]
    %v2867 = vld [vmem:[%s2859 + $0x38] sm:$0xff]
    %v2868 = vld [vmem:[%s2859 + $0x40] sm:$0xff]
    %v2869 = vld [vmem:[%s2859 + $0x48] sm:$0x7]
    %v2871 = vsel %vm42, %v2869, 0
    %2873 = vmatprep.subr.mxu0 0.0
    %2874 = vmatpush1.msra.mxu0 0.0
    %2875 = vmatprep.subr.mxu0 0.0
    %2876 = vmatpush1.msra.mxu0 0.0
    %2877 = vmatprep.subr.mxu0 0.0
    %2878 = vmatpush1.msra.mxu0 0.0
    %2879 = vmatprep.subr.mxu0 0.0
    %2880 = vmatpush1.msra.mxu0 0.0
    %2881 = vmatprep.subr.mxu0 0.0
    %2882 = vmatpush1.msra.mxu0 0.0
    %2883 = vmatprep.subr.mxu0 0.0
    %2884 = vmatpush1.msra.mxu0 0.0
    %2885 = vmatprep.subr.mxu0 0.0
    %2886 = vmatpush1.msra.mxu0 %v2871
    %2887 = vmatprep.subr.mxu0 0.0
    %2888 = vmatpush1.msra.mxu0 %v2868
    %2889 = vmatprep.subr.mxu0 0.0
    %2890 = vmatpush1.msra.mxu0 %v2867
    %2891 = vmatprep.subr.mxu0 0.0
    %2892 = vmatpush1.msra.mxu0 %v2866
    %2893 = vmatprep.subr.mxu0 0.0
    %2894 = vmatpush1.msra.mxu0 %v2865
    %2895 = vmatprep.subr.mxu0 0.0
    %2896 = vmatpush1.msra.mxu0 %v2864
    %2897 = vmatprep.subr.mxu0 0.0
    %2898 = vmatpush1.msra.mxu0 %v2863
    %2899 = vmatprep.subr.mxu0 0.0
    %2900 = vmatpush1.msra.mxu0 %v2862
    %2901 = vmatprep.subr.mxu0 0.0
    %2902 = vmatpush1.msra.mxu0 %v2861
    %2903 = vmatprep.subr.mxu0 0.0
    %2904 = vmatpush1.msra.mxu0 %v2860
    %2905 = vmatprep.subr.mxu0 0.0
    %2906 = vmatpush2.msra.mxu0 0.0
    %2907 = vmatprep.subr.mxu0 0.0
    %2908 = vmatpush2.msra.mxu0 0.0
    %2909 = vmatprep.subr.mxu0 0.0
    %2910 = vmatpush2.msra.mxu0 0.0
    %2911 = vmatprep.subr.mxu0 0.0
    %2912 = vmatpush2.msra.mxu0 0.0
    %2913 = vmatprep.subr.mxu0 0.0
    %2914 = vmatpush2.msra.mxu0 0.0
    %2915 = vmatprep.subr.mxu0 0.0
    %2916 = vmatpush2.msra.mxu0 0.0
    %2917 = vmatprep.subr.mxu0 0.0
    %2918 = vmatpush2.msra.mxu0 0.0
    %2919 = vmatprep.subr.mxu0 0.0
    %2920 = vmatpush2.msra.mxu0 0.0
    %2921 = vmatprep.subr.mxu0 0.0
    %2922 = vmatpush2.msra.mxu0 0.0
    %2923 = vmatprep.subr.mxu0 0.0
    %2924 = vmatpush2.msra.mxu0 0.0
    %2925 = vmatprep.subr.mxu0 0.0
    %2926 = vmatpush2.msra.mxu0 0.0
    %2927 = vmatprep.subr.mxu0 0.0
    %2928 = vmatpush2.msra.mxu0 0.0
    %2929 = vmatprep.subr.mxu0 0.0
    %2930 = vmatpush2.msra.mxu0 0.0
    %2931 = vmatprep.subr.mxu0 0.0
    %2932 = vmatpush2.msra.mxu0 0.0
    %2933 = vmatprep.subr.mxu0 0.0
    %2934 = vmatpush2.msra.mxu0 0.0
    %2935 = vmatprep.subr.mxu0 0.0
    %2936 = vmatpush2.msra.mxu0 0.0
    %2937 = vmatprep.mubr.f32.mxu0 0.0
    %2938 = vmatmul.mubr.f32.gmra.mxu0 %v40
    %v2939 = vpop.f32.mrf.mxu0
    %v2940 = vadd.f32 %v36, %v2939
    %v2941 = vpop.f32.mrf.mxu0
    %2942 = vdwg.mxu0
    %v2943 = vmax.f32 %v2940, 0.0
    %v2944 = vmax.f32 %v2858, %v2943
    %s2945 = scalar_lea.vmem %s0, 1680
    %v2946 = vld [vmem:[%s2945] sm:$0xff]
    %v2947 = vld [vmem:[%s2945 + $0x8] sm:$0xff]
    %v2948 = vld [vmem:[%s2945 + $0x10] sm:$0xff]
    %v2949 = vld [vmem:[%s2945 + $0x18] sm:$0xff]
    %v2950 = vld [vmem:[%s2945 + $0x20] sm:$0xff]
    %v2951 = vld [vmem:[%s2945 + $0x28] sm:$0xff]
    %v2952 = vld [vmem:[%s2945 + $0x30] sm:$0xff]
    %v2953 = vld [vmem:[%s2945 + $0x38] sm:$0xff]
    %v2954 = vld [vmem:[%s2945 + $0x40] sm:$0xff]
    %v2955 = vld [vmem:[%s2945 + $0x48] sm:$0x7]
    %v2957 = vsel %vm42, %v2955, 0
    %2959 = vmatprep.subr.mxu0 0.0
    %2960 = vmatpush1.msra.mxu0 0.0
    %2961 = vmatprep.subr.mxu0 0.0
    %2962 = vmatpush1.msra.mxu0 0.0
    %2963 = vmatprep.subr.mxu0 0.0
    %2964 = vmatpush1.msra.mxu0 0.0
    %2965 = vmatprep.subr.mxu0 0.0
    %2966 = vmatpush1.msra.mxu0 0.0
    %2967 = vmatprep.subr.mxu0 0.0
    %2968 = vmatpush1.msra.mxu0 0.0
    %2969 = vmatprep.subr.mxu0 0.0
    %2970 = vmatpush1.msra.mxu0 0.0
    %2971 = vmatprep.subr.mxu0 0.0
    %2972 = vmatpush1.msra.mxu0 %v2957
    %2973 = vmatprep.subr.mxu0 0.0
    %2974 = vmatpush1.msra.mxu0 %v2954
    %2975 = vmatprep.subr.mxu0 0.0
    %2976 = vmatpush1.msra.mxu0 %v2953
    %2977 = vmatprep.subr.mxu0 0.0
    %2978 = vmatpush1.msra.mxu0 %v2952
    %2979 = vmatprep.subr.mxu0 0.0
    %2980 = vmatpush1.msra.mxu0 %v2951
    %2981 = vmatprep.subr.mxu0 0.0
    %2982 = vmatpush1.msra.mxu0 %v2950
    %2983 = vmatprep.subr.mxu0 0.0
    %2984 = vmatpush1.msra.mxu0 %v2949
    %2985 = vmatprep.subr.mxu0 0.0
    %2986 = vmatpush1.msra.mxu0 %v2948
    %2987 = vmatprep.subr.mxu0 0.0
    %2988 = vmatpush1.msra.mxu0 %v2947
    %2989 = vmatprep.subr.mxu0 0.0
    %2990 = vmatpush1.msra.mxu0 %v2946
    %2991 = vmatprep.subr.mxu0 0.0
    %2992 = vmatpush2.msra.mxu0 0.0
    %2993 = vmatprep.subr.mxu0 0.0
    %2994 = vmatpush2.msra.mxu0 0.0
    %2995 = vmatprep.subr.mxu0 0.0
    %2996 = vmatpush2.msra.mxu0 0.0
    %2997 = vmatprep.subr.mxu0 0.0
    %2998 = vmatpush2.msra.mxu0 0.0
    %2999 = vmatprep.subr.mxu0 0.0
    %3000 = vmatpush2.msra.mxu0 0.0
    %3001 = vmatprep.subr.mxu0 0.0
    %3002 = vmatpush2.msra.mxu0 0.0
    %3003 = vmatprep.subr.mxu0 0.0
    %3004 = vmatpush2.msra.mxu0 0.0
    %3005 = vmatprep.subr.mxu0 0.0
    %3006 = vmatpush2.msra.mxu0 0.0
    %3007 = vmatprep.subr.mxu0 0.0
    %3008 = vmatpush2.msra.mxu0 0.0
    %3009 = vmatprep.subr.mxu0 0.0
    %3010 = vmatpush2.msra.mxu0 0.0
    %3011 = vmatprep.subr.mxu0 0.0
    %3012 = vmatpush2.msra.mxu0 0.0
    %3013 = vmatprep.subr.mxu0 0.0
    %3014 = vmatpush2.msra.mxu0 0.0
    %3015 = vmatprep.subr.mxu0 0.0
    %3016 = vmatpush2.msra.mxu0 0.0
    %3017 = vmatprep.subr.mxu0 0.0
    %3018 = vmatpush2.msra.mxu0 0.0
    %3019 = vmatprep.subr.mxu0 0.0
    %3020 = vmatpush2.msra.mxu0 0.0
    %3021 = vmatprep.subr.mxu0 0.0
    %3022 = vmatpush2.msra.mxu0 0.0
    %3023 = vmatprep.mubr.f32.mxu0 0.0
    %3024 = vmatmul.mubr.f32.gmra.mxu0 %v40
    %v3025 = vpop.f32.mrf.mxu0
    %v3026 = vadd.f32 %v36, %v3025
    %v3027 = vpop.f32.mrf.mxu0
    %3028 = vdwg.mxu0
    %v3029 = vmax.f32 %v3026, 0.0
    %v3030 = vmax.f32 %v2944, %v3029
    %s3031 = scalar_lea.vmem %s0, 1840
    %v3032 = vld [vmem:[%s3031] sm:$0xff]
    %v3033 = vld [vmem:[%s3031 + $0x8] sm:$0xff]
    %v3034 = vld [vmem:[%s3031 + $0x10] sm:$0xff]
    %v3035 = vld [vmem:[%s3031 + $0x18] sm:$0xff]
    %v3036 = vld [vmem:[%s3031 + $0x20] sm:$0xff]
    %v3037 = vld [vmem:[%s3031 + $0x28] sm:$0xff]
    %v3038 = vld [vmem:[%s3031 + $0x30] sm:$0xff]
    %v3039 = vld [vmem:[%s3031 + $0x38] sm:$0xff]
    %v3040 = vld [vmem:[%s3031 + $0x40] sm:$0xff]
    %v3041 = vld [vmem:[%s3031 + $0x48] sm:$0x7]
    %v3043 = vsel %vm42, %v3041, 0
    %3045 = vmatprep.subr.mxu0 0.0
    %3046 = vmatpush1.msra.mxu0 0.0
    %3047 = vmatprep.subr.mxu0 0.0
    %3048 = vmatpush1.msra.mxu0 0.0
    %3049 = vmatprep.subr.mxu0 0.0
    %3050 = vmatpush1.msra.mxu0 0.0
    %3051 = vmatprep.subr.mxu0 0.0
    %3052 = vmatpush1.msra.mxu0 0.0
    %3053 = vmatprep.subr.mxu0 0.0
    %3054 = vmatpush1.msra.mxu0 0.0
    %3055 = vmatprep.subr.mxu0 0.0
    %3056 = vmatpush1.msra.mxu0 0.0
    %3057 = vmatprep.subr.mxu0 0.0
    %3058 = vmatpush1.msra.mxu0 %v3043
    %3059 = vmatprep.subr.mxu0 0.0
    %3060 = vmatpush1.msra.mxu0 %v3040
    %3061 = vmatprep.subr.mxu0 0.0
    %3062 = vmatpush1.msra.mxu0 %v3039
    %3063 = vmatprep.subr.mxu0 0.0
    %3064 = vmatpush1.msra.mxu0 %v3038
    %3065 = vmatprep.subr.mxu0 0.0
    %3066 = vmatpush1.msra.mxu0 %v3037
    %3067 = vmatprep.subr.mxu0 0.0
    %3068 = vmatpush1.msra.mxu0 %v3036
    %3069 = vmatprep.subr.mxu0 0.0
    %3070 = vmatpush1.msra.mxu0 %v3035
    %3071 = vmatprep.subr.mxu0 0.0
    %3072 = vmatpush1.msra.mxu0 %v3034
    %3073 = vmatprep.subr.mxu0 0.0
    %3074 = vmatpush1.msra.mxu0 %v3033
    %3075 = vmatprep.subr.mxu0 0.0
    %3076 = vmatpush1.msra.mxu0 %v3032
    %3077 = vmatprep.subr.mxu0 0.0
    %3078 = vmatpush2.msra.mxu0 0.0
    %3079 = vmatprep.subr.mxu0 0.0
    %3080 = vmatpush2.msra.mxu0 0.0
    %3081 = vmatprep.subr.mxu0 0.0
    %3082 = vmatpush2.msra.mxu0 0.0
    %3083 = vmatprep.subr.mxu0 0.0
    %3084 = vmatpush2.msra.mxu0 0.0
    %3085 = vmatprep.subr.mxu0 0.0
    %3086 = vmatpush2.msra.mxu0 0.0
    %3087 = vmatprep.subr.mxu0 0.0
    %3088 = vmatpush2.msra.mxu0 0.0
    %3089 = vmatprep.subr.mxu0 0.0
    %3090 = vmatpush2.msra.mxu0 0.0
    %3091 = vmatprep.subr.mxu0 0.0
    %3092 = vmatpush2.msra.mxu0 0.0
    %3093 = vmatprep.subr.mxu0 0.0
    %3094 = vmatpush2.msra.mxu0 0.0
    %3095 = vmatprep.subr.mxu0 0.0
    %3096 = vmatpush2.msra.mxu0 0.0
    %3097 = vmatprep.subr.mxu0 0.0
    %3098 = vmatpush2.msra.mxu0 0.0
    %3099 = vmatprep.subr.mxu0 0.0
    %3100 = vmatpush2.msra.mxu0 0.0
    %3101 = vmatprep.subr.mxu0 0.0
    %3102 = vmatpush2.msra.mxu0 0.0
    %3103 = vmatprep.subr.mxu0 0.0
    %3104 = vmatpush2.msra.mxu0 0.0
    %3105 = vmatprep.subr.mxu0 0.0
    %3106 = vmatpush2.msra.mxu0 0.0
    %3107 = vmatprep.subr.mxu0 0.0
    %3108 = vmatpush2.msra.mxu0 0.0
    %3109 = vmatprep.mubr.f32.mxu0 0.0
    %3110 = vmatmul.mubr.f32.gmra.mxu0 %v40
    %v3111 = vpop.f32.mrf.mxu0
    %v3112 = vadd.f32 %v36, %v3111
    %v3113 = vpop.f32.mrf.mxu0
    %3114 = vdwg.mxu0
    %v3115 = vmax.f32 %v3112, 0.0
    %v3116 = vmax.f32 %v3030, %v3115
    %s3117 = scalar_lea.vmem %s0, 2000
    %v3118 = vld [vmem:[%s3117] sm:$0xff]
    %v3119 = vld [vmem:[%s3117 + $0x8] sm:$0xff]
    %v3120 = vld [vmem:[%s3117 + $0x10] sm:$0xff]
    %v3121 = vld [vmem:[%s3117 + $0x18] sm:$0xff]
    %v3122 = vld [vmem:[%s3117 + $0x20] sm:$0xff]
    %v3123 = vld [vmem:[%s3117 + $0x28] sm:$0xff]
    %v3124 = vld [vmem:[%s3117 + $0x30] sm:$0xff]
    %v3125 = vld [vmem:[%s3117 + $0x38] sm:$0xff]
    %v3126 = vld [vmem:[%s3117 + $0x40] sm:$0xff]
    %v3127 = vld [vmem:[%s3117 + $0x48] sm:$0x7]
    %v3129 = vsel %vm42, %v3127, 0
    %3131 = vmatprep.subr.mxu0 0.0
    %3132 = vmatpush1.msra.mxu0 0.0
    %3133 = vmatprep.subr.mxu0 0.0
    %3134 = vmatpush1.msra.mxu0 0.0
    %3135 = vmatprep.subr.mxu0 0.0
    %3136 = vmatpush1.msra.mxu0 0.0
    %3137 = vmatprep.subr.mxu0 0.0
    %3138 = vmatpush1.msra.mxu0 0.0
    %3139 = vmatprep.subr.mxu0 0.0
    %3140 = vmatpush1.msra.mxu0 0.0
    %3141 = vmatprep.subr.mxu0 0.0
    %3142 = vmatpush1.msra.mxu0 0.0
    %3143 = vmatprep.subr.mxu0 0.0
    %3144 = vmatpush1.msra.mxu0 %v3129
    %3145 = vmatprep.subr.mxu0 0.0
    %3146 = vmatpush1.msra.mxu0 %v3126
    %3147 = vmatprep.subr.mxu0 0.0
    %3148 = vmatpush1.msra.mxu0 %v3125
    %3149 = vmatprep.subr.mxu0 0.0
    %3150 = vmatpush1.msra.mxu0 %v3124
    %3151 = vmatprep.subr.mxu0 0.0
    %3152 = vmatpush1.msra.mxu0 %v3123
    %3153 = vmatprep.subr.mxu0 0.0
    %3154 = vmatpush1.msra.mxu0 %v3122
    %3155 = vmatprep.subr.mxu0 0.0
    %3156 = vmatpush1.msra.mxu0 %v3121
    %3157 = vmatprep.subr.mxu0 0.0
    %3158 = vmatpush1.msra.mxu0 %v3120
    %3159 = vmatprep.subr.mxu0 0.0
    %3160 = vmatpush1.msra.mxu0 %v3119
    %3161 = vmatprep.subr.mxu0 0.0
    %3162 = vmatpush1.msra.mxu0 %v3118
    %3163 = vmatprep.subr.mxu0 0.0
    %3164 = vmatpush2.msra.mxu0 0.0
    %3165 = vmatprep.subr.mxu0 0.0
    %3166 = vmatpush2.msra.mxu0 0.0
    %3167 = vmatprep.subr.mxu0 0.0
    %3168 = vmatpush2.msra.mxu0 0.0
    %3169 = vmatprep.subr.mxu0 0.0
    %3170 = vmatpush2.msra.mxu0 0.0
    %3171 = vmatprep.subr.mxu0 0.0
    %3172 = vmatpush2.msra.mxu0 0.0
    %3173 = vmatprep.subr.mxu0 0.0
    %3174 = vmatpush2.msra.mxu0 0.0
    %3175 = vmatprep.subr.mxu0 0.0
    %3176 = vmatpush2.msra.mxu0 0.0
    %3177 = vmatprep.subr.mxu0 0.0
    %3178 = vmatpush2.msra.mxu0 0.0
    %3179 = vmatprep.subr.mxu0 0.0
    %3180 = vmatpush2.msra.mxu0 0.0
    %3181 = vmatprep.subr.mxu0 0.0
    %3182 = vmatpush2.msra.mxu0 0.0
    %3183 = vmatprep.subr.mxu0 0.0
    %3184 = vmatpush2.msra.mxu0 0.0
    %3185 = vmatprep.subr.mxu0 0.0
    %3186 = vmatpush2.msra.mxu0 0.0
    %3187 = vmatprep.subr.mxu0 0.0
    %3188 = vmatpush2.msra.mxu0 0.0
    %3189 = vmatprep.subr.mxu0 0.0
    %3190 = vmatpush2.msra.mxu0 0.0
    %3191 = vmatprep.subr.mxu0 0.0
    %3192 = vmatpush2.msra.mxu0 0.0
    %3193 = vmatprep.subr.mxu0 0.0
    %3194 = vmatpush2.msra.mxu0 0.0
    %3195 = vmatprep.mubr.f32.mxu0 0.0
    %3196 = vmatmul.mubr.f32.gmra.mxu0 %v40
    %v3197 = vpop.f32.mrf.mxu0
    %v3198 = vadd.f32 %v36, %v3197
    %v3199 = vpop.f32.mrf.mxu0
    %3200 = vdwg.mxu0
    %v3201 = vmax.f32 %v3198, 0.0
    %v3202 = vmax.f32 %v3116, %v3201
    %s3203 = scalar_lea.vmem %s0, 2160
    %v3204 = vld [vmem:[%s3203] sm:$0xff]
    %v3205 = vld [vmem:[%s3203 + $0x8] sm:$0xff]
    %v3206 = vld [vmem:[%s3203 + $0x10] sm:$0xff]
    %v3207 = vld [vmem:[%s3203 + $0x18] sm:$0xff]
    %v3208 = vld [vmem:[%s3203 + $0x20] sm:$0xff]
    %v3209 = vld [vmem:[%s3203 + $0x28] sm:$0xff]
    %v3210 = vld [vmem:[%s3203 + $0x30] sm:$0xff]
    %v3211 = vld [vmem:[%s3203 + $0x38] sm:$0xff]
    %v3212 = vld [vmem:[%s3203 + $0x40] sm:$0xff]
    %v3213 = vld [vmem:[%s3203 + $0x48] sm:$0x7]
    %v3215 = vsel %vm42, %v3213, 0
    %3217 = vmatprep.subr.mxu0 0.0
    %3218 = vmatpush1.msra.mxu0 0.0
    %3219 = vmatprep.subr.mxu0 0.0
    %3220 = vmatpush1.msra.mxu0 0.0
    %3221 = vmatprep.subr.mxu0 0.0
    %3222 = vmatpush1.msra.mxu0 0.0
    %3223 = vmatprep.subr.mxu0 0.0
    %3224 = vmatpush1.msra.mxu0 0.0
    %3225 = vmatprep.subr.mxu0 0.0
    %3226 = vmatpush1.msra.mxu0 0.0
    %3227 = vmatprep.subr.mxu0 0.0
    %3228 = vmatpush1.msra.mxu0 0.0
    %3229 = vmatprep.subr.mxu0 0.0
    %3230 = vmatpush1.msra.mxu0 %v3215
    %3231 = vmatprep.subr.mxu0 0.0
    %3232 = vmatpush1.msra.mxu0 %v3212
    %3233 = vmatprep.subr.mxu0 0.0
    %3234 = vmatpush1.msra.mxu0 %v3211
    %3235 = vmatprep.subr.mxu0 0.0
    %3236 = vmatpush1.msra.mxu0 %v3210
    %3237 = vmatprep.subr.mxu0 0.0
    %3238 = vmatpush1.msra.mxu0 %v3209
    %3239 = vmatprep.subr.mxu0 0.0
    %3240 = vmatpush1.msra.mxu0 %v3208
    %3241 = vmatprep.subr.mxu0 0.0
    %3242 = vmatpush1.msra.mxu0 %v3207
    %3243 = vmatprep.subr.mxu0 0.0
    %3244 = vmatpush1.msra.mxu0 %v3206
    %3245 = vmatprep.subr.mxu0 0.0
    %3246 = vmatpush1.msra.mxu0 %v3205
    %3247 = vmatprep.subr.mxu0 0.0
    %3248 = vmatpush1.msra.mxu0 %v3204
    %3249 = vmatprep.subr.mxu0 0.0
    %3250 = vmatpush2.msra.mxu0 0.0
    %3251 = vmatprep.subr.mxu0 0.0
    %3252 = vmatpush2.msra.mxu0 0.0
    %3253 = vmatprep.subr.mxu0 0.0
    %3254 = vmatpush2.msra.mxu0 0.0
    %3255 = vmatprep.subr.mxu0 0.0
    %3256 = vmatpush2.msra.mxu0 0.0
    %3257 = vmatprep.subr.mxu0 0.0
    %3258 = vmatpush2.msra.mxu0 0.0
    %3259 = vmatprep.subr.mxu0 0.0
    %3260 = vmatpush2.msra.mxu0 0.0
    %3261 = vmatprep.subr.mxu0 0.0
    %3262 = vmatpush2.msra.mxu0 0.0
    %3263 = vmatprep.subr.mxu0 0.0
    %3264 = vmatpush2.msra.mxu0 0.0
    %3265 = vmatprep.subr.mxu0 0.0
    %3266 = vmatpush2.msra.mxu0 0.0
    %3267 = vmatprep.subr.mxu0 0.0
    %3268 = vmatpush2.msra.mxu0 0.0
    %3269 = vmatprep.subr.mxu0 0.0
    %3270 = vmatpush2.msra.mxu0 0.0
    %3271 = vmatprep.subr.mxu0 0.0
    %3272 = vmatpush2.msra.mxu0 0.0
    %3273 = vmatprep.subr.mxu0 0.0
    %3274 = vmatpush2.msra.mxu0 0.0
    %3275 = vmatprep.subr.mxu0 0.0
    %3276 = vmatpush2.msra.mxu0 0.0
    %3277 = vmatprep.subr.mxu0 0.0
    %3278 = vmatpush2.msra.mxu0 0.0
    %3279 = vmatprep.subr.mxu0 0.0
    %3280 = vmatpush2.msra.mxu0 0.0
    %3281 = vmatprep.mubr.f32.mxu0 0.0
    %3282 = vmatmul.mubr.f32.gmra.mxu0 %v40
    %v3283 = vpop.f32.mrf.mxu0
    %v3284 = vadd.f32 %v36, %v3283
    %v3285 = vpop.f32.mrf.mxu0
    %3286 = vdwg.mxu0
    %v3287 = vmax.f32 %v3284, 0.0
    %v3288 = vmax.f32 %v3202, %v3287
    %s3289 = scalar_lea.vmem %s0, 2320
    %v3290 = vld [vmem:[%s3289] sm:$0xff]
    %v3291 = vld [vmem:[%s3289 + $0x8] sm:$0xff]
    %v3292 = vld [vmem:[%s3289 + $0x10] sm:$0xff]
    %v3293 = vld [vmem:[%s3289 + $0x18] sm:$0xff]
    %v3294 = vld [vmem:[%s3289 + $0x20] sm:$0xff]
    %v3295 = vld [vmem:[%s3289 + $0x28] sm:$0xff]
    %v3296 = vld [vmem:[%s3289 + $0x30] sm:$0xff]
    %v3297 = vld [vmem:[%s3289 + $0x38] sm:$0xff]
    %v3298 = vld [vmem:[%s3289 + $0x40] sm:$0xff]
    %v3299 = vld [vmem:[%s3289 + $0x48] sm:$0x7]
    %v3301 = vsel %vm42, %v3299, 0
    %3303 = vmatprep.subr.mxu0 0.0
    %3304 = vmatpush1.msra.mxu0 0.0
    %3305 = vmatprep.subr.mxu0 0.0
    %3306 = vmatpush1.msra.mxu0 0.0
    %3307 = vmatprep.subr.mxu0 0.0
    %3308 = vmatpush1.msra.mxu0 0.0
    %3309 = vmatprep.subr.mxu0 0.0
    %3310 = vmatpush1.msra.mxu0 0.0
    %3311 = vmatprep.subr.mxu0 0.0
    %3312 = vmatpush1.msra.mxu0 0.0
    %3313 = vmatprep.subr.mxu0 0.0
    %3314 = vmatpush1.msra.mxu0 0.0
    %3315 = vmatprep.subr.mxu0 0.0
    %3316 = vmatpush1.msra.mxu0 %v3301
    %3317 = vmatprep.subr.mxu0 0.0
    %3318 = vmatpush1.msra.mxu0 %v3298
    %3319 = vmatprep.subr.mxu0 0.0
    %3320 = vmatpush1.msra.mxu0 %v3297
    %3321 = vmatprep.subr.mxu0 0.0
    %3322 = vmatpush1.msra.mxu0 %v3296
    %3323 = vmatprep.subr.mxu0 0.0
    %3324 = vmatpush1.msra.mxu0 %v3295
    %3325 = vmatprep.subr.mxu0 0.0
    %3326 = vmatpush1.msra.mxu0 %v3294
    %3327 = vmatprep.subr.mxu0 0.0
    %3328 = vmatpush1.msra.mxu0 %v3293
    %3329 = vmatprep.subr.mxu0 0.0
    %3330 = vmatpush1.msra.mxu0 %v3292
    %3331 = vmatprep.subr.mxu0 0.0
    %3332 = vmatpush1.msra.mxu0 %v3291
    %3333 = vmatprep.subr.mxu0 0.0
    %3334 = vmatpush1.msra.mxu0 %v3290
    %3335 = vmatprep.subr.mxu0 0.0
    %3336 = vmatpush2.msra.mxu0 0.0
    %3337 = vmatprep.subr.mxu0 0.0
    %3338 = vmatpush2.msra.mxu0 0.0
    %3339 = vmatprep.subr.mxu0 0.0
    %3340 = vmatpush2.msra.mxu0 0.0
    %3341 = vmatprep.subr.mxu0 0.0
    %3342 = vmatpush2.msra.mxu0 0.0
    %3343 = vmatprep.subr.mxu0 0.0
    %3344 = vmatpush2.msra.mxu0 0.0
    %3345 = vmatprep.subr.mxu0 0.0
    %3346 = vmatpush2.msra.mxu0 0.0
    %3347 = vmatprep.subr.mxu0 0.0
    %3348 = vmatpush2.msra.mxu0 0.0
    %3349 = vmatprep.subr.mxu0 0.0
    %3350 = vmatpush2.msra.mxu0 0.0
    %3351 = vmatprep.subr.mxu0 0.0
    %3352 = vmatpush2.msra.mxu0 0.0
    %3353 = vmatprep.subr.mxu0 0.0
    %3354 = vmatpush2.msra.mxu0 0.0
    %3355 = vmatprep.subr.mxu0 0.0
    %3356 = vmatpush2.msra.mxu0 0.0
    %3357 = vmatprep.subr.mxu0 0.0
    %3358 = vmatpush2.msra.mxu0 0.0
    %3359 = vmatprep.subr.mxu0 0.0
    %3360 = vmatpush2.msra.mxu0 0.0
    %3361 = vmatprep.subr.mxu0 0.0
    %3362 = vmatpush2.msra.mxu0 0.0
    %3363 = vmatprep.subr.mxu0 0.0
    %3364 = vmatpush2.msra.mxu0 0.0
    %3365 = vmatprep.subr.mxu0 0.0
    %3366 = vmatpush2.msra.mxu0 0.0
    %3367 = vmatprep.mubr.f32.mxu0 0.0
    %3368 = vmatmul.mubr.f32.gmra.mxu0 %v40
    %v3369 = vpop.f32.mrf.mxu0
    %v3370 = vadd.f32 %v36, %v3369
    %v3371 = vpop.f32.mrf.mxu0
    %3372 = vdwg.mxu0
    %v3373 = vmax.f32 %v3370, 0.0
    %v3374 = vmax.f32 %v3288, %v3373
    %s3375 = scalar_lea.vmem %s0, 2480
    %v3376 = vld [vmem:[%s3375] sm:$0xff]
    %v3377 = vld [vmem:[%s3375 + $0x8] sm:$0xff]
    %v3378 = vld [vmem:[%s3375 + $0x10] sm:$0xff]
    %v3379 = vld [vmem:[%s3375 + $0x18] sm:$0xff]
    %v3380 = vld [vmem:[%s3375 + $0x20] sm:$0xff]
    %v3381 = vld [vmem:[%s3375 + $0x28] sm:$0xff]
    %v3382 = vld [vmem:[%s3375 + $0x30] sm:$0xff]
    %v3383 = vld [vmem:[%s3375 + $0x38] sm:$0xff]
    %v3384 = vld [vmem:[%s3375 + $0x40] sm:$0xff]
    %v3385 = vld [vmem:[%s3375 + $0x48] sm:$0x7]
    %v3387 = vsel %vm42, %v3385, 0
    %3389 = vmatprep.subr.mxu0 0.0
    %3390 = vmatpush1.msra.mxu0 0.0
    %3391 = vmatprep.subr.mxu0 0.0
    %3392 = vmatpush1.msra.mxu0 0.0
    %3393 = vmatprep.subr.mxu0 0.0
    %3394 = vmatpush1.msra.mxu0 0.0
    %3395 = vmatprep.subr.mxu0 0.0
    %3396 = vmatpush1.msra.mxu0 0.0
    %3397 = vmatprep.subr.mxu0 0.0
    %3398 = vmatpush1.msra.mxu0 0.0
    %3399 = vmatprep.subr.mxu0 0.0
    %3400 = vmatpush1.msra.mxu0 0.0
    %3401 = vmatprep.subr.mxu0 0.0
    %3402 = vmatpush1.msra.mxu0 %v3387
    %3403 = vmatprep.subr.mxu0 0.0
    %3404 = vmatpush1.msra.mxu0 %v3384
    %3405 = vmatprep.subr.mxu0 0.0
    %3406 = vmatpush1.msra.mxu0 %v3383
    %3407 = vmatprep.subr.mxu0 0.0
    %3408 = vmatpush1.msra.mxu0 %v3382
    %3409 = vmatprep.subr.mxu0 0.0
    %3410 = vmatpush1.msra.mxu0 %v3381
    %3411 = vmatprep.subr.mxu0 0.0
    %3412 = vmatpush1.msra.mxu0 %v3380
    %3413 = vmatprep.subr.mxu0 0.0
    %3414 = vmatpush1.msra.mxu0 %v3379
    %3415 = vmatprep.subr.mxu0 0.0
    %3416 = vmatpush1.msra.mxu0 %v3378
    %3417 = vmatprep.subr.mxu0 0.0
    %3418 = vmatpush1.msra.mxu0 %v3377
    %3419 = vmatprep.subr.mxu0 0.0
    %3420 = vmatpush1.msra.mxu0 %v3376
    %3421 = vmatprep.subr.mxu0 0.0
    %3422 = vmatpush2.msra.mxu0 0.0
    %3423 = vmatprep.subr.mxu0 0.0
    %3424 = vmatpush2.msra.mxu0 0.0
    %3425 = vmatprep.subr.mxu0 0.0
    %3426 = vmatpush2.msra.mxu0 0.0
    %3427 = vmatprep.subr.mxu0 0.0
    %3428 = vmatpush2.msra.mxu0 0.0
    %3429 = vmatprep.subr.mxu0 0.0
    %3430 = vmatpush2.msra.mxu0 0.0
    %3431 = vmatprep.subr.mxu0 0.0
    %3432 = vmatpush2.msra.mxu0 0.0
    %3433 = vmatprep.subr.mxu0 0.0
    %3434 = vmatpush2.msra.mxu0 0.0
    %3435 = vmatprep.subr.mxu0 0.0
    %3436 = vmatpush2.msra.mxu0 0.0
    %3437 = vmatprep.subr.mxu0 0.0
    %3438 = vmatpush2.msra.mxu0 0.0
    %3439 = vmatprep.subr.mxu0 0.0
    %3440 = vmatpush2.msra.mxu0 0.0
    %3441 = vmatprep.subr.mxu0 0.0
    %3442 = vmatpush2.msra.mxu0 0.0
    %3443 = vmatprep.subr.mxu0 0.0
    %3444 = vmatpush2.msra.mxu0 0.0
    %3445 = vmatprep.subr.mxu0 0.0
    %3446 = vmatpush2.msra.mxu0 0.0
    %3447 = vmatprep.subr.mxu0 0.0
    %3448 = vmatpush2.msra.mxu0 0.0
    %3449 = vmatprep.subr.mxu0 0.0
    %3450 = vmatpush2.msra.mxu0 0.0
    %3451 = vmatprep.subr.mxu0 0.0
    %3452 = vmatpush2.msra.mxu0 0.0
    %3453 = vmatprep.mubr.f32.mxu0 0.0
    %3454 = vmatmul.mubr.f32.gmra.mxu0 %v40
    %v3455 = vpop.f32.mrf.mxu0
    %v3456 = vadd.f32 %v36, %v3455
    %v3457 = vpop.f32.mrf.mxu0
    %3458 = vdwg.mxu0
    %v3459 = vmax.f32 %v3456, 0.0
    %v3460 = vmax.f32 %v3374, %v3459
    %v3462 = vrot.slane %v3460, 1
    %v3463 = vsel %vm1424, %v3462, 0
    %3465 = vmatprep.subr.mxu0 0.0
    %3466 = vmatpush1.msra.mxu0 0.0
    %3467 = vmatprep.subr.mxu0 0.0
    %3468 = vmatpush1.msra.mxu0 0.0
    %3469 = vmatprep.subr.mxu0 0.0
    %3470 = vmatpush1.msra.mxu0 0.0
    %3471 = vmatprep.subr.mxu0 0.0
    %3472 = vmatpush1.msra.mxu0 0.0
    %3473 = vmatprep.subr.mxu0 0.0
    %3474 = vmatpush1.msra.mxu0 0.0
    %3475 = vmatprep.subr.mxu0 0.0
    %3476 = vmatpush1.msra.mxu0 0.0
    %3477 = vmatprep.subr.mxu0 0.0
    %3478 = vmatpush1.msra.mxu0 0.0
    %3479 = vmatprep.subr.mxu0 0.0
    %3480 = vmatpush1.msra.mxu0 0.0
    %3481 = vmatprep.subr.mxu0 0.0
    %3482 = vmatpush1.msra.mxu0 0.0
    %3483 = vmatprep.subr.mxu0 0.0
    %3484 = vmatpush1.msra.mxu0 %v1429
    %3485 = vmatprep.subr.mxu0 0.0
    %3486 = vmatpush1.msra.mxu0 %v1420
    %3487 = vmatprep.subr.mxu0 0.0
    %3488 = vmatpush1.msra.mxu0 %v1419
    %3489 = vmatprep.subr.mxu0 0.0
    %3490 = vmatpush1.msra.mxu0 %v1418
    %3491 = vmatprep.subr.mxu0 0.0
    %3492 = vmatpush1.msra.mxu0 %v1417
    %3493 = vmatprep.subr.mxu0 0.0
    %3494 = vmatpush1.msra.mxu0 %v1416
    %3495 = vmatprep.subr.mxu0 0.0
    %3496 = vmatpush1.msra.mxu0 %v1415
    %3497 = vmatprep.subr.mxu0 0.0
    %3498 = vmatpush2.msra.mxu0 0.0
    %3499 = vmatprep.subr.mxu0 0.0
    %3500 = vmatpush2.msra.mxu0 0.0
    %3501 = vmatprep.subr.mxu0 0.0
    %3502 = vmatpush2.msra.mxu0 0.0
    %3503 = vmatprep.subr.mxu0 0.0
    %3504 = vmatpush2.msra.mxu0 0.0
    %3505 = vmatprep.subr.mxu0 0.0
    %3506 = vmatpush2.msra.mxu0 0.0
    %3507 = vmatprep.subr.mxu0 0.0
    %3508 = vmatpush2.msra.mxu0 0.0
    %3509 = vmatprep.subr.mxu0 0.0
    %3510 = vmatpush2.msra.mxu0 0.0
    %3511 = vmatprep.subr.mxu0 0.0
    %3512 = vmatpush2.msra.mxu0 0.0
    %3513 = vmatprep.subr.mxu0 0.0
    %3514 = vmatpush2.msra.mxu0 0.0
    %3515 = vmatprep.subr.mxu0 0.0
    %3516 = vmatpush2.msra.mxu0 0.0
    %3517 = vmatprep.subr.mxu0 0.0
    %3518 = vmatpush2.msra.mxu0 0.0
    %3519 = vmatprep.subr.mxu0 0.0
    %3520 = vmatpush2.msra.mxu0 0.0
    %3521 = vmatprep.subr.mxu0 0.0
    %3522 = vmatpush2.msra.mxu0 0.0
    %3523 = vmatprep.subr.mxu0 0.0
    %3524 = vmatpush2.msra.mxu0 0.0
    %3525 = vmatprep.subr.mxu0 0.0
    %3526 = vmatpush2.msra.mxu0 0.0
    %3527 = vmatprep.subr.mxu0 0.0
    %3528 = vmatpush2.msra.mxu0 0.0
    %3529 = vmatprep.mubr.f32.mxu0 0.0
    %3530 = vmatmul.mubr.f32.gmra.mxu0 %v3463
    %v3531 = vpop.f32.mrf.mxu0
    %v3532 = vadd.f32 0.0, %v3531
    %v3533 = vpop.f32.mrf.mxu0
    %3534 = vdwg.mxu0
    %v3535 = vsel %vm1424, %v3460, 0
    %3537 = vmatprep.subr.mxu0 0.0
    %3538 = vmatpush1.msra.mxu0 0.0
    %3539 = vmatprep.subr.mxu0 0.0
    %3540 = vmatpush1.msra.mxu0 0.0
    %3541 = vmatprep.subr.mxu0 0.0
    %3542 = vmatpush1.msra.mxu0 0.0
    %3543 = vmatprep.subr.mxu0 0.0
    %3544 = vmatpush1.msra.mxu0 0.0
    %3545 = vmatprep.subr.mxu0 0.0
    %3546 = vmatpush1.msra.mxu0 0.0
    %3547 = vmatprep.subr.mxu0 0.0
    %3548 = vmatpush1.msra.mxu0 0.0
    %3549 = vmatprep.subr.mxu0 0.0
    %3550 = vmatpush1.msra.mxu0 0.0
    %3551 = vmatprep.subr.mxu0 0.0
    %3552 = vmatpush1.msra.mxu0 0.0
    %3553 = vmatprep.subr.mxu0 0.0
    %3554 = vmatpush1.msra.mxu0 0.0
    %3555 = vmatprep.subr.mxu0 0.0
    %3556 = vmatpush1.msra.mxu0 %v1504
    %3557 = vmatprep.subr.mxu0 0.0
    %3558 = vmatpush1.msra.mxu0 %v1412
    %3559 = vmatprep.subr.mxu0 0.0
    %3560 = vmatpush1.msra.mxu0 %v1411
    %3561 = vmatprep.subr.mxu0 0.0
    %3562 = vmatpush1.msra.mxu0 %v1410
    %3563 = vmatprep.subr.mxu0 0.0
    %3564 = vmatpush1.msra.mxu0 %v1409
    %3565 = vmatprep.subr.mxu0 0.0
    %3566 = vmatpush1.msra.mxu0 %v1408
    %3567 = vmatprep.subr.mxu0 0.0
    %3568 = vmatpush1.msra.mxu0 %v1407
    %3569 = vmatprep.subr.mxu0 0.0
    %3570 = vmatpush2.msra.mxu0 0.0
    %3571 = vmatprep.subr.mxu0 0.0
    %3572 = vmatpush2.msra.mxu0 0.0
    %3573 = vmatprep.subr.mxu0 0.0
    %3574 = vmatpush2.msra.mxu0 0.0
    %3575 = vmatprep.subr.mxu0 0.0
    %3576 = vmatpush2.msra.mxu0 0.0
    %3577 = vmatprep.subr.mxu0 0.0
    %3578 = vmatpush2.msra.mxu0 0.0
    %3579 = vmatprep.subr.mxu0 0.0
    %3580 = vmatpush2.msra.mxu0 0.0
    %3581 = vmatprep.subr.mxu0 0.0
    %3582 = vmatpush2.msra.mxu0 0.0
    %3583 = vmatprep.subr.mxu0 0.0
    %3584 = vmatpush2.msra.mxu0 0.0
    %3585 = vmatprep.subr.mxu0 0.0
    %3586 = vmatpush2.msra.mxu0 0.0
    %3587 = vmatprep.subr.mxu0 0.0
    %3588 = vmatpush2.msra.mxu0 0.0
    %3589 = vmatprep.subr.mxu0 0.0
    %3590 = vmatpush2.msra.mxu0 0.0
    %3591 = vmatprep.subr.mxu0 0.0
    %3592 = vmatpush2.msra.mxu0 0.0
    %3593 = vmatprep.subr.mxu0 0.0
    %3594 = vmatpush2.msra.mxu0 0.0
    %3595 = vmatprep.subr.mxu0 0.0
    %3596 = vmatpush2.msra.mxu0 0.0
    %3597 = vmatprep.subr.mxu0 0.0
    %3598 = vmatpush2.msra.mxu0 0.0
    %3599 = vmatprep.subr.mxu0 0.0
    %3600 = vmatpush2.msra.mxu0 0.0
    %3601 = vmatprep.mubr.f32.mxu0 0.0
    %3602 = vmatmul.mubr.f32.gmra.mxu0 %v3535
    %v3603 = vpop.f32.mrf.mxu0
    %v3604 = vadd.f32 %v3532, %v3603
    %v3605 = vpop.f32.mrf.mxu0
    %3606 = vdwg.mxu0
    %v3607 = vrot.slane %v3460, 2
    %v3608 = vsel %vm1424, %v3607, 0
    %3610 = vmatprep.subr.mxu0 0.0
    %3611 = vmatpush1.msra.mxu0 0.0
    %3612 = vmatprep.subr.mxu0 0.0
    %3613 = vmatpush1.msra.mxu0 0.0
    %3614 = vmatprep.subr.mxu0 0.0
    %3615 = vmatpush1.msra.mxu0 0.0
    %3616 = vmatprep.subr.mxu0 0.0
    %3617 = vmatpush1.msra.mxu0 0.0
    %3618 = vmatprep.subr.mxu0 0.0
    %3619 = vmatpush1.msra.mxu0 0.0
    %3620 = vmatprep.subr.mxu0 0.0
    %3621 = vmatpush1.msra.mxu0 0.0
    %3622 = vmatprep.subr.mxu0 0.0
    %3623 = vmatpush1.msra.mxu0 0.0
    %3624 = vmatprep.subr.mxu0 0.0
    %3625 = vmatpush1.msra.mxu0 0.0
    %3626 = vmatprep.subr.mxu0 0.0
    %3627 = vmatpush1.msra.mxu0 0.0
    %3628 = vmatprep.subr.mxu0 0.0
    %3629 = vmatpush1.msra.mxu0 %v1588
    %3630 = vmatprep.subr.mxu0 0.0
    %3631 = vmatpush1.msra.mxu0 %v1582
    %3632 = vmatprep.subr.mxu0 0.0
    %3633 = vmatpush1.msra.mxu0 %v1581
    %3634 = vmatprep.subr.mxu0 0.0
    %3635 = vmatpush1.msra.mxu0 %v1580
    %3636 = vmatprep.subr.mxu0 0.0
    %3637 = vmatpush1.msra.mxu0 %v1579
    %3638 = vmatprep.subr.mxu0 0.0
    %3639 = vmatpush1.msra.mxu0 %v1578
    %3640 = vmatprep.subr.mxu0 0.0
    %3641 = vmatpush1.msra.mxu0 %v1577
    %3642 = vmatprep.subr.mxu0 0.0
    %3643 = vmatpush2.msra.mxu0 0.0
    %3644 = vmatprep.subr.mxu0 0.0
    %3645 = vmatpush2.msra.mxu0 0.0
    %3646 = vmatprep.subr.mxu0 0.0
    %3647 = vmatpush2.msra.mxu0 0.0
    %3648 = vmatprep.subr.mxu0 0.0
    %3649 = vmatpush2.msra.mxu0 0.0
    %3650 = vmatprep.subr.mxu0 0.0
    %3651 = vmatpush2.msra.mxu0 0.0
    %3652 = vmatprep.subr.mxu0 0.0
    %3653 = vmatpush2.msra.mxu0 0.0
    %3654 = vmatprep.subr.mxu0 0.0
    %3655 = vmatpush2.msra.mxu0 0.0
    %3656 = vmatprep.subr.mxu0 0.0
    %3657 = vmatpush2.msra.mxu0 0.0
    %3658 = vmatprep.subr.mxu0 0.0
    %3659 = vmatpush2.msra.mxu0 0.0
    %3660 = vmatprep.subr.mxu0 0.0
    %3661 = vmatpush2.msra.mxu0 0.0
    %3662 = vmatprep.subr.mxu0 0.0
    %3663 = vmatpush2.msra.mxu0 0.0
    %3664 = vmatprep.subr.mxu0 0.0
    %3665 = vmatpush2.msra.mxu0 0.0
    %3666 = vmatprep.subr.mxu0 0.0
    %3667 = vmatpush2.msra.mxu0 0.0
    %3668 = vmatprep.subr.mxu0 0.0
    %3669 = vmatpush2.msra.mxu0 0.0
    %3670 = vmatprep.subr.mxu0 0.0
    %3671 = vmatpush2.msra.mxu0 0.0
    %3672 = vmatprep.subr.mxu0 0.0
    %3673 = vmatpush2.msra.mxu0 0.0
    %3674 = vmatprep.mubr.f32.mxu0 0.0
    %3675 = vmatmul.mubr.f32.gmra.mxu0 %v3608
    %v3676 = vpop.f32.mrf.mxu0
    %v3677 = vadd.f32 0.0, %v3676
    %v3678 = vpop.f32.mrf.mxu0
    %3679 = vdwg.mxu0
    %v3680 = vadd.f32 %v3604, %v3677
    %v3681 = vrot.slane %v3460, 3
    %v3682 = vsel %vm1424, %v3681, 0
    %3684 = vmatprep.subr.mxu0 0.0
    %3685 = vmatpush1.msra.mxu0 0.0
    %3686 = vmatprep.subr.mxu0 0.0
    %3687 = vmatpush1.msra.mxu0 0.0
    %3688 = vmatprep.subr.mxu0 0.0
    %3689 = vmatpush1.msra.mxu0 0.0
    %3690 = vmatprep.subr.mxu0 0.0
    %3691 = vmatpush1.msra.mxu0 0.0
    %3692 = vmatprep.subr.mxu0 0.0
    %3693 = vmatpush1.msra.mxu0 0.0
    %3694 = vmatprep.subr.mxu0 0.0
    %3695 = vmatpush1.msra.mxu0 0.0
    %3696 = vmatprep.subr.mxu0 0.0
    %3697 = vmatpush1.msra.mxu0 0.0
    %3698 = vmatprep.subr.mxu0 0.0
    %3699 = vmatpush1.msra.mxu0 0.0
    %3700 = vmatprep.subr.mxu0 0.0
    %3701 = vmatpush1.msra.mxu0 0.0
    %3702 = vmatprep.subr.mxu0 0.0
    %3703 = vmatpush1.msra.mxu0 %v1673
    %3704 = vmatprep.subr.mxu0 0.0
    %3705 = vmatpush1.msra.mxu0 %v1667
    %3706 = vmatprep.subr.mxu0 0.0
    %3707 = vmatpush1.msra.mxu0 %v1666
    %3708 = vmatprep.subr.mxu0 0.0
    %3709 = vmatpush1.msra.mxu0 %v1665
    %3710 = vmatprep.subr.mxu0 0.0
    %3711 = vmatpush1.msra.mxu0 %v1664
    %3712 = vmatprep.subr.mxu0 0.0
    %3713 = vmatpush1.msra.mxu0 %v1663
    %3714 = vmatprep.subr.mxu0 0.0
    %3715 = vmatpush1.msra.mxu0 %v1662
    %3716 = vmatprep.subr.mxu0 0.0
    %3717 = vmatpush2.msra.mxu0 0.0
    %3718 = vmatprep.subr.mxu0 0.0
    %3719 = vmatpush2.msra.mxu0 0.0
    %3720 = vmatprep.subr.mxu0 0.0
    %3721 = vmatpush2.msra.mxu0 0.0
    %3722 = vmatprep.subr.mxu0 0.0
    %3723 = vmatpush2.msra.mxu0 0.0
    %3724 = vmatprep.subr.mxu0 0.0
    %3725 = vmatpush2.msra.mxu0 0.0
    %3726 = vmatprep.subr.mxu0 0.0
    %3727 = vmatpush2.msra.mxu0 0.0
    %3728 = vmatprep.subr.mxu0 0.0
    %3729 = vmatpush2.msra.mxu0 0.0
    %3730 = vmatprep.subr.mxu0 0.0
    %3731 = vmatpush2.msra.mxu0 0.0
    %3732 = vmatprep.subr.mxu0 0.0
    %3733 = vmatpush2.msra.mxu0 0.0
    %3734 = vmatprep.subr.mxu0 0.0
    %3735 = vmatpush2.msra.mxu0 0.0
    %3736 = vmatprep.subr.mxu0 0.0
    %3737 = vmatpush2.msra.mxu0 0.0
    %3738 = vmatprep.subr.mxu0 0.0
    %3739 = vmatpush2.msra.mxu0 0.0
    %3740 = vmatprep.subr.mxu0 0.0
    %3741 = vmatpush2.msra.mxu0 0.0
    %3742 = vmatprep.subr.mxu0 0.0
    %3743 = vmatpush2.msra.mxu0 0.0
    %3744 = vmatprep.subr.mxu0 0.0
    %3745 = vmatpush2.msra.mxu0 0.0
    %3746 = vmatprep.subr.mxu0 0.0
    %3747 = vmatpush2.msra.mxu0 0.0
    %3748 = vmatprep.mubr.f32.mxu0 0.0
    %3749 = vmatmul.mubr.f32.gmra.mxu0 %v3682
    %v3750 = vpop.f32.mrf.mxu0
    %v3751 = vadd.f32 0.0, %v3750
    %v3752 = vpop.f32.mrf.mxu0
    %3753 = vdwg.mxu0
    %v3754 = vadd.f32 %v3680, %v3751
    %v3755 = vrot.slane %v3460, 4
    %v3756 = vsel %vm1424, %v3755, 0
    %3758 = vmatprep.subr.mxu0 0.0
    %3759 = vmatpush1.msra.mxu0 0.0
    %3760 = vmatprep.subr.mxu0 0.0
    %3761 = vmatpush1.msra.mxu0 0.0
    %3762 = vmatprep.subr.mxu0 0.0
    %3763 = vmatpush1.msra.mxu0 0.0
    %3764 = vmatprep.subr.mxu0 0.0
    %3765 = vmatpush1.msra.mxu0 0.0
    %3766 = vmatprep.subr.mxu0 0.0
    %3767 = vmatpush1.msra.mxu0 0.0
    %3768 = vmatprep.subr.mxu0 0.0
    %3769 = vmatpush1.msra.mxu0 0.0
    %3770 = vmatprep.subr.mxu0 0.0
    %3771 = vmatpush1.msra.mxu0 0.0
    %3772 = vmatprep.subr.mxu0 0.0
    %3773 = vmatpush1.msra.mxu0 0.0
    %3774 = vmatprep.subr.mxu0 0.0
    %3775 = vmatpush1.msra.mxu0 0.0
    %3776 = vmatprep.subr.mxu0 0.0
    %3777 = vmatpush1.msra.mxu0 %v1758
    %3778 = vmatprep.subr.mxu0 0.0
    %3779 = vmatpush1.msra.mxu0 %v1752
    %3780 = vmatprep.subr.mxu0 0.0
    %3781 = vmatpush1.msra.mxu0 %v1751
    %3782 = vmatprep.subr.mxu0 0.0
    %3783 = vmatpush1.msra.mxu0 %v1750
    %3784 = vmatprep.subr.mxu0 0.0
    %3785 = vmatpush1.msra.mxu0 %v1749
    %3786 = vmatprep.subr.mxu0 0.0
    %3787 = vmatpush1.msra.mxu0 %v1748
    %3788 = vmatprep.subr.mxu0 0.0
    %3789 = vmatpush1.msra.mxu0 %v1747
    %3790 = vmatprep.subr.mxu0 0.0
    %3791 = vmatpush2.msra.mxu0 0.0
    %3792 = vmatprep.subr.mxu0 0.0
    %3793 = vmatpush2.msra.mxu0 0.0
    %3794 = vmatprep.subr.mxu0 0.0
    %3795 = vmatpush2.msra.mxu0 0.0
    %3796 = vmatprep.subr.mxu0 0.0
    %3797 = vmatpush2.msra.mxu0 0.0
    %3798 = vmatprep.subr.mxu0 0.0
    %3799 = vmatpush2.msra.mxu0 0.0
    %3800 = vmatprep.subr.mxu0 0.0
    %3801 = vmatpush2.msra.mxu0 0.0
    %3802 = vmatprep.subr.mxu0 0.0
    %3803 = vmatpush2.msra.mxu0 0.0
    %3804 = vmatprep.subr.mxu0 0.0
    %3805 = vmatpush2.msra.mxu0 0.0
    %3806 = vmatprep.subr.mxu0 0.0
    %3807 = vmatpush2.msra.mxu0 0.0
    %3808 = vmatprep.subr.mxu0 0.0
    %3809 = vmatpush2.msra.mxu0 0.0
    %3810 = vmatprep.subr.mxu0 0.0
    %3811 = vmatpush2.msra.mxu0 0.0
    %3812 = vmatprep.subr.mxu0 0.0
    %3813 = vmatpush2.msra.mxu0 0.0
    %3814 = vmatprep.subr.mxu0 0.0
    %3815 = vmatpush2.msra.mxu0 0.0
    %3816 = vmatprep.subr.mxu0 0.0
    %3817 = vmatpush2.msra.mxu0 0.0
    %3818 = vmatprep.subr.mxu0 0.0
    %3819 = vmatpush2.msra.mxu0 0.0
    %3820 = vmatprep.subr.mxu0 0.0
    %3821 = vmatpush2.msra.mxu0 0.0
    %3822 = vmatprep.mubr.f32.mxu0 0.0
    %3823 = vmatmul.mubr.f32.gmra.mxu0 %v3756
    %v3824 = vpop.f32.mrf.mxu0
    %v3825 = vadd.f32 0.0, %v3824
    %v3826 = vpop.f32.mrf.mxu0
    %3827 = vdwg.mxu0
    %v3828 = vadd.f32 %v3754, %v3825
    %v3829 = vrot.slane %v3460, 5
    %v3830 = vsel %vm1424, %v3829, 0
    %3832 = vmatprep.subr.mxu0 0.0
    %3833 = vmatpush1.msra.mxu0 0.0
    %3834 = vmatprep.subr.mxu0 0.0
    %3835 = vmatpush1.msra.mxu0 0.0
    %3836 = vmatprep.subr.mxu0 0.0
    %3837 = vmatpush1.msra.mxu0 0.0
    %3838 = vmatprep.subr.mxu0 0.0
    %3839 = vmatpush1.msra.mxu0 0.0
    %3840 = vmatprep.subr.mxu0 0.0
    %3841 = vmatpush1.msra.mxu0 0.0
    %3842 = vmatprep.subr.mxu0 0.0
    %3843 = vmatpush1.msra.mxu0 0.0
    %3844 = vmatprep.subr.mxu0 0.0
    %3845 = vmatpush1.msra.mxu0 0.0
    %3846 = vmatprep.subr.mxu0 0.0
    %3847 = vmatpush1.msra.mxu0 0.0
    %3848 = vmatprep.subr.mxu0 0.0
    %3849 = vmatpush1.msra.mxu0 0.0
    %3850 = vmatprep.subr.mxu0 0.0
    %3851 = vmatpush1.msra.mxu0 %v1843
    %3852 = vmatprep.subr.mxu0 0.0
    %3853 = vmatpush1.msra.mxu0 %v1837
    %3854 = vmatprep.subr.mxu0 0.0
    %3855 = vmatpush1.msra.mxu0 %v1836
    %3856 = vmatprep.subr.mxu0 0.0
    %3857 = vmatpush1.msra.mxu0 %v1835
    %3858 = vmatprep.subr.mxu0 0.0
    %3859 = vmatpush1.msra.mxu0 %v1834
    %3860 = vmatprep.subr.mxu0 0.0
    %3861 = vmatpush1.msra.mxu0 %v1833
    %3862 = vmatprep.subr.mxu0 0.0
    %3863 = vmatpush1.msra.mxu0 %v1832
    %3864 = vmatprep.subr.mxu0 0.0
    %3865 = vmatpush2.msra.mxu0 0.0
    %3866 = vmatprep.subr.mxu0 0.0
    %3867 = vmatpush2.msra.mxu0 0.0
    %3868 = vmatprep.subr.mxu0 0.0
    %3869 = vmatpush2.msra.mxu0 0.0
    %3870 = vmatprep.subr.mxu0 0.0
    %3871 = vmatpush2.msra.mxu0 0.0
    %3872 = vmatprep.subr.mxu0 0.0
    %3873 = vmatpush2.msra.mxu0 0.0
    %3874 = vmatprep.subr.mxu0 0.0
    %3875 = vmatpush2.msra.mxu0 0.0
    %3876 = vmatprep.subr.mxu0 0.0
    %3877 = vmatpush2.msra.mxu0 0.0
    %3878 = vmatprep.subr.mxu0 0.0
    %3879 = vmatpush2.msra.mxu0 0.0
    %3880 = vmatprep.subr.mxu0 0.0
    %3881 = vmatpush2.msra.mxu0 0.0
    %3882 = vmatprep.subr.mxu0 0.0
    %3883 = vmatpush2.msra.mxu0 0.0
    %3884 = vmatprep.subr.mxu0 0.0
    %3885 = vmatpush2.msra.mxu0 0.0
    %3886 = vmatprep.subr.mxu0 0.0
    %3887 = vmatpush2.msra.mxu0 0.0
    %3888 = vmatprep.subr.mxu0 0.0
    %3889 = vmatpush2.msra.mxu0 0.0
    %3890 = vmatprep.subr.mxu0 0.0
    %3891 = vmatpush2.msra.mxu0 0.0
    %3892 = vmatprep.subr.mxu0 0.0
    %3893 = vmatpush2.msra.mxu0 0.0
    %3894 = vmatprep.subr.mxu0 0.0
    %3895 = vmatpush2.msra.mxu0 0.0
    %3896 = vmatprep.mubr.f32.mxu0 0.0
    %3897 = vmatmul.mubr.f32.gmra.mxu0 %v3830
    %v3898 = vpop.f32.mrf.mxu0
    %v3899 = vadd.f32 0.0, %v3898
    %v3900 = vpop.f32.mrf.mxu0
    %3901 = vdwg.mxu0
    %v3902 = vadd.f32 %v3828, %v3899
    %v3903 = vrot.slane %v3460, 6
    %v3904 = vsel %vm1424, %v3903, 0
    %3906 = vmatprep.subr.mxu0 0.0
    %3907 = vmatpush1.msra.mxu0 0.0
    %3908 = vmatprep.subr.mxu0 0.0
    %3909 = vmatpush1.msra.mxu0 0.0
    %3910 = vmatprep.subr.mxu0 0.0
    %3911 = vmatpush1.msra.mxu0 0.0
    %3912 = vmatprep.subr.mxu0 0.0
    %3913 = vmatpush1.msra.mxu0 0.0
    %3914 = vmatprep.subr.mxu0 0.0
    %3915 = vmatpush1.msra.mxu0 0.0
    %3916 = vmatprep.subr.mxu0 0.0
    %3917 = vmatpush1.msra.mxu0 0.0
    %3918 = vmatprep.subr.mxu0 0.0
    %3919 = vmatpush1.msra.mxu0 0.0
    %3920 = vmatprep.subr.mxu0 0.0
    %3921 = vmatpush1.msra.mxu0 0.0
    %3922 = vmatprep.subr.mxu0 0.0
    %3923 = vmatpush1.msra.mxu0 0.0
    %3924 = vmatprep.subr.mxu0 0.0
    %3925 = vmatpush1.msra.mxu0 %v1928
    %3926 = vmatprep.subr.mxu0 0.0
    %3927 = vmatpush1.msra.mxu0 %v1922
    %3928 = vmatprep.subr.mxu0 0.0
    %3929 = vmatpush1.msra.mxu0 %v1921
    %3930 = vmatprep.subr.mxu0 0.0
    %3931 = vmatpush1.msra.mxu0 %v1920
    %3932 = vmatprep.subr.mxu0 0.0
    %3933 = vmatpush1.msra.mxu0 %v1919
    %3934 = vmatprep.subr.mxu0 0.0
    %3935 = vmatpush1.msra.mxu0 %v1918
    %3936 = vmatprep.subr.mxu0 0.0
    %3937 = vmatpush1.msra.mxu0 %v1917
    %3938 = vmatprep.subr.mxu0 0.0
    %3939 = vmatpush2.msra.mxu0 0.0
    %3940 = vmatprep.subr.mxu0 0.0
    %3941 = vmatpush2.msra.mxu0 0.0
    %3942 = vmatprep.subr.mxu0 0.0
    %3943 = vmatpush2.msra.mxu0 0.0
    %3944 = vmatprep.subr.mxu0 0.0
    %3945 = vmatpush2.msra.mxu0 0.0
    %3946 = vmatprep.subr.mxu0 0.0
    %3947 = vmatpush2.msra.mxu0 0.0
    %3948 = vmatprep.subr.mxu0 0.0
    %3949 = vmatpush2.msra.mxu0 0.0
    %3950 = vmatprep.subr.mxu0 0.0
    %3951 = vmatpush2.msra.mxu0 0.0
    %3952 = vmatprep.subr.mxu0 0.0
    %3953 = vmatpush2.msra.mxu0 0.0
    %3954 = vmatprep.subr.mxu0 0.0
    %3955 = vmatpush2.msra.mxu0 0.0
    %3956 = vmatprep.subr.mxu0 0.0
    %3957 = vmatpush2.msra.mxu0 0.0
    %3958 = vmatprep.subr.mxu0 0.0
    %3959 = vmatpush2.msra.mxu0 0.0
    %3960 = vmatprep.subr.mxu0 0.0
    %3961 = vmatpush2.msra.mxu0 0.0
    %3962 = vmatprep.subr.mxu0 0.0
    %3963 = vmatpush2.msra.mxu0 0.0
    %3964 = vmatprep.subr.mxu0 0.0
    %3965 = vmatpush2.msra.mxu0 0.0
    %3966 = vmatprep.subr.mxu0 0.0
    %3967 = vmatpush2.msra.mxu0 0.0
    %3968 = vmatprep.subr.mxu0 0.0
    %3969 = vmatpush2.msra.mxu0 0.0
    %3970 = vmatprep.mubr.f32.mxu0 0.0
    %3971 = vmatmul.mubr.f32.gmra.mxu0 %v3904
    %v3972 = vpop.f32.mrf.mxu0
    %v3973 = vadd.f32 0.0, %v3972
    %v3974 = vpop.f32.mrf.mxu0
    %3975 = vdwg.mxu0
    %v3976 = vadd.f32 %v3902, %v3973
    %v3977 = vrot.slane %v3460, 7
    %v3978 = vsel %vm1424, %v3977, 0
    %3980 = vmatprep.subr.mxu0 0.0
    %3981 = vmatpush1.msra.mxu0 0.0
    %3982 = vmatprep.subr.mxu0 0.0
    %3983 = vmatpush1.msra.mxu0 0.0
    %3984 = vmatprep.subr.mxu0 0.0
    %3985 = vmatpush1.msra.mxu0 0.0
    %3986 = vmatprep.subr.mxu0 0.0
    %3987 = vmatpush1.msra.mxu0 0.0
    %3988 = vmatprep.subr.mxu0 0.0
    %3989 = vmatpush1.msra.mxu0 0.0
    %3990 = vmatprep.subr.mxu0 0.0
    %3991 = vmatpush1.msra.mxu0 0.0
    %3992 = vmatprep.subr.mxu0 0.0
    %3993 = vmatpush1.msra.mxu0 0.0
    %3994 = vmatprep.subr.mxu0 0.0
    %3995 = vmatpush1.msra.mxu0 0.0
    %3996 = vmatprep.subr.mxu0 0.0
    %3997 = vmatpush1.msra.mxu0 0.0
    %3998 = vmatprep.subr.mxu0 0.0
    %3999 = vmatpush1.msra.mxu0 %v2013
    %4000 = vmatprep.subr.mxu0 0.0
    %4001 = vmatpush1.msra.mxu0 %v2007
    %4002 = vmatprep.subr.mxu0 0.0
    %4003 = vmatpush1.msra.mxu0 %v2006
    %4004 = vmatprep.subr.mxu0 0.0
    %4005 = vmatpush1.msra.mxu0 %v2005
    %4006 = vmatprep.subr.mxu0 0.0
    %4007 = vmatpush1.msra.mxu0 %v2004
    %4008 = vmatprep.subr.mxu0 0.0
    %4009 = vmatpush1.msra.mxu0 %v2003
    %4010 = vmatprep.subr.mxu0 0.0
    %4011 = vmatpush1.msra.mxu0 %v2002
    %4012 = vmatprep.subr.mxu0 0.0
    %4013 = vmatpush2.msra.mxu0 0.0
    %4014 = vmatprep.subr.mxu0 0.0
    %4015 = vmatpush2.msra.mxu0 0.0
    %4016 = vmatprep.subr.mxu0 0.0
    %4017 = vmatpush2.msra.mxu0 0.0
    %4018 = vmatprep.subr.mxu0 0.0
    %4019 = vmatpush2.msra.mxu0 0.0
    %4020 = vmatprep.subr.mxu0 0.0
    %4021 = vmatpush2.msra.mxu0 0.0
    %4022 = vmatprep.subr.mxu0 0.0
    %4023 = vmatpush2.msra.mxu0 0.0
    %4024 = vmatprep.subr.mxu0 0.0
    %4025 = vmatpush2.msra.mxu0 0.0
    %4026 = vmatprep.subr.mxu0 0.0
    %4027 = vmatpush2.msra.mxu0 0.0
    %4028 = vmatprep.subr.mxu0 0.0
    %4029 = vmatpush2.msra.mxu0 0.0
    %4030 = vmatprep.subr.mxu0 0.0
    %4031 = vmatpush2.msra.mxu0 0.0
    %4032 = vmatprep.subr.mxu0 0.0
    %4033 = vmatpush2.msra.mxu0 0.0
    %4034 = vmatprep.subr.mxu0 0.0
    %4035 = vmatpush2.msra.mxu0 0.0
    %4036 = vmatprep.subr.mxu0 0.0
    %4037 = vmatpush2.msra.mxu0 0.0
    %4038 = vmatprep.subr.mxu0 0.0
    %4039 = vmatpush2.msra.mxu0 0.0
    %4040 = vmatprep.subr.mxu0 0.0
    %4041 = vmatpush2.msra.mxu0 0.0
    %4042 = vmatprep.subr.mxu0 0.0
    %4043 = vmatpush2.msra.mxu0 0.0
    %4044 = vmatprep.mubr.f32.mxu0 0.0
    %4045 = vmatmul.mubr.f32.gmra.mxu0 %v3978
    %v4046 = vpop.f32.mrf.mxu0
    %v4047 = vadd.f32 0.0, %v4046
    %v4048 = vpop.f32.mrf.mxu0
    %4049 = vdwg.mxu0
    %v4050 = vadd.f32 %v3976, %v4047
    %v4052 = vrot.slane %v4050, 7
    %v4054 = vsel %vm1427, %v2085, %v4052
    %v4055 = vld [vmem:[%s4] sm:$0x1]
    %v4057 = vlaneseq
    %v4058 = vshrl.u32 %v4057, 7
    %v4059 = vsub.s32 0, %v4058
    %v4060 = vrot.slane %v4055, %v4059
    %v4062 = vadd.f32 %v4054, %v4060
    %vm4063 = vcmask 74752
    %4064 = vst.msk [vmem:[#allocation2] sm:$0x3] %vm4063, %v4062
    // Predicated region
    $region22: #{third_net_forward.1} parent=1 // pred_check
      _
    $region23: #{third_net_forward.1} parent=1 // pred_check_branch
      %4066 = sbr.rel (0) target = $region25
    $region24: #{third_net_forward.1} parent=1 // pred_region
      %s4068 = ssub.s32 32, 32
      %4069 = vsyncadd [#allocation3], %s4068
      %s4071 = sshll.u32 [#allocation2], 4
      %s4072 = int_to_ptr.vmem [resolvable:$true] %s4071
      %4074 = dma.vmem_to_hbm [thread:$0]  %s4072, 32, %s5, [#allocation3]
    $region25: #{third_net_forward.1} parent=1 // pred_fallthru
      _
    // Predicated region
    $region26: #{third_net_forward.1} parent=1 // pred_check
      _
    $region27: #{third_net_forward.1} parent=1 // pred_check_branch
      %4076 = sbr.rel (0) target = $region29
    $region28: #{third_net_forward.1} parent=1 // pred_region
      %4077 = dma.done [#allocation3], 32
    $region29: #{third_net_forward.1} parent=1 // pred_fallthru
      _
    %4078 = vsyncpa [#allocation3], 1

</llo_original>
